<compile_context>
chip_gen: v6e
topology: v6e:2x2x1
jax: 0.10.0
libtpu: 0.0.40
codegen_flags: <defaults>
</compile_context>

<pallas_src>
import functools

import jax
import jax.numpy as jnp
from jax.experimental import pallas as pl
from jax.experimental.pallas import tpu as pltpu


# ----------------------------------------------------------------------------
# Fused kernel: all LSTM layers (+ both directions) + Linear + log_softmax.
# ----------------------------------------------------------------------------
def _fused_lstm_kernel(x_ref, len_ref, *refs, T, B, H, dirs, num_layers):
    G = 4 * H                              # per-direction gate width
    n_per = 4 if dirs == 2 else 3          # refs per layer
    n_lw = n_per * num_layers
    layer_refs = refs[:n_lw]
    wlin_ref, blin_ref, out_ref, gx_scr, seq0, seq1 = refs[n_lw:]
    seq_bufs = (seq0, seq1)

    lengths = len_ref[...]                 # (B, 1) int32, loaded once

    # Packed-sequence masks: invariant across layers, precomputed once and
    # already broadcast to (B, H) so the per-step selects have no
    # broadcast_in_dim on the critical path.
    masks = [jnp.broadcast_to(lengths > t, (B, H)) for t in range(T)]

    for layer in range(num_layers):
        base = n_per * layer
        wih_ref = layer_refs[base + 0]     # (Din_l, dirs*G) bf16, cols (i,f,o,g)
        if dirs == 2:
            whh_f_ref = layer_refs[base + 1]   # (H, G) bf16
            whh_r_ref = layer_refs[base + 2]   # (H, G) bf16
            b_ref = layer_refs[base + 3]       # (1, 2G) f32
        else:
            whh_ref = layer_refs[base + 1]     # (H, G) bf16
            b_ref = layer_refs[base + 2]       # (1, G) f32
        out_scr = seq_bufs[layer % 2]          # (T*B, dirs*H) f32

        if layer == 0:
            x_in = x_ref[...]                                   # bf16 (T*B, Din0)
        else:
            x_in = seq_bufs[(layer - 1) % 2][...].astype(jnp.bfloat16)

        # Hoisted, time-invariant input projection (+ bias) for all timesteps
        # and both directions in one MXU matmul.
        gx_scr[...] = (jnp.dot(x_in, wih_ref[...],
                               preferred_element_type=jnp.float32)
                       + b_ref[...])

        if dirs == 2:
            # RHS weights loaded once per layer, held across all T steps.
            whh_f = whh_f_ref[...]
            whh_r = whh_r_ref[...]
            # TODO(synk): explicit MXU driving (matmul_push_rhs on separate
            # mxu_index per direction) could overlap the two chains further.
            h_f = jnp.zeros((B, H), jnp.float32)
            h_r = jnp.zeros((B, H), jnp.float32)
            c_f = jnp.zeros((B, H), jnp.float32)
            c_r = jnp.zeros((B, H), jnp.float32)

            # Fully unrolled: step s does fwd t=s and rev t=T-1-s with two
            # independent single-tile recurrent matmuls.
            for s in range(T):
                t_f = s
                t_r = T - 1 - s
                gh_f = jnp.dot(h_f.astype(jnp.bfloat16), whh_f,
                               preferred_element_type=jnp.float32)   # (B, G)
                gh_r = jnp.dot(h_r.astype(jnp.bfloat16), whh_r,
                               preferred_element_type=jnp.float32)   # (B, G)
                gates_f = gx_scr[pl.ds(t_f * B, B), 0:G] + gh_f
                gates_r = gx_scr[pl.ds(t_r * B, B), G:2 * G] + gh_r
                # gate columns packed (i, f, o | g): sigmoid on 3H, tanh on H
                sig_f = jax.nn.sigmoid(gates_f[:, 0:3 * H])
                g_f = jnp.tanh(gates_f[:, 3 * H:4 * H])
                sig_r = jax.nn.sigmoid(gates_r[:, 0:3 * H])
                g_r = jnp.tanh(gates_r[:, 3 * H:4 * H])
                c_f_new = sig_f[:, H:2 * H] * c_f + sig_f[:, 0:H] * g_f
                c_r_new = sig_r[:, H:2 * H] * c_r + sig_r[:, 0:H] * g_r
                h_f_new = sig_f[:, 2 * H:3 * H] * jnp.tanh(c_f_new)
                h_r_new = sig_r[:, 2 * H:3 * H] * jnp.tanh(c_r_new)
                # packed-sequence masking: freeze state / zero output (padding)
                m_f = masks[t_f]
                m_r = masks[t_r]
                out_scr[pl.ds(t_f * B, B), 0:H] = jnp.where(m_f, h_f_new, 0.0)
                out_scr[pl.ds(t_r * B, B), H:2 * H] = jnp.where(m_r, h_r_new, 0.0)
                h_f = jnp.where(m_f, h_f_new, h_f)
                h_r = jnp.where(m_r, h_r_new, h_r)
                c_f = jnp.where(m_f, c_f_new, c_f)
                c_r = jnp.where(m_r, c_r_new, c_r)
        else:
            whh = whh_ref[...]
            h = jnp.zeros((B, H), jnp.float32)
            c = jnp.zeros((B, H), jnp.float32)
            for t in range(T):
                gh = jnp.dot(h.astype(jnp.bfloat16), whh,
                             preferred_element_type=jnp.float32)     # (B, G)
                gates = gx_scr[pl.ds(t * B, B), :] + gh
                sig = jax.nn.sigmoid(gates[:, 0:3 * H])
                g = jnp.tanh(gates[:, 3 * H:4 * H])
                c_new = sig[:, H:2 * H] * c + sig[:, 0:H] * g
                h_new = sig[:, 2 * H:3 * H] * jnp.tanh(c_new)
                m = masks[t]
                out_scr[pl.ds(t * B, B), :] = jnp.where(m, h_new, 0.0)
                h = jnp.where(m, h_new, h)
                c = jnp.where(m, c_new, c)

    # Final Linear + log_softmax (dim=2), fused and lane-dense (128 columns,
    # padded bias lanes = -1e30 so exp underflows to exactly 0).
    feat = seq_bufs[(num_layers - 1) % 2][...].astype(jnp.bfloat16)  # (T*B, dirs*H)
    logits = (jnp.dot(feat, wlin_ref[...], preferred_element_type=jnp.float32)
              + blin_ref[...])
    zmax = jnp.max(logits, axis=-1, keepdims=True)
    z = logits - zmax
    lse = jnp.log(jnp.sum(jnp.exp(z), axis=-1, keepdims=True))
    out_ref[...] = z - lse


# ----------------------------------------------------------------------------
# Weight packing (wrapper side, done once).
# ----------------------------------------------------------------------------
def _reorder_gates(w):
    """PyTorch gate order along axis 0 is (i, f, g, o); repack to (i, f, o, g)
    so the sigmoid gates are contiguous and g is separate."""
    i, f, g, o = jnp.split(w, 4, axis=0)
    return jnp.concatenate([i, f, o, g], axis=0)


def _pack_layer(layer, dirs, H):
    G = 4 * H
    if dirs == 1:
        p = layer[0]
        wih = _reorder_gates(p["w_ih"]).T.astype(jnp.bfloat16)    # (Din, G)
        whh = _reorder_gates(p["w_hh"]).T.astype(jnp.bfloat16)    # (H, G)
        bias = _reorder_gates(p["b_ih"] + p["b_hh"]).reshape(1, G).astype(jnp.float32)
        return wih, whh, bias
    pf, pr = layer
    wih = jnp.concatenate([_reorder_gates(pf["w_ih"]).T,
                           _reorder_gates(pr["w_ih"]).T],
                          axis=1).astype(jnp.bfloat16)            # (Din, 2G)
    whh_f = _reorder_gates(pf["w_hh"]).T.astype(jnp.bfloat16)     # (H, G)
    whh_r = _reorder_gates(pr["w_hh"]).T.astype(jnp.bfloat16)     # (H, G)
    bias = jnp.concatenate([_reorder_gates(pf["b_ih"] + pf["b_hh"]),
                            _reorder_gates(pr["b_ih"] + pr["b_hh"])]
                           ).reshape(1, 2 * G).astype(jnp.float32)
    return wih, whh_f, whh_r, bias


# ----------------------------------------------------------------------------
# BasicLSTM forward: a single pallas_call.
# ----------------------------------------------------------------------------
def basic_lstm_forward(params, x, lengths):
    T, B, _ = x.shape
    dirs = 2 if params["bidirectional"] else 1
    num_layers = len(params["lstm"])
    H = params["lstm"][0][0]["w_hh"].shape[1]
    O = params["linear"]["w"].shape[0]
    G = 4 * H
    O_pad = max(128, pl.cdiv(O, 128) * 128)   # lane-dense output width

    inputs = [x.reshape(T * B, -1).astype(jnp.bfloat16),
              lengths.astype(jnp.int32).reshape(B, 1)]
    for layer in params["lstm"]:
        inputs.extend(_pack_layer(layer, dirs, H))
    # Lane-dense epilogue packing: pad W_lin columns with zeros and bias with a
    # large finite negative (NOT -inf, to keep log_softmax NaN-free).
    wlin = params["linear"]["w"].T.astype(jnp.float32)            # (dirs*H, O)
    wlin = jnp.pad(wlin, ((0, 0), (0, O_pad - O))).astype(jnp.bfloat16)
    blin = jnp.pad(params["linear"]["b"].astype(jnp.float32),
                   (0, O_pad - O), constant_values=-1e30).reshape(1, O_pad)
    inputs.append(wlin)
    inputs.append(blin)
    # TODO(synk): nn.LSTM inter-layer dropout is train-mode only; eval
    # semantics (no dropout) are implemented here.

    vmem = pl.BlockSpec(memory_space=pltpu.MemorySpace.VMEM)
    out = pl.pallas_call(
        functools.partial(_fused_lstm_kernel, T=T, B=B, H=H, dirs=dirs,
                          num_layers=num_layers),
        out_shape=jax.ShapeDtypeStruct((T * B, O_pad), jnp.float32),
        in_specs=[vmem] * len(inputs),
        out_specs=vmem,
        scratch_shapes=[
            pltpu.VMEM((T * B, dirs * G), jnp.float32),   # hoisted input gates
            pltpu.VMEM((T * B, dirs * H), jnp.float32),   # layer output (ping)
            pltpu.VMEM((T * B, dirs * H), jnp.float32),   # layer output (pong)
        ],
    )(*inputs)
    return out[:, :O].reshape(T, B, O)


# ----------------------------------------------------------------------------
# Parameter init (matches nn.LSTM / nn.Linear default uniform init).
# ----------------------------------------------------------------------------
def init_params(key, input_size, hidden_size, num_layers, output_size,
                bidirectional):
    dirs = 2 if bidirectional else 1
    k_lstm = 1.0 / float(hidden_size) ** 0.5
    params = {"bidirectional": bidirectional, "lstm": [], "linear": {}}
    for l in range(num_layers):
        in_l = input_size if l == 0 else hidden_size * dirs
        layer = []
        for _ in range(dirs):
            key, k1, k2, k3, k4 = jax.random.split(key, 5)
            layer.append({
                "w_ih": jax.random.uniform(k1, (4 * hidden_size, in_l),
                                           jnp.float32, -k_lstm, k_lstm),
                "w_hh": jax.random.uniform(k2, (4 * hidden_size, hidden_size),
                                           jnp.float32, -k_lstm, k_lstm),
                "b_ih": jax.random.uniform(k3, (4 * hidden_size,),
                                           jnp.float32, -k_lstm, k_lstm),
                "b_hh": jax.random.uniform(k4, (4 * hidden_size,),
                                           jnp.float32, -k_lstm, k_lstm),
            })
        params["lstm"].append(layer)
    fan_in = hidden_size * dirs
    k_lin = 1.0 / float(fan_in) ** 0.5
    key, kw, kb = jax.random.split(key, 3)
    params["linear"] = {
        "w": jax.random.uniform(kw, (output_size, fan_in),
                                jnp.float32, -k_lin, k_lin),
        "b": jax.random.uniform(kb, (output_size,),
                                jnp.float32, -k_lin, k_lin),
    }
    return params


if __name__ == "__main__":
    # BasicLSTM(input_size=8, hidden_size=32, num_layers=2, output_size=16,
    #           bidirectional=True, dropout=0.0)
    input_size, hidden_size, num_layers, output_size = 8, 32, 2, 16
    bidirectional = True
    T, B = 8, 8

    key = jax.random.PRNGKey(0)
    key, kp, kx = jax.random.split(key, 3)
    params = init_params(kp, input_size, hidden_size, num_layers, output_size,
                         bidirectional)

    # lengths sorted descending (enforce_sorted=True), max length == T.
    lengths = jnp.array([8, 8, 7, 6, 5, 4, 3, 2], dtype=jnp.int32)
    x = jax.random.normal(kx, (T, B, input_size), jnp.float32)
    # zero the padded tail like a typical padded batch (kernel masks it anyway)
    valid = (jnp.arange(T)[:, None, None] < lengths[None, :, None])
    x = x * valid.astype(jnp.float32)

    out = basic_lstm_forward(params, x, lengths)
    out = jax.block_until_ready(out)

    assert out.shape == (T, B, output_size)
    assert bool(jnp.all(jnp.isfinite(out)))
    # log_softmax invariant: exp(out) sums to 1 along dim=2
    assert bool(jnp.allclose(jnp.exp(out).sum(-1), 1.0, atol=1e-4))
    # padded timesteps (t >= lengths[b]) have zero LSTM features, so their
    # output must equal log_softmax(linear bias): checks the masking path and
    # the lane-dense (-1e30) padding of the epilogue.
    pad_ref = jax.nn.log_softmax(params["linear"]["b"])
    pad_rows = out[~valid[..., 0]]
    assert bool(jnp.allclose(pad_rows, pad_ref[None, :], atol=1e-4))
    print("KERNEL_OK")
</pallas_src>

<mosaic_0001>
module attributes {stable_mosaic.version = 11 : i64} {
  func.func @_fused_lstm_kernel(%arg0: memref<64x8xbf16, #tpu.memory_space<vmem>>, %arg1: memref<8x1xi32, #tpu.memory_space<vmem>>, %arg2: memref<8x256xbf16, #tpu.memory_space<vmem>>, %arg3: memref<32x128xbf16, #tpu.memory_space<vmem>>, %arg4: memref<32x128xbf16, #tpu.memory_space<vmem>>, %arg5: memref<1x256xf32, #tpu.memory_space<vmem>>, %arg6: memref<64x256xbf16, #tpu.memory_space<vmem>>, %arg7: memref<32x128xbf16, #tpu.memory_space<vmem>>, %arg8: memref<32x128xbf16, #tpu.memory_space<vmem>>, %arg9: memref<1x256xf32, #tpu.memory_space<vmem>>, %arg10: memref<64x128xbf16, #tpu.memory_space<vmem>>, %arg11: memref<1x128xf32, #tpu.memory_space<vmem>>, %arg12: memref<64x128xf32, #tpu.memory_space<vmem>>, %arg13: memref<64x256xf32, #tpu.memory_space<vmem>>, %arg14: memref<64x64xf32, #tpu.memory_space<vmem>>, %arg15: memref<64x64xf32, #tpu.memory_space<vmem>>) attributes {dimension_semantics = [], scalar_prefetch = 0 : i64, scratch_operands = 3 : i64, tpu.core_type = #tpu.core_type<tc>} {
    %c0 = arith.constant 0 : index
    %c0_0 = arith.constant 0 : index
    %0 = vector.load %arg1[%c0, %c0_0] : memref<8x1xi32, #tpu.memory_space<vmem>>, vector<8x1xi32>
    %c0_i32 = arith.constant 0 : i32
    %1 = vector.broadcast %c0_i32 : i32 to vector<8x1xi32>
    %2 = arith.cmpi sgt, %0, %1 : vector<8x1xi32>
    %3 = vector.shape_cast %2 : vector<8x1xi1> to vector<8x1xi1>
    %4 = vector.broadcast %3 : vector<8x1xi1> to vector<8x32xi1>
    %c1_i32 = arith.constant 1 : i32
    %5 = vector.broadcast %c1_i32 : i32 to vector<8x1xi32>
    %6 = arith.cmpi sgt, %0, %5 : vector<8x1xi32>
    %7 = vector.shape_cast %6 : vector<8x1xi1> to vector<8x1xi1>
    %8 = vector.broadcast %7 : vector<8x1xi1> to vector<8x32xi1>
    %c2_i32 = arith.constant 2 : i32
    %9 = vector.broadcast %c2_i32 : i32 to vector<8x1xi32>
    %10 = arith.cmpi sgt, %0, %9 : vector<8x1xi32>
    %11 = vector.shape_cast %10 : vector<8x1xi1> to vector<8x1xi1>
    %12 = vector.broadcast %11 : vector<8x1xi1> to vector<8x32xi1>
    %c3_i32 = arith.constant 3 : i32
    %13 = vector.broadcast %c3_i32 : i32 to vector<8x1xi32>
    %14 = arith.cmpi sgt, %0, %13 : vector<8x1xi32>
    %15 = vector.shape_cast %14 : vector<8x1xi1> to vector<8x1xi1>
    %16 = vector.broadcast %15 : vector<8x1xi1> to vector<8x32xi1>
    %c4_i32 = arith.constant 4 : i32
    %17 = vector.broadcast %c4_i32 : i32 to vector<8x1xi32>
    %18 = arith.cmpi sgt, %0, %17 : vector<8x1xi32>
    %19 = vector.shape_cast %18 : vector<8x1xi1> to vector<8x1xi1>
    %20 = vector.broadcast %19 : vector<8x1xi1> to vector<8x32xi1>
    %c5_i32 = arith.constant 5 : i32
    %21 = vector.broadcast %c5_i32 : i32 to vector<8x1xi32>
    %22 = arith.cmpi sgt, %0, %21 : vector<8x1xi32>
    %23 = vector.shape_cast %22 : vector<8x1xi1> to vector<8x1xi1>
    %24 = vector.broadcast %23 : vector<8x1xi1> to vector<8x32xi1>
    %c6_i32 = arith.constant 6 : i32
    %25 = vector.broadcast %c6_i32 : i32 to vector<8x1xi32>
    %26 = arith.cmpi sgt, %0, %25 : vector<8x1xi32>
    %27 = vector.shape_cast %26 : vector<8x1xi1> to vector<8x1xi1>
    %28 = vector.broadcast %27 : vector<8x1xi1> to vector<8x32xi1>
    %c7_i32 = arith.constant 7 : i32
    %29 = vector.broadcast %c7_i32 : i32 to vector<8x1xi32>
    %30 = arith.cmpi sgt, %0, %29 : vector<8x1xi32>
    %31 = vector.shape_cast %30 : vector<8x1xi1> to vector<8x1xi1>
    %32 = vector.broadcast %31 : vector<8x1xi1> to vector<8x32xi1>
    %c0_1 = arith.constant 0 : index
    %c0_2 = arith.constant 0 : index
    %33 = vector.load %arg0[%c0_1, %c0_2] : memref<64x8xbf16, #tpu.memory_space<vmem>>, vector<64x8xbf16>
    %c0_3 = arith.constant 0 : index
    %c0_4 = arith.constant 0 : index
    %34 = vector.load %arg2[%c0_3, %c0_4] : memref<8x256xbf16, #tpu.memory_space<vmem>>, vector<8x256xbf16>
    %cst = arith.constant dense<0.000000e+00> : vector<64x256xf32>
    %35 = tpu.matmul %33, %34, %cst {dimension_numbers = #tpu.dot_dimension_numbers<[1], [0], [0], [1], [0, 0, 1, 1], [], []>} : vector<64x8xbf16>, vector<8x256xbf16>, vector<64x256xf32> -> vector<64x256xf32>
    %c0_5 = arith.constant 0 : index
    %c0_6 = arith.constant 0 : index
    %36 = vector.load %arg5[%c0_5, %c0_6] : memref<1x256xf32, #tpu.memory_space<vmem>>, vector<1x256xf32>
    %37 = vector.broadcast %36 : vector<1x256xf32> to vector<64x256xf32>
    %38 = arith.addf %35, %37 : vector<64x256xf32>
    %c0_7 = arith.constant 0 : index
    %c0_8 = arith.constant 0 : index
    %39 = vector.load %arg13[%c0_7, %c0_8] : memref<64x256xf32, #tpu.memory_space<vmem>>, vector<64x256xf32>
    tpu.vector_store %arg13[%c0_7, %c0_8], %38 {strides = array<i32>} : memref<64x256xf32, #tpu.memory_space<vmem>>, vector<64x256xf32>,
    %c0_9 = arith.constant 0 : index
    %c0_10 = arith.constant 0 : index
    %40 = vector.load %arg3[%c0_9, %c0_10] : memref<32x128xbf16, #tpu.memory_space<vmem>>, vector<32x128xbf16>
    %c0_11 = arith.constant 0 : index
    %c0_12 = arith.constant 0 : index
    %41 = vector.load %arg4[%c0_11, %c0_12] : memref<32x128xbf16, #tpu.memory_space<vmem>>, vector<32x128xbf16>
    %cst_13 = arith.constant 0.000000e+00 : f32
    %42 = vector.broadcast %cst_13 : f32 to vector<8x32xf32>
    %cst_14 = arith.constant 0.000000e+00 : f32
    %43 = vector.broadcast %cst_14 : f32 to vector<8x32xf32>
    %cst_15 = arith.constant 0.000000e+00 : f32
    %44 = vector.broadcast %cst_15 : f32 to vector<8x32xf32>
    %cst_16 = arith.constant 0.000000e+00 : f32
    %45 = vector.broadcast %cst_16 : f32 to vector<8x32xf32>
    %46 = arith.truncf %42 : vector<8x32xf32> to vector<8x32xbf16>
    %cst_17 = arith.constant dense<0.000000e+00> : vector<8x128xf32>
    %47 = tpu.matmul %46, %40, %cst_17 {dimension_numbers = #tpu.dot_dimension_numbers<[1], [0], [0], [1], [0, 0, 1, 1], [], []>} : vector<8x32xbf16>, vector<32x128xbf16>, vector<8x128xf32> -> vector<8x128xf32>
    %48 = arith.truncf %43 : vector<8x32xf32> to vector<8x32xbf16>
    %cst_18 = arith.constant dense<0.000000e+00> : vector<8x128xf32>
    %49 = tpu.matmul %48, %41, %cst_18 {dimension_numbers = #tpu.dot_dimension_numbers<[1], [0], [0], [1], [0, 0, 1, 1], [], []>} : vector<8x32xbf16>, vector<32x128xbf16>, vector<8x128xf32> -> vector<8x128xf32>
    %c0_19 = arith.constant 0 : index
    %c0_20 = arith.constant 0 : index
    %50 = vector.load %arg13[%c0_19, %c0_20] : memref<64x256xf32, #tpu.memory_space<vmem>>, vector<8x128xf32>
    %51 = arith.addf %50, %47 : vector<8x128xf32>
    %c56 = arith.constant 56 : index
    %c128 = arith.constant 128 : index
    %52 = vector.load %arg13[%c56, %c128] : memref<64x256xf32, #tpu.memory_space<vmem>>, vector<8x128xf32>
    %53 = arith.addf %52, %49 : vector<8x128xf32>
    %54 = vector.extract_strided_slice %51 {offsets = [0, 0], sizes = [8, 96], strides = [1, 1]} : vector<8x128xf32> to vector<8x96xf32>
    %55 = arith.negf %54 : vector<8x96xf32>
    %56 = math.exp %55 : vector<8x96xf32>
    %cst_21 = arith.constant 1.000000e+00 : f32
    %57 = vector.broadcast %cst_21 : f32 to vector<8x96xf32>
    %58 = arith.addf %57, %56 : vector<8x96xf32>
    %59 = arith.divf %57, %58 : vector<8x96xf32>
    %60 = vector.extract_strided_slice %51 {offsets = [0, 96], sizes = [8, 32], strides = [1, 1]} : vector<8x128xf32> to vector<8x32xf32>
    %61 = math.tanh %60 : vector<8x32xf32>
    %62 = vector.extract_strided_slice %53 {offsets = [0, 0], sizes = [8, 96], strides = [1, 1]} : vector<8x128xf32> to vector<8x96xf32>
    %63 = arith.negf %62 : vector<8x96xf32>
    %64 = math.exp %63 : vector<8x96xf32>
    %cst_22 = arith.constant 1.000000e+00 : f32
    %65 = vector.broadcast %cst_22 : f32 to vector<8x96xf32>
    %66 = arith.addf %65, %64 : vector<8x96xf32>
    %67 = arith.divf %65, %66 : vector<8x96xf32>
    %68 = vector.extract_strided_slice %53 {offsets = [0, 96], sizes = [8, 32], strides = [1, 1]} : vector<8x128xf32> to vector<8x32xf32>
    %69 = math.tanh %68 : vector<8x32xf32>
    %70 = vector.extract_strided_slice %59 {offsets = [0, 32], sizes = [8, 32], strides = [1, 1]} : vector<8x96xf32> to vector<8x32xf32>
    %71 = arith.mulf %70, %44 : vector<8x32xf32>
    %72 = vector.extract_strided_slice %59 {offsets = [0, 0], sizes = [8, 32], strides = [1, 1]} : vector<8x96xf32> to vector<8x32xf32>
    %73 = arith.mulf %72, %61 : vector<8x32xf32>
    %74 = arith.addf %71, %73 : vector<8x32xf32>
    %75 = vector.extract_strided_slice %67 {offsets = [0, 32], sizes = [8, 32], strides = [1, 1]} : vector<8x96xf32> to vector<8x32xf32>
    %76 = arith.mulf %75, %45 : vector<8x32xf32>
    %77 = vector.extract_strided_slice %67 {offsets = [0, 0], sizes = [8, 32], strides = [1, 1]} : vector<8x96xf32> to vector<8x32xf32>
    %78 = arith.mulf %77, %69 : vector<8x32xf32>
    %79 = arith.addf %76, %78 : vector<8x32xf32>
    %80 = vector.extract_strided_slice %59 {offsets = [0, 64], sizes = [8, 32], strides = [1, 1]} : vector<8x96xf32> to vector<8x32xf32>
    %81 = math.tanh %74 : vector<8x32xf32>
    %82 = arith.mulf %80, %81 : vector<8x32xf32>
    %83 = vector.extract_strided_slice %67 {offsets = [0, 64], sizes = [8, 32], strides = [1, 1]} : vector<8x96xf32> to vector<8x32xf32>
    %84 = math.tanh %79 : vector<8x32xf32>
    %85 = arith.mulf %83, %84 : vector<8x32xf32>
    %cst_23 = arith.constant 0.000000e+00 : f32
    %86 = vector.broadcast %cst_23 : f32 to vector<8x32xf32>
    %87 = arith.select %4, %82, %86 : vector<8x32xi1>, vector<8x32xf32>
    %c0_24 = arith.constant 0 : index
    %c0_25 = arith.constant 0 : index
    %88 = vector.load %arg14[%c0_24, %c0_25] : memref<64x64xf32, #tpu.memory_space<vmem>>, vector<8x32xf32>
    tpu.vector_store %arg14[%c0_24, %c0_25], %87 {strides = array<i32>} : memref<64x64xf32, #tpu.memory_space<vmem>>, vector<8x32xf32>,
    %cst_26 = arith.constant 0.000000e+00 : f32
    %89 = vector.broadcast %cst_26 : f32 to vector<8x32xf32>
    %90 = arith.select %32, %85, %89 : vector<8x32xi1>, vector<8x32xf32>
    %c56_27 = arith.constant 56 : index
    %c32 = arith.constant 32 : index
    %91 = vector.load %arg14[%c56_27, %c32] : memref<64x64xf32, #tpu.memory_space<vmem>>, vector<8x32xf32>
    tpu.vector_store %arg14[%c56_27, %c32], %90 {strides = array<i32>} : memref<64x64xf32, #tpu.memory_space<vmem>>, vector<8x32xf32>,
    %92 = arith.select %4, %82, %42 : vector<8x32xi1>, vector<8x32xf32>
    %93 = arith.select %32, %85, %43 : vector<8x32xi1>, vector<8x32xf32>
    %94 = arith.select %4, %74, %44 : vector<8x32xi1>, vector<8x32xf32>
    %95 = arith.select %32, %79, %45 : vector<8x32xi1>, vector<8x32xf32>
    %96 = arith.truncf %92 : vector<8x32xf32> to vector<8x32xbf16>
    %cst_28 = arith.constant dense<0.000000e+00> : vector<8x128xf32>
    %97 = tpu.matmul %96, %40, %cst_28 {dimension_numbers = #tpu.dot_dimension_numbers<[1], [0], [0], [1], [0, 0, 1, 1], [], []>} : vector<8x32xbf16>, vector<32x128xbf16>, vector<8x128xf32> -> vector<8x128xf32>
    %98 = arith.truncf %93 : vector<8x32xf32> to vector<8x32xbf16>
    %cst_29 = arith.constant dense<0.000000e+00> : vector<8x128xf32>
    %99 = tpu.matmul %98, %41, %cst_29 {dimension_numbers = #tpu.dot_dimension_numbers<[1], [0], [0], [1], [0, 0, 1, 1], [], []>} : vector<8x32xbf16>, vector<32x128xbf16>, vector<8x128xf32> -> vector<8x128xf32>
    %c8 = arith.constant 8 : index
    %c0_30 = arith.constant 0 : index
    %100 = vector.load %arg13[%c8, %c0_30] : memref<64x256xf32, #tpu.memory_space<vmem>>, vector<8x128xf32>
    %101 = arith.addf %100, %97 : vector<8x128xf32>
    %c48 = arith.constant 48 : index
    %c128_31 = arith.constant 128 : index
    %102 = vector.load %arg13[%c48, %c128_31] : memref<64x256xf32, #tpu.memory_space<vmem>>, vector<8x128xf32>
    %103 = arith.addf %102, %99 : vector<8x128xf32>
    %104 = vector.extract_strided_slice %101 {offsets = [0, 0], sizes = [8, 96], strides = [1, 1]} : vector<8x128xf32> to vector<8x96xf32>
    %105 = arith.negf %104 : vector<8x96xf32>
    %106 = math.exp %105 : vector<8x96xf32>
    %cst_32 = arith.constant 1.000000e+00 : f32
    %107 = vector.broadcast %cst_32 : f32 to vector<8x96xf32>
    %108 = arith.addf %107, %106 : vector<8x96xf32>
    %109 = arith.divf %107, %108 : vector<8x96xf32>
    %110 = vector.extract_strided_slice %101 {offsets = [0, 96], sizes = [8, 32], strides = [1, 1]} : vector<8x128xf32> to vector<8x32xf32>
    %111 = math.tanh %110 : vector<8x32xf32>
    %112 = vector.extract_strided_slice %103 {offsets = [0, 0], sizes = [8, 96], strides = [1, 1]} : vector<8x128xf32> to vector<8x96xf32>
    %113 = arith.negf %112 : vector<8x96xf32>
    %114 = math.exp %113 : vector<8x96xf32>
    %cst_33 = arith.constant 1.000000e+00 : f32
    %115 = vector.broadcast %cst_33 : f32 to vector<8x96xf32>
    %116 = arith.addf %115, %114 : vector<8x96xf32>
    %117 = arith.divf %115, %116 : vector<8x96xf32>
    %118 = vector.extract_strided_slice %103 {offsets = [0, 96], sizes = [8, 32], strides = [1, 1]} : vector<8x128xf32> to vector<8x32xf32>
    %119 = math.tanh %118 : vector<8x32xf32>
    %120 = vector.extract_strided_slice %109 {offsets = [0, 32], sizes = [8, 32], strides = [1, 1]} : vector<8x96xf32> to vector<8x32xf32>
    %121 = arith.mulf %120, %94 : vector<8x32xf32>
    %122 = vector.extract_strided_slice %109 {offsets = [0, 0], sizes = [8, 32], strides = [1, 1]} : vector<8x96xf32> to vector<8x32xf32>
    %123 = arith.mulf %122, %111 : vector<8x32xf32>
    %124 = arith.addf %121, %123 : vector<8x32xf32>
    %125 = vector.extract_strided_slice %117 {offsets = [0, 32], sizes = [8, 32], strides = [1, 1]} : vector<8x96xf32> to vector<8x32xf32>
    %126 = arith.mulf %125, %95 : vector<8x32xf32>
    %127 = vector.extract_strided_slice %117 {offsets = [0, 0], sizes = [8, 32], strides = [1, 1]} : vector<8x96xf32> to vector<8x32xf32>
    %128 = arith.mulf %127, %119 : vector<8x32xf32>
    %129 = arith.addf %126, %128 : vector<8x32xf32>
    %130 = vector.extract_strided_slice %109 {offsets = [0, 64], sizes = [8, 32], strides = [1, 1]} : vector<8x96xf32> to vector<8x32xf32>
    %131 = math.tanh %124 : vector<8x32xf32>
    %132 = arith.mulf %130, %131 : vector<8x32xf32>
    %133 = vector.extract_strided_slice %117 {offsets = [0, 64], sizes = [8, 32], strides = [1, 1]} : vector<8x96xf32> to vector<8x32xf32>
    %134 = math.tanh %129 : vector<8x32xf32>
    %135 = arith.mulf %133, %134 : vector<8x32xf32>
    %cst_34 = arith.constant 0.000000e+00 : f32
    %136 = vector.broadcast %cst_34 : f32 to vector<8x32xf32>
    %137 = arith.select %8, %132, %136 : vector<8x32xi1>, vector<8x32xf32>
    %c8_35 = arith.constant 8 : index
    %c0_36 = arith.constant 0 : index
    %138 = vector.load %arg14[%c8_35, %c0_36] : memref<64x64xf32, #tpu.memory_space<vmem>>, vector<8x32xf32>
    tpu.vector_store %arg14[%c8_35, %c0_36], %137 {strides = array<i32>} : memref<64x64xf32, #tpu.memory_space<vmem>>, vector<8x32xf32>,
    %cst_37 = arith.constant 0.000000e+00 : f32
    %139 = vector.broadcast %cst_37 : f32 to vector<8x32xf32>
    %140 = arith.select %28, %135, %139 : vector<8x32xi1>, vector<8x32xf32>
    %c48_38 = arith.constant 48 : index
    %c32_39 = arith.constant 32 : index
    %141 = vector.load %arg14[%c48_38, %c32_39] : memref<64x64xf32, #tpu.memory_space<vmem>>, vector<8x32xf32>
    tpu.vector_store %arg14[%c48_38, %c32_39], %140 {strides = array<i32>} : memref<64x64xf32, #tpu.memory_space<vmem>>, vector<8x32xf32>,
    %142 = arith.select %8, %132, %92 : vector<8x32xi1>, vector<8x32xf32>
    %143 = arith.select %28, %135, %93 : vector<8x32xi1>, vector<8x32xf32>
    %144 = arith.select %8, %124, %94 : vector<8x32xi1>, vector<8x32xf32>
    %145 = arith.select %28, %129, %95 : vector<8x32xi1>, vector<8x32xf32>
    %146 = arith.truncf %142 : vector<8x32xf32> to vector<8x32xbf16>
    %cst_40 = arith.constant dense<0.000000e+00> : vector<8x128xf32>
    %147 = tpu.matmul %146, %40, %cst_40 {dimension_numbers = #tpu.dot_dimension_numbers<[1], [0], [0], [1], [0, 0, 1, 1], [], []>} : vector<8x32xbf16>, vector<32x128xbf16>, vector<8x128xf32> -> vector<8x128xf32>
    %148 = arith.truncf %143 : vector<8x32xf32> to vector<8x32xbf16>
    %cst_41 = arith.constant dense<0.000000e+00> : vector<8x128xf32>
    %149 = tpu.matmul %148, %41, %cst_41 {dimension_numbers = #tpu.dot_dimension_numbers<[1], [0], [0], [1], [0, 0, 1, 1], [], []>} : vector<8x32xbf16>, vector<32x128xbf16>, vector<8x128xf32> -> vector<8x128xf32>
    %c16 = arith.constant 16 : index
    %c0_42 = arith.constant 0 : index
    %150 = vector.load %arg13[%c16, %c0_42] : memref<64x256xf32, #tpu.memory_space<vmem>>, vector<8x128xf32>
    %151 = arith.addf %150, %147 : vector<8x128xf32>
    %c40 = arith.constant 40 : index
    %c128_43 = arith.constant 128 : index
    %152 = vector.load %arg13[%c40, %c128_43] : memref<64x256xf32, #tpu.memory_space<vmem>>, vector<8x128xf32>
    %153 = arith.addf %152, %149 : vector<8x128xf32>
    %154 = vector.extract_strided_slice %151 {offsets = [0, 0], sizes = [8, 96], strides = [1, 1]} : vector<8x128xf32> to vector<8x96xf32>
    %155 = arith.negf %154 : vector<8x96xf32>
    %156 = math.exp %155 : vector<8x96xf32>
    %cst_44 = arith.constant 1.000000e+00 : f32
    %157 = vector.broadcast %cst_44 : f32 to vector<8x96xf32>
    %158 = arith.addf %157, %156 : vector<8x96xf32>
    %159 = arith.divf %157, %158 : vector<8x96xf32>
    %160 = vector.extract_strided_slice %151 {offsets = [0, 96], sizes = [8, 32], strides = [1, 1]} : vector<8x128xf32> to vector<8x32xf32>
    %161 = math.tanh %160 : vector<8x32xf32>
    %162 = vector.extract_strided_slice %153 {offsets = [0, 0], sizes = [8, 96], strides = [1, 1]} : vector<8x128xf32> to vector<8x96xf32>
    %163 = arith.negf %162 : vector<8x96xf32>
    %164 = math.exp %163 : vector<8x96xf32>
    %cst_45 = arith.constant 1.000000e+00 : f32
    %165 = vector.broadcast %cst_45 : f32 to vector<8x96xf32>
    %166 = arith.addf %165, %164 : vector<8x96xf32>
    %167 = arith.divf %165, %166 : vector<8x96xf32>
    %168 = vector.extract_strided_slice %153 {offsets = [0, 96], sizes = [8, 32], strides = [1, 1]} : vector<8x128xf32> to vector<8x32xf32>
    %169 = math.tanh %168 : vector<8x32xf32>
    %170 = vector.extract_strided_slice %159 {offsets = [0, 32], sizes = [8, 32], strides = [1, 1]} : vector<8x96xf32> to vector<8x32xf32>
    %171 = arith.mulf %170, %144 : vector<8x32xf32>
    %172 = vector.extract_strided_slice %159 {offsets = [0, 0], sizes = [8, 32], strides = [1, 1]} : vector<8x96xf32> to vector<8x32xf32>
    %173 = arith.mulf %172, %161 : vector<8x32xf32>
    %174 = arith.addf %171, %173 : vector<8x32xf32>
    %175 = vector.extract_strided_slice %167 {offsets = [0, 32], sizes = [8, 32], strides = [1, 1]} : vector<8x96xf32> to vector<8x32xf32>
    %176 = arith.mulf %175, %145 : vector<8x32xf32>
    %177 = vector.extract_strided_slice %167 {offsets = [0, 0], sizes = [8, 32], strides = [1, 1]} : vector<8x96xf32> to vector<8x32xf32>
    %178 = arith.mulf %177, %169 : vector<8x32xf32>
    %179 = arith.addf %176, %178 : vector<8x32xf32>
    %180 = vector.extract_strided_slice %159 {offsets = [0, 64], sizes = [8, 32], strides = [1, 1]} : vector<8x96xf32> to vector<8x32xf32>
    %181 = math.tanh %174 : vector<8x32xf32>
    %182 = arith.mulf %180, %181 : vector<8x32xf32>
    %183 = vector.extract_strided_slice %167 {offsets = [0, 64], sizes = [8, 32], strides = [1, 1]} : vector<8x96xf32> to vector<8x32xf32>
    %184 = math.tanh %179 : vector<8x32xf32>
    %185 = arith.mulf %183, %184 : vector<8x32xf32>
    %cst_46 = arith.constant 0.000000e+00 : f32
    %186 = vector.broadcast %cst_46 : f32 to vector<8x32xf32>
    %187 = arith.select %12, %182, %186 : vector<8x32xi1>, vector<8x32xf32>
    %c16_47 = arith.constant 16 : index
    %c0_48 = arith.constant 0 : index
    %188 = vector.load %arg14[%c16_47, %c0_48] : memref<64x64xf32, #tpu.memory_space<vmem>>, vector<8x32xf32>
    tpu.vector_store %arg14[%c16_47, %c0_48], %187 {strides = array<i32>} : memref<64x64xf32, #tpu.memory_space<vmem>>, vector<8x32xf32>,
    %cst_49 = arith.constant 0.000000e+00 : f32
    %189 = vector.broadcast %cst_49 : f32 to vector<8x32xf32>
    %190 = arith.select %24, %185, %189 : vector<8x32xi1>, vector<8x32xf32>
    %c40_50 = arith.constant 40 : index
    %c32_51 = arith.constant 32 : index
    %191 = vector.load %arg14[%c40_50, %c32_51] : memref<64x64xf32, #tpu.memory_space<vmem>>, vector<8x32xf32>
    tpu.vector_store %arg14[%c40_50, %c32_51], %190 {strides = array<i32>} : memref<64x64xf32, #tpu.memory_space<vmem>>, vector<8x32xf32>,
    %192 = arith.select %12, %182, %142 : vector<8x32xi1>, vector<8x32xf32>
    %193 = arith.select %24, %185, %143 : vector<8x32xi1>, vector<8x32xf32>
    %194 = arith.select %12, %174, %144 : vector<8x32xi1>, vector<8x32xf32>
    %195 = arith.select %24, %179, %145 : vector<8x32xi1>, vector<8x32xf32>
    %196 = arith.truncf %192 : vector<8x32xf32> to vector<8x32xbf16>
    %cst_52 = arith.constant dense<0.000000e+00> : vector<8x128xf32>
    %197 = tpu.matmul %196, %40, %cst_52 {dimension_numbers = #tpu.dot_dimension_numbers<[1], [0], [0], [1], [0, 0, 1, 1], [], []>} : vector<8x32xbf16>, vector<32x128xbf16>, vector<8x128xf32> -> vector<8x128xf32>
    %198 = arith.truncf %193 : vector<8x32xf32> to vector<8x32xbf16>
    %cst_53 = arith.constant dense<0.000000e+00> : vector<8x128xf32>
    %199 = tpu.matmul %198, %41, %cst_53 {dimension_numbers = #tpu.dot_dimension_numbers<[1], [0], [0], [1], [0, 0, 1, 1], [], []>} : vector<8x32xbf16>, vector<32x128xbf16>, vector<8x128xf32> -> vector<8x128xf32>
    %c24 = arith.constant 24 : index
    %c0_54 = arith.constant 0 : index
    %200 = vector.load %arg13[%c24, %c0_54] : memref<64x256xf32, #tpu.memory_space<vmem>>, vector<8x128xf32>
    %201 = arith.addf %200, %197 : vector<8x128xf32>
    %c32_55 = arith.constant 32 : index
    %c128_56 = arith.constant 128 : index
    %202 = vector.load %arg13[%c32_55, %c128_56] : memref<64x256xf32, #tpu.memory_space<vmem>>, vector<8x128xf32>
    %203 = arith.addf %202, %199 : vector<8x128xf32>
    %204 = vector.extract_strided_slice %201 {offsets = [0, 0], sizes = [8, 96], strides = [1, 1]} : vector<8x128xf32> to vector<8x96xf32>
    %205 = arith.negf %204 : vector<8x96xf32>
    %206 = math.exp %205 : vector<8x96xf32>
    %cst_57 = arith.constant 1.000000e+00 : f32
    %207 = vector.broadcast %cst_57 : f32 to vector<8x96xf32>
    %208 = arith.addf %207, %206 : vector<8x96xf32>
    %209 = arith.divf %207, %208 : vector<8x96xf32>
    %210 = vector.extract_strided_slice %201 {offsets = [0, 96], sizes = [8, 32], strides = [1, 1]} : vector<8x128xf32> to vector<8x32xf32>
    %211 = math.tanh %210 : vector<8x32xf32>
    %212 = vector.extract_strided_slice %203 {offsets = [0, 0], sizes = [8, 96], strides = [1, 1]} : vector<8x128xf32> to vector<8x96xf32>
    %213 = arith.negf %212 : vector<8x96xf32>
    %214 = math.exp %213 : vector<8x96xf32>
    %cst_58 = arith.constant 1.000000e+00 : f32
    %215 = vector.broadcast %cst_58 : f32 to vector<8x96xf32>
    %216 = arith.addf %215, %214 : vector<8x96xf32>
    %217 = arith.divf %215, %216 : vector<8x96xf32>
    %218 = vector.extract_strided_slice %203 {offsets = [0, 96], sizes = [8, 32], strides = [1, 1]} : vector<8x128xf32> to vector<8x32xf32>
    %219 = math.tanh %218 : vector<8x32xf32>
    %220 = vector.extract_strided_slice %209 {offsets = [0, 32], sizes = [8, 32], strides = [1, 1]} : vector<8x96xf32> to vector<8x32xf32>
    %221 = arith.mulf %220, %194 : vector<8x32xf32>
    %222 = vector.extract_strided_slice %209 {offsets = [0, 0], sizes = [8, 32], strides = [1, 1]} : vector<8x96xf32> to vector<8x32xf32>
    %223 = arith.mulf %222, %211 : vector<8x32xf32>
    %224 = arith.addf %221, %223 : vector<8x32xf32>
    %225 = vector.extract_strided_slice %217 {offsets = [0, 32], sizes = [8, 32], strides = [1, 1]} : vector<8x96xf32> to vector<8x32xf32>
    %226 = arith.mulf %225, %195 : vector<8x32xf32>
    %227 = vector.extract_strided_slice %217 {offsets = [0, 0], sizes = [8, 32], strides = [1, 1]} : vector<8x96xf32> to vector<8x32xf32>
    %228 = arith.mulf %227, %219 : vector<8x32xf32>
    %229 = arith.addf %226, %228 : vector<8x32xf32>
    %230 = vector.extract_strided_slice %209 {offsets = [0, 64], sizes = [8, 32], strides = [1, 1]} : vector<8x96xf32> to vector<8x32xf32>
    %231 = math.tanh %224 : vector<8x32xf32>
    %232 = arith.mulf %230, %231 : vector<8x32xf32>
    %233 = vector.extract_strided_slice %217 {offsets = [0, 64], sizes = [8, 32], strides = [1, 1]} : vector<8x96xf32> to vector<8x32xf32>
    %234 = math.tanh %229 : vector<8x32xf32>
    %235 = arith.mulf %233, %234 : vector<8x32xf32>
    %cst_59 = arith.constant 0.000000e+00 : f32
    %236 = vector.broadcast %cst_59 : f32 to vector<8x32xf32>
    %237 = arith.select %16, %232, %236 : vector<8x32xi1>, vector<8x32xf32>
    %c24_60 = arith.constant 24 : index
    %c0_61 = arith.constant 0 : index
    %238 = vector.load %arg14[%c24_60, %c0_61] : memref<64x64xf32, #tpu.memory_space<vmem>>, vector<8x32xf32>
    tpu.vector_store %arg14[%c24_60, %c0_61], %237 {strides = array<i32>} : memref<64x64xf32, #tpu.memory_space<vmem>>, vector<8x32xf32>,
    %cst_62 = arith.constant 0.000000e+00 : f32
    %239 = vector.broadcast %cst_62 : f32 to vector<8x32xf32>
    %240 = arith.select %20, %235, %239 : vector<8x32xi1>, vector<8x32xf32>
    %c32_63 = arith.constant 32 : index
    %c32_64 = arith.constant 32 : index
    %241 = vector.load %arg14[%c32_63, %c32_64] : memref<64x64xf32, #tpu.memory_space<vmem>>, vector<8x32xf32>
    tpu.vector_store %arg14[%c32_63, %c32_64], %240 {strides = array<i32>} : memref<64x64xf32, #tpu.memory_space<vmem>>, vector<8x32xf32>,
    %242 = arith.select %16, %232, %192 : vector<8x32xi1>, vector<8x32xf32>
    %243 = arith.select %20, %235, %193 : vector<8x32xi1>, vector<8x32xf32>
    %244 = arith.select %16, %224, %194 : vector<8x32xi1>, vector<8x32xf32>
    %245 = arith.select %20, %229, %195 : vector<8x32xi1>, vector<8x32xf32>
    %246 = arith.truncf %242 : vector<8x32xf32> to vector<8x32xbf16>
    %cst_65 = arith.constant dense<0.000000e+00> : vector<8x128xf32>
    %247 = tpu.matmul %246, %40, %cst_65 {dimension_numbers = #tpu.dot_dimension_numbers<[1], [0], [0], [1], [0, 0, 1, 1], [], []>} : vector<8x32xbf16>, vector<32x128xbf16>, vector<8x128xf32> -> vector<8x128xf32>
    %248 = arith.truncf %243 : vector<8x32xf32> to vector<8x32xbf16>
    %cst_66 = arith.constant dense<0.000000e+00> : vector<8x128xf32>
    %249 = tpu.matmul %248, %41, %cst_66 {dimension_numbers = #tpu.dot_dimension_numbers<[1], [0], [0], [1], [0, 0, 1, 1], [], []>} : vector<8x32xbf16>, vector<32x128xbf16>, vector<8x128xf32> -> vector<8x128xf32>
    %c32_67 = arith.constant 32 : index
    %c0_68 = arith.constant 0 : index
    %250 = vector.load %arg13[%c32_67, %c0_68] : memref<64x256xf32, #tpu.memory_space<vmem>>, vector<8x128xf32>
    %251 = arith.addf %250, %247 : vector<8x128xf32>
    %c24_69 = arith.constant 24 : index
    %c128_70 = arith.constant 128 : index
    %252 = vector.load %arg13[%c24_69, %c128_70] : memref<64x256xf32, #tpu.memory_space<vmem>>, vector<8x128xf32>
    %253 = arith.addf %252, %249 : vector<8x128xf32>
    %254 = vector.extract_strided_slice %251 {offsets = [0, 0], sizes = [8, 96], strides = [1, 1]} : vector<8x128xf32> to vector<8x96xf32>
    %255 = arith.negf %254 : vector<8x96xf32>
    %256 = math.exp %255 : vector<8x96xf32>
    %cst_71 = arith.constant 1.000000e+00 : f32
    %257 = vector.broadcast %cst_71 : f32 to vector<8x96xf32>
    %258 = arith.addf %257, %256 : vector<8x96xf32>
    %259 = arith.divf %257, %258 : vector<8x96xf32>
    %260 = vector.extract_strided_slice %251 {offsets = [0, 96], sizes = [8, 32], strides = [1, 1]} : vector<8x128xf32> to vector<8x32xf32>
    %261 = math.tanh %260 : vector<8x32xf32>
    %262 = vector.extract_strided_slice %253 {offsets = [0, 0], sizes = [8, 96], strides = [1, 1]} : vector<8x128xf32> to vector<8x96xf32>
    %263 = arith.negf %262 : vector<8x96xf32>
    %264 = math.exp %263 : vector<8x96xf32>
    %cst_72 = arith.constant 1.000000e+00 : f32
    %265 = vector.broadcast %cst_72 : f32 to vector<8x96xf32>
    %266 = arith.addf %265, %264 : vector<8x96xf32>
    %267 = arith.divf %265, %266 : vector<8x96xf32>
    %268 = vector.extract_strided_slice %253 {offsets = [0, 96], sizes = [8, 32], strides = [1, 1]} : vector<8x128xf32> to vector<8x32xf32>
    %269 = math.tanh %268 : vector<8x32xf32>
    %270 = vector.extract_strided_slice %259 {offsets = [0, 32], sizes = [8, 32], strides = [1, 1]} : vector<8x96xf32> to vector<8x32xf32>
    %271 = arith.mulf %270, %244 : vector<8x32xf32>
    %272 = vector.extract_strided_slice %259 {offsets = [0, 0], sizes = [8, 32], strides = [1, 1]} : vector<8x96xf32> to vector<8x32xf32>
    %273 = arith.mulf %272, %261 : vector<8x32xf32>
    %274 = arith.addf %271, %273 : vector<8x32xf32>
    %275 = vector.extract_strided_slice %267 {offsets = [0, 32], sizes = [8, 32], strides = [1, 1]} : vector<8x96xf32> to vector<8x32xf32>
    %276 = arith.mulf %275, %245 : vector<8x32xf32>
    %277 = vector.extract_strided_slice %267 {offsets = [0, 0], sizes = [8, 32], strides = [1, 1]} : vector<8x96xf32> to vector<8x32xf32>
    %278 = arith.mulf %277, %269 : vector<8x32xf32>
    %279 = arith.addf %276, %278 : vector<8x32xf32>
    %280 = vector.extract_strided_slice %259 {offsets = [0, 64], sizes = [8, 32], strides = [1, 1]} : vector<8x96xf32> to vector<8x32xf32>
    %281 = math.tanh %274 : vector<8x32xf32>
    %282 = arith.mulf %280, %281 : vector<8x32xf32>
    %283 = vector.extract_strided_slice %267 {offsets = [0, 64], sizes = [8, 32], strides = [1, 1]} : vector<8x96xf32> to vector<8x32xf32>
    %284 = math.tanh %279 : vector<8x32xf32>
    %285 = arith.mulf %283, %284 : vector<8x32xf32>
    %cst_73 = arith.constant 0.000000e+00 : f32
    %286 = vector.broadcast %cst_73 : f32 to vector<8x32xf32>
    %287 = arith.select %20, %282, %286 : vector<8x32xi1>, vector<8x32xf32>
    %c32_74 = arith.constant 32 : index
    %c0_75 = arith.constant 0 : index
    %288 = vector.load %arg14[%c32_74, %c0_75] : memref<64x64xf32, #tpu.memory_space<vmem>>, vector<8x32xf32>
    tpu.vector_store %arg14[%c32_74, %c0_75], %287 {strides = array<i32>} : memref<64x64xf32, #tpu.memory_space<vmem>>, vector<8x32xf32>,
    %cst_76 = arith.constant 0.000000e+00 : f32
    %289 = vector.broadcast %cst_76 : f32 to vector<8x32xf32>
    %290 = arith.select %16, %285, %289 : vector<8x32xi1>, vector<8x32xf32>
    %c24_77 = arith.constant 24 : index
    %c32_78 = arith.constant 32 : index
    %291 = vector.load %arg14[%c24_77, %c32_78] : memref<64x64xf32, #tpu.memory_space<vmem>>, vector<8x32xf32>
    tpu.vector_store %arg14[%c24_77, %c32_78], %290 {strides = array<i32>} : memref<64x64xf32, #tpu.memory_space<vmem>>, vector<8x32xf32>,
    %292 = arith.select %20, %282, %242 : vector<8x32xi1>, vector<8x32xf32>
    %293 = arith.select %16, %285, %243 : vector<8x32xi1>, vector<8x32xf32>
    %294 = arith.select %20, %274, %244 : vector<8x32xi1>, vector<8x32xf32>
    %295 = arith.select %16, %279, %245 : vector<8x32xi1>, vector<8x32xf32>
    %296 = arith.truncf %292 : vector<8x32xf32> to vector<8x32xbf16>
    %cst_79 = arith.constant dense<0.000000e+00> : vector<8x128xf32>
    %297 = tpu.matmul %296, %40, %cst_79 {dimension_numbers = #tpu.dot_dimension_numbers<[1], [0], [0], [1], [0, 0, 1, 1], [], []>} : vector<8x32xbf16>, vector<32x128xbf16>, vector<8x128xf32> -> vector<8x128xf32>
    %298 = arith.truncf %293 : vector<8x32xf32> to vector<8x32xbf16>
    %cst_80 = arith.constant dense<0.000000e+00> : vector<8x128xf32>
    %299 = tpu.matmul %298, %41, %cst_80 {dimension_numbers = #tpu.dot_dimension_numbers<[1], [0], [0], [1], [0, 0, 1, 1], [], []>} : vector<8x32xbf16>, vector<32x128xbf16>, vector<8x128xf32> -> vector<8x128xf32>
    %c40_81 = arith.constant 40 : index
    %c0_82 = arith.constant 0 : index
    %300 = vector.load %arg13[%c40_81, %c0_82] : memref<64x256xf32, #tpu.memory_space<vmem>>, vector<8x128xf32>
    %301 = arith.addf %300, %297 : vector<8x128xf32>
    %c16_83 = arith.constant 16 : index
    %c128_84 = arith.constant 128 : index
    %302 = vector.load %arg13[%c16_83, %c128_84] : memref<64x256xf32, #tpu.memory_space<vmem>>, vector<8x128xf32>
    %303 = arith.addf %302, %299 : vector<8x128xf32>
    %304 = vector.extract_strided_slice %301 {offsets = [0, 0], sizes = [8, 96], strides = [1, 1]} : vector<8x128xf32> to vector<8x96xf32>
    %305 = arith.negf %304 : vector<8x96xf32>
    %306 = math.exp %305 : vector<8x96xf32>
    %cst_85 = arith.constant 1.000000e+00 : f32
    %307 = vector.broadcast %cst_85 : f32 to vector<8x96xf32>
    %308 = arith.addf %307, %306 : vector<8x96xf32>
    %309 = arith.divf %307, %308 : vector<8x96xf32>
    %310 = vector.extract_strided_slice %301 {offsets = [0, 96], sizes = [8, 32], strides = [1, 1]} : vector<8x128xf32> to vector<8x32xf32>
    %311 = math.tanh %310 : vector<8x32xf32>
    %312 = vector.extract_strided_slice %303 {offsets = [0, 0], sizes = [8, 96], strides = [1, 1]} : vector<8x128xf32> to vector<8x96xf32>
    %313 = arith.negf %312 : vector<8x96xf32>
    %314 = math.exp %313 : vector<8x96xf32>
    %cst_86 = arith.constant 1.000000e+00 : f32
    %315 = vector.broadcast %cst_86 : f32 to vector<8x96xf32>
    %316 = arith.addf %315, %314 : vector<8x96xf32>
    %317 = arith.divf %315, %316 : vector<8x96xf32>
    %318 = vector.extract_strided_slice %303 {offsets = [0, 96], sizes = [8, 32], strides = [1, 1]} : vector<8x128xf32> to vector<8x32xf32>
    %319 = math.tanh %318 : vector<8x32xf32>
    %320 = vector.extract_strided_slice %309 {offsets = [0, 32], sizes = [8, 32], strides = [1, 1]} : vector<8x96xf32> to vector<8x32xf32>
    %321 = arith.mulf %320, %294 : vector<8x32xf32>
    %322 = vector.extract_strided_slice %309 {offsets = [0, 0], sizes = [8, 32], strides = [1, 1]} : vector<8x96xf32> to vector<8x32xf32>
    %323 = arith.mulf %322, %311 : vector<8x32xf32>
    %324 = arith.addf %321, %323 : vector<8x32xf32>
    %325 = vector.extract_strided_slice %317 {offsets = [0, 32], sizes = [8, 32], strides = [1, 1]} : vector<8x96xf32> to vector<8x32xf32>
    %326 = arith.mulf %325, %295 : vector<8x32xf32>
    %327 = vector.extract_strided_slice %317 {offsets = [0, 0], sizes = [8, 32], strides = [1, 1]} : vector<8x96xf32> to vector<8x32xf32>
    %328 = arith.mulf %327, %319 : vector<8x32xf32>
    %329 = arith.addf %326, %328 : vector<8x32xf32>
    %330 = vector.extract_strided_slice %309 {offsets = [0, 64], sizes = [8, 32], strides = [1, 1]} : vector<8x96xf32> to vector<8x32xf32>
    %331 = math.tanh %324 : vector<8x32xf32>
    %332 = arith.mulf %330, %331 : vector<8x32xf32>
    %333 = vector.extract_strided_slice %317 {offsets = [0, 64], sizes = [8, 32], strides = [1, 1]} : vector<8x96xf32> to vector<8x32xf32>
    %334 = math.tanh %329 : vector<8x32xf32>
    %335 = arith.mulf %333, %334 : vector<8x32xf32>
    %cst_87 = arith.constant 0.000000e+00 : f32
    %336 = vector.broadcast %cst_87 : f32 to vector<8x32xf32>
    %337 = arith.select %24, %332, %336 : vector<8x32xi1>, vector<8x32xf32>
    %c40_88 = arith.constant 40 : index
    %c0_89 = arith.constant 0 : index
    %338 = vector.load %arg14[%c40_88, %c0_89] : memref<64x64xf32, #tpu.memory_space<vmem>>, vector<8x32xf32>
    tpu.vector_store %arg14[%c40_88, %c0_89], %337 {strides = array<i32>} : memref<64x64xf32, #tpu.memory_space<vmem>>, vector<8x32xf32>,
    %cst_90 = arith.constant 0.000000e+00 : f32
    %339 = vector.broadcast %cst_90 : f32 to vector<8x32xf32>
    %340 = arith.select %12, %335, %339 : vector<8x32xi1>, vector<8x32xf32>
    %c16_91 = arith.constant 16 : index
    %c32_92 = arith.constant 32 : index
    %341 = vector.load %arg14[%c16_91, %c32_92] : memref<64x64xf32, #tpu.memory_space<vmem>>, vector<8x32xf32>
    tpu.vector_store %arg14[%c16_91, %c32_92], %340 {strides = array<i32>} : memref<64x64xf32, #tpu.memory_space<vmem>>, vector<8x32xf32>,
    %342 = arith.select %24, %332, %292 : vector<8x32xi1>, vector<8x32xf32>
    %343 = arith.select %12, %335, %293 : vector<8x32xi1>, vector<8x32xf32>
    %344 = arith.select %24, %324, %294 : vector<8x32xi1>, vector<8x32xf32>
    %345 = arith.select %12, %329, %295 : vector<8x32xi1>, vector<8x32xf32>
    %346 = arith.truncf %342 : vector<8x32xf32> to vector<8x32xbf16>
    %cst_93 = arith.constant dense<0.000000e+00> : vector<8x128xf32>
    %347 = tpu.matmul %346, %40, %cst_93 {dimension_numbers = #tpu.dot_dimension_numbers<[1], [0], [0], [1], [0, 0, 1, 1], [], []>} : vector<8x32xbf16>, vector<32x128xbf16>, vector<8x128xf32> -> vector<8x128xf32>
    %348 = arith.truncf %343 : vector<8x32xf32> to vector<8x32xbf16>
    %cst_94 = arith.constant dense<0.000000e+00> : vector<8x128xf32>
    %349 = tpu.matmul %348, %41, %cst_94 {dimension_numbers = #tpu.dot_dimension_numbers<[1], [0], [0], [1], [0, 0, 1, 1], [], []>} : vector<8x32xbf16>, vector<32x128xbf16>, vector<8x128xf32> -> vector<8x128xf32>
    %c48_95 = arith.constant 48 : index
    %c0_96 = arith.constant 0 : index
    %350 = vector.load %arg13[%c48_95, %c0_96] : memref<64x256xf32, #tpu.memory_space<vmem>>, vector<8x128xf32>
    %351 = arith.addf %350, %347 : vector<8x128xf32>
    %c8_97 = arith.constant 8 : index
    %c128_98 = arith.constant 128 : index
    %352 = vector.load %arg13[%c8_97, %c128_98] : memref<64x256xf32, #tpu.memory_space<vmem>>, vector<8x128xf32>
    %353 = arith.addf %352, %349 : vector<8x128xf32>
    %354 = vector.extract_strided_slice %351 {offsets = [0, 0], sizes = [8, 96], strides = [1, 1]} : vector<8x128xf32> to vector<8x96xf32>
    %355 = arith.negf %354 : vector<8x96xf32>
    %356 = math.exp %355 : vector<8x96xf32>
    %cst_99 = arith.constant 1.000000e+00 : f32
    %357 = vector.broadcast %cst_99 : f32 to vector<8x96xf32>
    %358 = arith.addf %357, %356 : vector<8x96xf32>
    %359 = arith.divf %357, %358 : vector<8x96xf32>
    %360 = vector.extract_strided_slice %351 {offsets = [0, 96], sizes = [8, 32], strides = [1, 1]} : vector<8x128xf32> to vector<8x32xf32>
    %361 = math.tanh %360 : vector<8x32xf32>
    %362 = vector.extract_strided_slice %353 {offsets = [0, 0], sizes = [8, 96], strides = [1, 1]} : vector<8x128xf32> to vector<8x96xf32>
    %363 = arith.negf %362 : vector<8x96xf32>
    %364 = math.exp %363 : vector<8x96xf32>
    %cst_100 = arith.constant 1.000000e+00 : f32
    %365 = vector.broadcast %cst_100 : f32 to vector<8x96xf32>
    %366 = arith.addf %365, %364 : vector<8x96xf32>
    %367 = arith.divf %365, %366 : vector<8x96xf32>
    %368 = vector.extract_strided_slice %353 {offsets = [0, 96], sizes = [8, 32], strides = [1, 1]} : vector<8x128xf32> to vector<8x32xf32>
    %369 = math.tanh %368 : vector<8x32xf32>
    %370 = vector.extract_strided_slice %359 {offsets = [0, 32], sizes = [8, 32], strides = [1, 1]} : vector<8x96xf32> to vector<8x32xf32>
    %371 = arith.mulf %370, %344 : vector<8x32xf32>
    %372 = vector.extract_strided_slice %359 {offsets = [0, 0], sizes = [8, 32], strides = [1, 1]} : vector<8x96xf32> to vector<8x32xf32>
    %373 = arith.mulf %372, %361 : vector<8x32xf32>
    %374 = arith.addf %371, %373 : vector<8x32xf32>
    %375 = vector.extract_strided_slice %367 {offsets = [0, 32], sizes = [8, 32], strides = [1, 1]} : vector<8x96xf32> to vector<8x32xf32>
    %376 = arith.mulf %375, %345 : vector<8x32xf32>
    %377 = vector.extract_strided_slice %367 {offsets = [0, 0], sizes = [8, 32], strides = [1, 1]} : vector<8x96xf32> to vector<8x32xf32>
    %378 = arith.mulf %377, %369 : vector<8x32xf32>
    %379 = arith.addf %376, %378 : vector<8x32xf32>
    %380 = vector.extract_strided_slice %359 {offsets = [0, 64], sizes = [8, 32], strides = [1, 1]} : vector<8x96xf32> to vector<8x32xf32>
    %381 = math.tanh %374 : vector<8x32xf32>
    %382 = arith.mulf %380, %381 : vector<8x32xf32>
    %383 = vector.extract_strided_slice %367 {offsets = [0, 64], sizes = [8, 32], strides = [1, 1]} : vector<8x96xf32> to vector<8x32xf32>
    %384 = math.tanh %379 : vector<8x32xf32>
    %385 = arith.mulf %383, %384 : vector<8x32xf32>
    %cst_101 = arith.constant 0.000000e+00 : f32
    %386 = vector.broadcast %cst_101 : f32 to vector<8x32xf32>
    %387 = arith.select %28, %382, %386 : vector<8x32xi1>, vector<8x32xf32>
    %c48_102 = arith.constant 48 : index
    %c0_103 = arith.constant 0 : index
    %388 = vector.load %arg14[%c48_102, %c0_103] : memref<64x64xf32, #tpu.memory_space<vmem>>, vector<8x32xf32>
    tpu.vector_store %arg14[%c48_102, %c0_103], %387 {strides = array<i32>} : memref<64x64xf32, #tpu.memory_space<vmem>>, vector<8x32xf32>,
    %cst_104 = arith.constant 0.000000e+00 : f32
    %389 = vector.broadcast %cst_104 : f32 to vector<8x32xf32>
    %390 = arith.select %8, %385, %389 : vector<8x32xi1>, vector<8x32xf32>
    %c8_105 = arith.constant 8 : index
    %c32_106 = arith.constant 32 : index
    %391 = vector.load %arg14[%c8_105, %c32_106] : memref<64x64xf32, #tpu.memory_space<vmem>>, vector<8x32xf32>
    tpu.vector_store %arg14[%c8_105, %c32_106], %390 {strides = array<i32>} : memref<64x64xf32, #tpu.memory_space<vmem>>, vector<8x32xf32>,
    %392 = arith.select %28, %382, %342 : vector<8x32xi1>, vector<8x32xf32>
    %393 = arith.select %8, %385, %343 : vector<8x32xi1>, vector<8x32xf32>
    %394 = arith.select %28, %374, %344 : vector<8x32xi1>, vector<8x32xf32>
    %395 = arith.select %8, %379, %345 : vector<8x32xi1>, vector<8x32xf32>
    %396 = arith.truncf %392 : vector<8x32xf32> to vector<8x32xbf16>
    %cst_107 = arith.constant dense<0.000000e+00> : vector<8x128xf32>
    %397 = tpu.matmul %396, %40, %cst_107 {dimension_numbers = #tpu.dot_dimension_numbers<[1], [0], [0], [1], [0, 0, 1, 1], [], []>} : vector<8x32xbf16>, vector<32x128xbf16>, vector<8x128xf32> -> vector<8x128xf32>
    %398 = arith.truncf %393 : vector<8x32xf32> to vector<8x32xbf16>
    %cst_108 = arith.constant dense<0.000000e+00> : vector<8x128xf32>
    %399 = tpu.matmul %398, %41, %cst_108 {dimension_numbers = #tpu.dot_dimension_numbers<[1], [0], [0], [1], [0, 0, 1, 1], [], []>} : vector<8x32xbf16>, vector<32x128xbf16>, vector<8x128xf32> -> vector<8x128xf32>
    %c56_109 = arith.constant 56 : index
    %c0_110 = arith.constant 0 : index
    %400 = vector.load %arg13[%c56_109, %c0_110] : memref<64x256xf32, #tpu.memory_space<vmem>>, vector<8x128xf32>
    %401 = arith.addf %400, %397 : vector<8x128xf32>
    %c0_111 = arith.constant 0 : index
    %c128_112 = arith.constant 128 : index
    %402 = vector.load %arg13[%c0_111, %c128_112] : memref<64x256xf32, #tpu.memory_space<vmem>>, vector<8x128xf32>
    %403 = arith.addf %402, %399 : vector<8x128xf32>
    %404 = vector.extract_strided_slice %401 {offsets = [0, 0], sizes = [8, 96], strides = [1, 1]} : vector<8x128xf32> to vector<8x96xf32>
    %405 = arith.negf %404 : vector<8x96xf32>
    %406 = math.exp %405 : vector<8x96xf32>
    %cst_113 = arith.constant 1.000000e+00 : f32
    %407 = vector.broadcast %cst_113 : f32 to vector<8x96xf32>
    %408 = arith.addf %407, %406 : vector<8x96xf32>
    %409 = arith.divf %407, %408 : vector<8x96xf32>
    %410 = vector.extract_strided_slice %401 {offsets = [0, 96], sizes = [8, 32], strides = [1, 1]} : vector<8x128xf32> to vector<8x32xf32>
    %411 = math.tanh %410 : vector<8x32xf32>
    %412 = vector.extract_strided_slice %403 {offsets = [0, 0], sizes = [8, 96], strides = [1, 1]} : vector<8x128xf32> to vector<8x96xf32>
    %413 = arith.negf %412 : vector<8x96xf32>
    %414 = math.exp %413 : vector<8x96xf32>
    %cst_114 = arith.constant 1.000000e+00 : f32
    %415 = vector.broadcast %cst_114 : f32 to vector<8x96xf32>
    %416 = arith.addf %415, %414 : vector<8x96xf32>
    %417 = arith.divf %415, %416 : vector<8x96xf32>
    %418 = vector.extract_strided_slice %403 {offsets = [0, 96], sizes = [8, 32], strides = [1, 1]} : vector<8x128xf32> to vector<8x32xf32>
    %419 = math.tanh %418 : vector<8x32xf32>
    %420 = vector.extract_strided_slice %409 {offsets = [0, 32], sizes = [8, 32], strides = [1, 1]} : vector<8x96xf32> to vector<8x32xf32>
    %421 = arith.mulf %420, %394 : vector<8x32xf32>
    %422 = vector.extract_strided_slice %409 {offsets = [0, 0], sizes = [8, 32], strides = [1, 1]} : vector<8x96xf32> to vector<8x32xf32>
    %423 = arith.mulf %422, %411 : vector<8x32xf32>
    %424 = arith.addf %421, %423 : vector<8x32xf32>
    %425 = vector.extract_strided_slice %417 {offsets = [0, 32], sizes = [8, 32], strides = [1, 1]} : vector<8x96xf32> to vector<8x32xf32>
    %426 = arith.mulf %425, %395 : vector<8x32xf32>
    %427 = vector.extract_strided_slice %417 {offsets = [0, 0], sizes = [8, 32], strides = [1, 1]} : vector<8x96xf32> to vector<8x32xf32>
    %428 = arith.mulf %427, %419 : vector<8x32xf32>
    %429 = arith.addf %426, %428 : vector<8x32xf32>
    %430 = vector.extract_strided_slice %409 {offsets = [0, 64], sizes = [8, 32], strides = [1, 1]} : vector<8x96xf32> to vector<8x32xf32>
    %431 = math.tanh %424 : vector<8x32xf32>
    %432 = arith.mulf %430, %431 : vector<8x32xf32>
    %433 = vector.extract_strided_slice %417 {offsets = [0, 64], sizes = [8, 32], strides = [1, 1]} : vector<8x96xf32> to vector<8x32xf32>
    %434 = math.tanh %429 : vector<8x32xf32>
    %435 = arith.mulf %433, %434 : vector<8x32xf32>
    %cst_115 = arith.constant 0.000000e+00 : f32
    %436 = vector.broadcast %cst_115 : f32 to vector<8x32xf32>
    %437 = arith.select %32, %432, %436 : vector<8x32xi1>, vector<8x32xf32>
    %c56_116 = arith.constant 56 : index
    %c0_117 = arith.constant 0 : index
    %438 = vector.load %arg14[%c56_116, %c0_117] : memref<64x64xf32, #tpu.memory_space<vmem>>, vector<8x32xf32>
    tpu.vector_store %arg14[%c56_116, %c0_117], %437 {strides = array<i32>} : memref<64x64xf32, #tpu.memory_space<vmem>>, vector<8x32xf32>,
    %cst_118 = arith.constant 0.000000e+00 : f32
    %439 = vector.broadcast %cst_118 : f32 to vector<8x32xf32>
    %440 = arith.select %4, %435, %439 : vector<8x32xi1>, vector<8x32xf32>
    %c0_119 = arith.constant 0 : index
    %c32_120 = arith.constant 32 : index
    %441 = vector.load %arg14[%c0_119, %c32_120] : memref<64x64xf32, #tpu.memory_space<vmem>>, vector<8x32xf32>
    tpu.vector_store %arg14[%c0_119, %c32_120], %440 {strides = array<i32>} : memref<64x64xf32, #tpu.memory_space<vmem>>, vector<8x32xf32>,
    %c0_121 = arith.constant 0 : index
    %c0_122 = arith.constant 0 : index
    %442 = vector.load %arg14[%c0_121, %c0_122] : memref<64x64xf32, #tpu.memory_space<vmem>>, vector<64x64xf32>
    %443 = arith.truncf %442 : vector<64x64xf32> to vector<64x64xbf16>
    %c0_123 = arith.constant 0 : index
    %c0_124 = arith.constant 0 : index
    %444 = vector.load %arg6[%c0_123, %c0_124] : memref<64x256xbf16, #tpu.memory_space<vmem>>, vector<64x256xbf16>
    %cst_125 = arith.constant dense<0.000000e+00> : vector<64x256xf32>
    %445 = tpu.matmul %443, %444, %cst_125 {dimension_numbers = #tpu.dot_dimension_numbers<[1], [0], [0], [1], [0, 0, 1, 1], [], []>} : vector<64x64xbf16>, vector<64x256xbf16>, vector<64x256xf32> -> vector<64x256xf32>
    %c0_126 = arith.constant 0 : index
    %c0_127 = arith.constant 0 : index
    %446 = vector.load %arg9[%c0_126, %c0_127] : memref<1x256xf32, #tpu.memory_space<vmem>>, vector<1x256xf32>
    %447 = vector.broadcast %446 : vector<1x256xf32> to vector<64x256xf32>
    %448 = arith.addf %445, %447 : vector<64x256xf32>
    %c0_128 = arith.constant 0 : index
    %c0_129 = arith.constant 0 : index
    %449 = vector.load %arg13[%c0_128, %c0_129] : memref<64x256xf32, #tpu.memory_space<vmem>>, vector<64x256xf32>
    tpu.vector_store %arg13[%c0_128, %c0_129], %448 {strides = array<i32>} : memref<64x256xf32, #tpu.memory_space<vmem>>, vector<64x256xf32>,
    %c0_130 = arith.constant 0 : index
    %c0_131 = arith.constant 0 : index
    %450 = vector.load %arg7[%c0_130, %c0_131] : memref<32x128xbf16, #tpu.memory_space<vmem>>, vector<32x128xbf16>
    %c0_132 = arith.constant 0 : index
    %c0_133 = arith.constant 0 : index
    %451 = vector.load %arg8[%c0_132, %c0_133] : memref<32x128xbf16, #tpu.memory_space<vmem>>, vector<32x128xbf16>
    %cst_134 = arith.constant 0.000000e+00 : f32
    %452 = vector.broadcast %cst_134 : f32 to vector<8x32xf32>
    %cst_135 = arith.constant 0.000000e+00 : f32
    %453 = vector.broadcast %cst_135 : f32 to vector<8x32xf32>
    %cst_136 = arith.constant 0.000000e+00 : f32
    %454 = vector.broadcast %cst_136 : f32 to vector<8x32xf32>
    %cst_137 = arith.constant 0.000000e+00 : f32
    %455 = vector.broadcast %cst_137 : f32 to vector<8x32xf32>
    %456 = arith.truncf %452 : vector<8x32xf32> to vector<8x32xbf16>
    %cst_138 = arith.constant dense<0.000000e+00> : vector<8x128xf32>
    %457 = tpu.matmul %456, %450, %cst_138 {dimension_numbers = #tpu.dot_dimension_numbers<[1], [0], [0], [1], [0, 0, 1, 1], [], []>} : vector<8x32xbf16>, vector<32x128xbf16>, vector<8x128xf32> -> vector<8x128xf32>
    %458 = arith.truncf %453 : vector<8x32xf32> to vector<8x32xbf16>
    %cst_139 = arith.constant dense<0.000000e+00> : vector<8x128xf32>
    %459 = tpu.matmul %458, %451, %cst_139 {dimension_numbers = #tpu.dot_dimension_numbers<[1], [0], [0], [1], [0, 0, 1, 1], [], []>} : vector<8x32xbf16>, vector<32x128xbf16>, vector<8x128xf32> -> vector<8x128xf32>
    %c0_140 = arith.constant 0 : index
    %c0_141 = arith.constant 0 : index
    %460 = vector.load %arg13[%c0_140, %c0_141] : memref<64x256xf32, #tpu.memory_space<vmem>>, vector<8x128xf32>
    %461 = arith.addf %460, %457 : vector<8x128xf32>
    %c56_142 = arith.constant 56 : index
    %c128_143 = arith.constant 128 : index
    %462 = vector.load %arg13[%c56_142, %c128_143] : memref<64x256xf32, #tpu.memory_space<vmem>>, vector<8x128xf32>
    %463 = arith.addf %462, %459 : vector<8x128xf32>
    %464 = vector.extract_strided_slice %461 {offsets = [0, 0], sizes = [8, 96], strides = [1, 1]} : vector<8x128xf32> to vector<8x96xf32>
    %465 = arith.negf %464 : vector<8x96xf32>
    %466 = math.exp %465 : vector<8x96xf32>
    %cst_144 = arith.constant 1.000000e+00 : f32
    %467 = vector.broadcast %cst_144 : f32 to vector<8x96xf32>
    %468 = arith.addf %467, %466 : vector<8x96xf32>
    %469 = arith.divf %467, %468 : vector<8x96xf32>
    %470 = vector.extract_strided_slice %461 {offsets = [0, 96], sizes = [8, 32], strides = [1, 1]} : vector<8x128xf32> to vector<8x32xf32>
    %471 = math.tanh %470 : vector<8x32xf32>
    %472 = vector.extract_strided_slice %463 {offsets = [0, 0], sizes = [8, 96], strides = [1, 1]} : vector<8x128xf32> to vector<8x96xf32>
    %473 = arith.negf %472 : vector<8x96xf32>
    %474 = math.exp %473 : vector<8x96xf32>
    %cst_145 = arith.constant 1.000000e+00 : f32
    %475 = vector.broadcast %cst_145 : f32 to vector<8x96xf32>
    %476 = arith.addf %475, %474 : vector<8x96xf32>
    %477 = arith.divf %475, %476 : vector<8x96xf32>
    %478 = vector.extract_strided_slice %463 {offsets = [0, 96], sizes = [8, 32], strides = [1, 1]} : vector<8x128xf32> to vector<8x32xf32>
    %479 = math.tanh %478 : vector<8x32xf32>
    %480 = vector.extract_strided_slice %469 {offsets = [0, 32], sizes = [8, 32], strides = [1, 1]} : vector<8x96xf32> to vector<8x32xf32>
    %481 = arith.mulf %480, %454 : vector<8x32xf32>
    %482 = vector.extract_strided_slice %469 {offsets = [0, 0], sizes = [8, 32], strides = [1, 1]} : vector<8x96xf32> to vector<8x32xf32>
    %483 = arith.mulf %482, %471 : vector<8x32xf32>
    %484 = arith.addf %481, %483 : vector<8x32xf32>
    %485 = vector.extract_strided_slice %477 {offsets = [0, 32], sizes = [8, 32], strides = [1, 1]} : vector<8x96xf32> to vector<8x32xf32>
    %486 = arith.mulf %485, %455 : vector<8x32xf32>
    %487 = vector.extract_strided_slice %477 {offsets = [0, 0], sizes = [8, 32], strides = [1, 1]} : vector<8x96xf32> to vector<8x32xf32>
    %488 = arith.mulf %487, %479 : vector<8x32xf32>
    %489 = arith.addf %486, %488 : vector<8x32xf32>
    %490 = vector.extract_strided_slice %469 {offsets = [0, 64], sizes = [8, 32], strides = [1, 1]} : vector<8x96xf32> to vector<8x32xf32>
    %491 = math.tanh %484 : vector<8x32xf32>
    %492 = arith.mulf %490, %491 : vector<8x32xf32>
    %493 = vector.extract_strided_slice %477 {offsets = [0, 64], sizes = [8, 32], strides = [1, 1]} : vector<8x96xf32> to vector<8x32xf32>
    %494 = math.tanh %489 : vector<8x32xf32>
    %495 = arith.mulf %493, %494 : vector<8x32xf32>
    %cst_146 = arith.constant 0.000000e+00 : f32
    %496 = vector.broadcast %cst_146 : f32 to vector<8x32xf32>
    %497 = arith.select %4, %492, %496 : vector<8x32xi1>, vector<8x32xf32>
    %c0_147 = arith.constant 0 : index
    %c0_148 = arith.constant 0 : index
    %498 = vector.load %arg15[%c0_147, %c0_148] : memref<64x64xf32, #tpu.memory_space<vmem>>, vector<8x32xf32>
    tpu.vector_store %arg15[%c0_147, %c0_148], %497 {strides = array<i32>} : memref<64x64xf32, #tpu.memory_space<vmem>>, vector<8x32xf32>,
    %cst_149 = arith.constant 0.000000e+00 : f32
    %499 = vector.broadcast %cst_149 : f32 to vector<8x32xf32>
    %500 = arith.select %32, %495, %499 : vector<8x32xi1>, vector<8x32xf32>
    %c56_150 = arith.constant 56 : index
    %c32_151 = arith.constant 32 : index
    %501 = vector.load %arg15[%c56_150, %c32_151] : memref<64x64xf32, #tpu.memory_space<vmem>>, vector<8x32xf32>
    tpu.vector_store %arg15[%c56_150, %c32_151], %500 {strides = array<i32>} : memref<64x64xf32, #tpu.memory_space<vmem>>, vector<8x32xf32>,
    %502 = arith.select %4, %492, %452 : vector<8x32xi1>, vector<8x32xf32>
    %503 = arith.select %32, %495, %453 : vector<8x32xi1>, vector<8x32xf32>
    %504 = arith.select %4, %484, %454 : vector<8x32xi1>, vector<8x32xf32>
    %505 = arith.select %32, %489, %455 : vector<8x32xi1>, vector<8x32xf32>
    %506 = arith.truncf %502 : vector<8x32xf32> to vector<8x32xbf16>
    %cst_152 = arith.constant dense<0.000000e+00> : vector<8x128xf32>
    %507 = tpu.matmul %506, %450, %cst_152 {dimension_numbers = #tpu.dot_dimension_numbers<[1], [0], [0], [1], [0, 0, 1, 1], [], []>} : vector<8x32xbf16>, vector<32x128xbf16>, vector<8x128xf32> -> vector<8x128xf32>
    %508 = arith.truncf %503 : vector<8x32xf32> to vector<8x32xbf16>
    %cst_153 = arith.constant dense<0.000000e+00> : vector<8x128xf32>
    %509 = tpu.matmul %508, %451, %cst_153 {dimension_numbers = #tpu.dot_dimension_numbers<[1], [0], [0], [1], [0, 0, 1, 1], [], []>} : vector<8x32xbf16>, vector<32x128xbf16>, vector<8x128xf32> -> vector<8x128xf32>
    %c8_154 = arith.constant 8 : index
    %c0_155 = arith.constant 0 : index
    %510 = vector.load %arg13[%c8_154, %c0_155] : memref<64x256xf32, #tpu.memory_space<vmem>>, vector<8x128xf32>
    %511 = arith.addf %510, %507 : vector<8x128xf32>
    %c48_156 = arith.constant 48 : index
    %c128_157 = arith.constant 128 : index
    %512 = vector.load %arg13[%c48_156, %c128_157] : memref<64x256xf32, #tpu.memory_space<vmem>>, vector<8x128xf32>
    %513 = arith.addf %512, %509 : vector<8x128xf32>
    %514 = vector.extract_strided_slice %511 {offsets = [0, 0], sizes = [8, 96], strides = [1, 1]} : vector<8x128xf32> to vector<8x96xf32>
    %515 = arith.negf %514 : vector<8x96xf32>
    %516 = math.exp %515 : vector<8x96xf32>
    %cst_158 = arith.constant 1.000000e+00 : f32
    %517 = vector.broadcast %cst_158 : f32 to vector<8x96xf32>
    %518 = arith.addf %517, %516 : vector<8x96xf32>
    %519 = arith.divf %517, %518 : vector<8x96xf32>
    %520 = vector.extract_strided_slice %511 {offsets = [0, 96], sizes = [8, 32], strides = [1, 1]} : vector<8x128xf32> to vector<8x32xf32>
    %521 = math.tanh %520 : vector<8x32xf32>
    %522 = vector.extract_strided_slice %513 {offsets = [0, 0], sizes = [8, 96], strides = [1, 1]} : vector<8x128xf32> to vector<8x96xf32>
    %523 = arith.negf %522 : vector<8x96xf32>
    %524 = math.exp %523 : vector<8x96xf32>
    %cst_159 = arith.constant 1.000000e+00 : f32
    %525 = vector.broadcast %cst_159 : f32 to vector<8x96xf32>
    %526 = arith.addf %525, %524 : vector<8x96xf32>
    %527 = arith.divf %525, %526 : vector<8x96xf32>
    %528 = vector.extract_strided_slice %513 {offsets = [0, 96], sizes = [8, 32], strides = [1, 1]} : vector<8x128xf32> to vector<8x32xf32>
    %529 = math.tanh %528 : vector<8x32xf32>
    %530 = vector.extract_strided_slice %519 {offsets = [0, 32], sizes = [8, 32], strides = [1, 1]} : vector<8x96xf32> to vector<8x32xf32>
    %531 = arith.mulf %530, %504 : vector<8x32xf32>
    %532 = vector.extract_strided_slice %519 {offsets = [0, 0], sizes = [8, 32], strides = [1, 1]} : vector<8x96xf32> to vector<8x32xf32>
    %533 = arith.mulf %532, %521 : vector<8x32xf32>
    %534 = arith.addf %531, %533 : vector<8x32xf32>
    %535 = vector.extract_strided_slice %527 {offsets = [0, 32], sizes = [8, 32], strides = [1, 1]} : vector<8x96xf32> to vector<8x32xf32>
    %536 = arith.mulf %535, %505 : vector<8x32xf32>
    %537 = vector.extract_strided_slice %527 {offsets = [0, 0], sizes = [8, 32], strides = [1, 1]} : vector<8x96xf32> to vector<8x32xf32>
    %538 = arith.mulf %537, %529 : vector<8x32xf32>
    %539 = arith.addf %536, %538 : vector<8x32xf32>
    %540 = vector.extract_strided_slice %519 {offsets = [0, 64], sizes = [8, 32], strides = [1, 1]} : vector<8x96xf32> to vector<8x32xf32>
    %541 = math.tanh %534 : vector<8x32xf32>
    %542 = arith.mulf %540, %541 : vector<8x32xf32>
    %543 = vector.extract_strided_slice %527 {offsets = [0, 64], sizes = [8, 32], strides = [1, 1]} : vector<8x96xf32> to vector<8x32xf32>
    %544 = math.tanh %539 : vector<8x32xf32>
    %545 = arith.mulf %543, %544 : vector<8x32xf32>
    %cst_160 = arith.constant 0.000000e+00 : f32
    %546 = vector.broadcast %cst_160 : f32 to vector<8x32xf32>
    %547 = arith.select %8, %542, %546 : vector<8x32xi1>, vector<8x32xf32>
    %c8_161 = arith.constant 8 : index
    %c0_162 = arith.constant 0 : index
    %548 = vector.load %arg15[%c8_161, %c0_162] : memref<64x64xf32, #tpu.memory_space<vmem>>, vector<8x32xf32>
    tpu.vector_store %arg15[%c8_161, %c0_162], %547 {strides = array<i32>} : memref<64x64xf32, #tpu.memory_space<vmem>>, vector<8x32xf32>,
    %cst_163 = arith.constant 0.000000e+00 : f32
    %549 = vector.broadcast %cst_163 : f32 to vector<8x32xf32>
    %550 = arith.select %28, %545, %549 : vector<8x32xi1>, vector<8x32xf32>
    %c48_164 = arith.constant 48 : index
    %c32_165 = arith.constant 32 : index
    %551 = vector.load %arg15[%c48_164, %c32_165] : memref<64x64xf32, #tpu.memory_space<vmem>>, vector<8x32xf32>
    tpu.vector_store %arg15[%c48_164, %c32_165], %550 {strides = array<i32>} : memref<64x64xf32, #tpu.memory_space<vmem>>, vector<8x32xf32>,
    %552 = arith.select %8, %542, %502 : vector<8x32xi1>, vector<8x32xf32>
    %553 = arith.select %28, %545, %503 : vector<8x32xi1>, vector<8x32xf32>
    %554 = arith.select %8, %534, %504 : vector<8x32xi1>, vector<8x32xf32>
    %555 = arith.select %28, %539, %505 : vector<8x32xi1>, vector<8x32xf32>
    %556 = arith.truncf %552 : vector<8x32xf32> to vector<8x32xbf16>
    %cst_166 = arith.constant dense<0.000000e+00> : vector<8x128xf32>
    %557 = tpu.matmul %556, %450, %cst_166 {dimension_numbers = #tpu.dot_dimension_numbers<[1], [0], [0], [1], [0, 0, 1, 1], [], []>} : vector<8x32xbf16>, vector<32x128xbf16>, vector<8x128xf32> -> vector<8x128xf32>
    %558 = arith.truncf %553 : vector<8x32xf32> to vector<8x32xbf16>
    %cst_167 = arith.constant dense<0.000000e+00> : vector<8x128xf32>
    %559 = tpu.matmul %558, %451, %cst_167 {dimension_numbers = #tpu.dot_dimension_numbers<[1], [0], [0], [1], [0, 0, 1, 1], [], []>} : vector<8x32xbf16>, vector<32x128xbf16>, vector<8x128xf32> -> vector<8x128xf32>
    %c16_168 = arith.constant 16 : index
    %c0_169 = arith.constant 0 : index
    %560 = vector.load %arg13[%c16_168, %c0_169] : memref<64x256xf32, #tpu.memory_space<vmem>>, vector<8x128xf32>
    %561 = arith.addf %560, %557 : vector<8x128xf32>
    %c40_170 = arith.constant 40 : index
    %c128_171 = arith.constant 128 : index
    %562 = vector.load %arg13[%c40_170, %c128_171] : memref<64x256xf32, #tpu.memory_space<vmem>>, vector<8x128xf32>
    %563 = arith.addf %562, %559 : vector<8x128xf32>
    %564 = vector.extract_strided_slice %561 {offsets = [0, 0], sizes = [8, 96], strides = [1, 1]} : vector<8x128xf32> to vector<8x96xf32>
    %565 = arith.negf %564 : vector<8x96xf32>
    %566 = math.exp %565 : vector<8x96xf32>
    %cst_172 = arith.constant 1.000000e+00 : f32
    %567 = vector.broadcast %cst_172 : f32 to vector<8x96xf32>
    %568 = arith.addf %567, %566 : vector<8x96xf32>
    %569 = arith.divf %567, %568 : vector<8x96xf32>
    %570 = vector.extract_strided_slice %561 {offsets = [0, 96], sizes = [8, 32], strides = [1, 1]} : vector<8x128xf32> to vector<8x32xf32>
    %571 = math.tanh %570 : vector<8x32xf32>
    %572 = vector.extract_strided_slice %563 {offsets = [0, 0], sizes = [8, 96], strides = [1, 1]} : vector<8x128xf32> to vector<8x96xf32>
    %573 = arith.negf %572 : vector<8x96xf32>
    %574 = math.exp %573 : vector<8x96xf32>
    %cst_173 = arith.constant 1.000000e+00 : f32
    %575 = vector.broadcast %cst_173 : f32 to vector<8x96xf32>
    %576 = arith.addf %575, %574 : vector<8x96xf32>
    %577 = arith.divf %575, %576 : vector<8x96xf32>
    %578 = vector.extract_strided_slice %563 {offsets = [0, 96], sizes = [8, 32], strides = [1, 1]} : vector<8x128xf32> to vector<8x32xf32>
    %579 = math.tanh %578 : vector<8x32xf32>
    %580 = vector.extract_strided_slice %569 {offsets = [0, 32], sizes = [8, 32], strides = [1, 1]} : vector<8x96xf32> to vector<8x32xf32>
    %581 = arith.mulf %580, %554 : vector<8x32xf32>
    %582 = vector.extract_strided_slice %569 {offsets = [0, 0], sizes = [8, 32], strides = [1, 1]} : vector<8x96xf32> to vector<8x32xf32>
    %583 = arith.mulf %582, %571 : vector<8x32xf32>
    %584 = arith.addf %581, %583 : vector<8x32xf32>
    %585 = vector.extract_strided_slice %577 {offsets = [0, 32], sizes = [8, 32], strides = [1, 1]} : vector<8x96xf32> to vector<8x32xf32>
    %586 = arith.mulf %585, %555 : vector<8x32xf32>
    %587 = vector.extract_strided_slice %577 {offsets = [0, 0], sizes = [8, 32], strides = [1, 1]} : vector<8x96xf32> to vector<8x32xf32>
    %588 = arith.mulf %587, %579 : vector<8x32xf32>
    %589 = arith.addf %586, %588 : vector<8x32xf32>
    %590 = vector.extract_strided_slice %569 {offsets = [0, 64], sizes = [8, 32], strides = [1, 1]} : vector<8x96xf32> to vector<8x32xf32>
    %591 = math.tanh %584 : vector<8x32xf32>
    %592 = arith.mulf %590, %591 : vector<8x32xf32>
    %593 = vector.extract_strided_slice %577 {offsets = [0, 64], sizes = [8, 32], strides = [1, 1]} : vector<8x96xf32> to vector<8x32xf32>
    %594 = math.tanh %589 : vector<8x32xf32>
    %595 = arith.mulf %593, %594 : vector<8x32xf32>
    %cst_174 = arith.constant 0.000000e+00 : f32
    %596 = vector.broadcast %cst_174 : f32 to vector<8x32xf32>
    %597 = arith.select %12, %592, %596 : vector<8x32xi1>, vector<8x32xf32>
    %c16_175 = arith.constant 16 : index
    %c0_176 = arith.constant 0 : index
    %598 = vector.load %arg15[%c16_175, %c0_176] : memref<64x64xf32, #tpu.memory_space<vmem>>, vector<8x32xf32>
    tpu.vector_store %arg15[%c16_175, %c0_176], %597 {strides = array<i32>} : memref<64x64xf32, #tpu.memory_space<vmem>>, vector<8x32xf32>,
    %cst_177 = arith.constant 0.000000e+00 : f32
    %599 = vector.broadcast %cst_177 : f32 to vector<8x32xf32>
    %600 = arith.select %24, %595, %599 : vector<8x32xi1>, vector<8x32xf32>
    %c40_178 = arith.constant 40 : index
    %c32_179 = arith.constant 32 : index
    %601 = vector.load %arg15[%c40_178, %c32_179] : memref<64x64xf32, #tpu.memory_space<vmem>>, vector<8x32xf32>
    tpu.vector_store %arg15[%c40_178, %c32_179], %600 {strides = array<i32>} : memref<64x64xf32, #tpu.memory_space<vmem>>, vector<8x32xf32>,
    %602 = arith.select %12, %592, %552 : vector<8x32xi1>, vector<8x32xf32>
    %603 = arith.select %24, %595, %553 : vector<8x32xi1>, vector<8x32xf32>
    %604 = arith.select %12, %584, %554 : vector<8x32xi1>, vector<8x32xf32>
    %605 = arith.select %24, %589, %555 : vector<8x32xi1>, vector<8x32xf32>
    %606 = arith.truncf %602 : vector<8x32xf32> to vector<8x32xbf16>
    %cst_180 = arith.constant dense<0.000000e+00> : vector<8x128xf32>
    %607 = tpu.matmul %606, %450, %cst_180 {dimension_numbers = #tpu.dot_dimension_numbers<[1], [0], [0], [1], [0, 0, 1, 1], [], []>} : vector<8x32xbf16>, vector<32x128xbf16>, vector<8x128xf32> -> vector<8x128xf32>
    %608 = arith.truncf %603 : vector<8x32xf32> to vector<8x32xbf16>
    %cst_181 = arith.constant dense<0.000000e+00> : vector<8x128xf32>
    %609 = tpu.matmul %608, %451, %cst_181 {dimension_numbers = #tpu.dot_dimension_numbers<[1], [0], [0], [1], [0, 0, 1, 1], [], []>} : vector<8x32xbf16>, vector<32x128xbf16>, vector<8x128xf32> -> vector<8x128xf32>
    %c24_182 = arith.constant 24 : index
    %c0_183 = arith.constant 0 : index
    %610 = vector.load %arg13[%c24_182, %c0_183] : memref<64x256xf32, #tpu.memory_space<vmem>>, vector<8x128xf32>
    %611 = arith.addf %610, %607 : vector<8x128xf32>
    %c32_184 = arith.constant 32 : index
    %c128_185 = arith.constant 128 : index
    %612 = vector.load %arg13[%c32_184, %c128_185] : memref<64x256xf32, #tpu.memory_space<vmem>>, vector<8x128xf32>
    %613 = arith.addf %612, %609 : vector<8x128xf32>
    %614 = vector.extract_strided_slice %611 {offsets = [0, 0], sizes = [8, 96], strides = [1, 1]} : vector<8x128xf32> to vector<8x96xf32>
    %615 = arith.negf %614 : vector<8x96xf32>
    %616 = math.exp %615 : vector<8x96xf32>
    %cst_186 = arith.constant 1.000000e+00 : f32
    %617 = vector.broadcast %cst_186 : f32 to vector<8x96xf32>
    %618 = arith.addf %617, %616 : vector<8x96xf32>
    %619 = arith.divf %617, %618 : vector<8x96xf32>
    %620 = vector.extract_strided_slice %611 {offsets = [0, 96], sizes = [8, 32], strides = [1, 1]} : vector<8x128xf32> to vector<8x32xf32>
    %621 = math.tanh %620 : vector<8x32xf32>
    %622 = vector.extract_strided_slice %613 {offsets = [0, 0], sizes = [8, 96], strides = [1, 1]} : vector<8x128xf32> to vector<8x96xf32>
    %623 = arith.negf %622 : vector<8x96xf32>
    %624 = math.exp %623 : vector<8x96xf32>
    %cst_187 = arith.constant 1.000000e+00 : f32
    %625 = vector.broadcast %cst_187 : f32 to vector<8x96xf32>
    %626 = arith.addf %625, %624 : vector<8x96xf32>
    %627 = arith.divf %625, %626 : vector<8x96xf32>
    %628 = vector.extract_strided_slice %613 {offsets = [0, 96], sizes = [8, 32], strides = [1, 1]} : vector<8x128xf32> to vector<8x32xf32>
    %629 = math.tanh %628 : vector<8x32xf32>
    %630 = vector.extract_strided_slice %619 {offsets = [0, 32], sizes = [8, 32], strides = [1, 1]} : vector<8x96xf32> to vector<8x32xf32>
    %631 = arith.mulf %630, %604 : vector<8x32xf32>
    %632 = vector.extract_strided_slice %619 {offsets = [0, 0], sizes = [8, 32], strides = [1, 1]} : vector<8x96xf32> to vector<8x32xf32>
    %633 = arith.mulf %632, %621 : vector<8x32xf32>
    %634 = arith.addf %631, %633 : vector<8x32xf32>
    %635 = vector.extract_strided_slice %627 {offsets = [0, 32], sizes = [8, 32], strides = [1, 1]} : vector<8x96xf32> to vector<8x32xf32>
    %636 = arith.mulf %635, %605 : vector<8x32xf32>
    %637 = vector.extract_strided_slice %627 {offsets = [0, 0], sizes = [8, 32], strides = [1, 1]} : vector<8x96xf32> to vector<8x32xf32>
    %638 = arith.mulf %637, %629 : vector<8x32xf32>
    %639 = arith.addf %636, %638 : vector<8x32xf32>
    %640 = vector.extract_strided_slice %619 {offsets = [0, 64], sizes = [8, 32], strides = [1, 1]} : vector<8x96xf32> to vector<8x32xf32>
    %641 = math.tanh %634 : vector<8x32xf32>
    %642 = arith.mulf %640, %641 : vector<8x32xf32>
    %643 = vector.extract_strided_slice %627 {offsets = [0, 64], sizes = [8, 32], strides = [1, 1]} : vector<8x96xf32> to vector<8x32xf32>
    %644 = math.tanh %639 : vector<8x32xf32>
    %645 = arith.mulf %643, %644 : vector<8x32xf32>
    %cst_188 = arith.constant 0.000000e+00 : f32
    %646 = vector.broadcast %cst_188 : f32 to vector<8x32xf32>
    %647 = arith.select %16, %642, %646 : vector<8x32xi1>, vector<8x32xf32>
    %c24_189 = arith.constant 24 : index
    %c0_190 = arith.constant 0 : index
    %648 = vector.load %arg15[%c24_189, %c0_190] : memref<64x64xf32, #tpu.memory_space<vmem>>, vector<8x32xf32>
    tpu.vector_store %arg15[%c24_189, %c0_190], %647 {strides = array<i32>} : memref<64x64xf32, #tpu.memory_space<vmem>>, vector<8x32xf32>,
    %cst_191 = arith.constant 0.000000e+00 : f32
    %649 = vector.broadcast %cst_191 : f32 to vector<8x32xf32>
    %650 = arith.select %20, %645, %649 : vector<8x32xi1>, vector<8x32xf32>
    %c32_192 = arith.constant 32 : index
    %c32_193 = arith.constant 32 : index
    %651 = vector.load %arg15[%c32_192, %c32_193] : memref<64x64xf32, #tpu.memory_space<vmem>>, vector<8x32xf32>
    tpu.vector_store %arg15[%c32_192, %c32_193], %650 {strides = array<i32>} : memref<64x64xf32, #tpu.memory_space<vmem>>, vector<8x32xf32>,
    %652 = arith.select %16, %642, %602 : vector<8x32xi1>, vector<8x32xf32>
    %653 = arith.select %20, %645, %603 : vector<8x32xi1>, vector<8x32xf32>
    %654 = arith.select %16, %634, %604 : vector<8x32xi1>, vector<8x32xf32>
    %655 = arith.select %20, %639, %605 : vector<8x32xi1>, vector<8x32xf32>
    %656 = arith.truncf %652 : vector<8x32xf32> to vector<8x32xbf16>
    %cst_194 = arith.constant dense<0.000000e+00> : vector<8x128xf32>
    %657 = tpu.matmul %656, %450, %cst_194 {dimension_numbers = #tpu.dot_dimension_numbers<[1], [0], [0], [1], [0, 0, 1, 1], [], []>} : vector<8x32xbf16>, vector<32x128xbf16>, vector<8x128xf32> -> vector<8x128xf32>
    %658 = arith.truncf %653 : vector<8x32xf32> to vector<8x32xbf16>
    %cst_195 = arith.constant dense<0.000000e+00> : vector<8x128xf32>
    %659 = tpu.matmul %658, %451, %cst_195 {dimension_numbers = #tpu.dot_dimension_numbers<[1], [0], [0], [1], [0, 0, 1, 1], [], []>} : vector<8x32xbf16>, vector<32x128xbf16>, vector<8x128xf32> -> vector<8x128xf32>
    %c32_196 = arith.constant 32 : index
    %c0_197 = arith.constant 0 : index
    %660 = vector.load %arg13[%c32_196, %c0_197] : memref<64x256xf32, #tpu.memory_space<vmem>>, vector<8x128xf32>
    %661 = arith.addf %660, %657 : vector<8x128xf32>
    %c24_198 = arith.constant 24 : index
    %c128_199 = arith.constant 128 : index
    %662 = vector.load %arg13[%c24_198, %c128_199] : memref<64x256xf32, #tpu.memory_space<vmem>>, vector<8x128xf32>
    %663 = arith.addf %662, %659 : vector<8x128xf32>
    %664 = vector.extract_strided_slice %661 {offsets = [0, 0], sizes = [8, 96], strides = [1, 1]} : vector<8x128xf32> to vector<8x96xf32>
    %665 = arith.negf %664 : vector<8x96xf32>
    %666 = math.exp %665 : vector<8x96xf32>
    %cst_200 = arith.constant 1.000000e+00 : f32
    %667 = vector.broadcast %cst_200 : f32 to vector<8x96xf32>
    %668 = arith.addf %667, %666 : vector<8x96xf32>
    %669 = arith.divf %667, %668 : vector<8x96xf32>
    %670 = vector.extract_strided_slice %661 {offsets = [0, 96], sizes = [8, 32], strides = [1, 1]} : vector<8x128xf32> to vector<8x32xf32>
    %671 = math.tanh %670 : vector<8x32xf32>
    %672 = vector.extract_strided_slice %663 {offsets = [0, 0], sizes = [8, 96], strides = [1, 1]} : vector<8x128xf32> to vector<8x96xf32>
    %673 = arith.negf %672 : vector<8x96xf32>
    %674 = math.exp %673 : vector<8x96xf32>
    %cst_201 = arith.constant 1.000000e+00 : f32
    %675 = vector.broadcast %cst_201 : f32 to vector<8x96xf32>
    %676 = arith.addf %675, %674 : vector<8x96xf32>
    %677 = arith.divf %675, %676 : vector<8x96xf32>
    %678 = vector.extract_strided_slice %663 {offsets = [0, 96], sizes = [8, 32], strides = [1, 1]} : vector<8x128xf32> to vector<8x32xf32>
    %679 = math.tanh %678 : vector<8x32xf32>
    %680 = vector.extract_strided_slice %669 {offsets = [0, 32], sizes = [8, 32], strides = [1, 1]} : vector<8x96xf32> to vector<8x32xf32>
    %681 = arith.mulf %680, %654 : vector<8x32xf32>
    %682 = vector.extract_strided_slice %669 {offsets = [0, 0], sizes = [8, 32], strides = [1, 1]} : vector<8x96xf32> to vector<8x32xf32>
    %683 = arith.mulf %682, %671 : vector<8x32xf32>
    %684 = arith.addf %681, %683 : vector<8x32xf32>
    %685 = vector.extract_strided_slice %677 {offsets = [0, 32], sizes = [8, 32], strides = [1, 1]} : vector<8x96xf32> to vector<8x32xf32>
    %686 = arith.mulf %685, %655 : vector<8x32xf32>
    %687 = vector.extract_strided_slice %677 {offsets = [0, 0], sizes = [8, 32], strides = [1, 1]} : vector<8x96xf32> to vector<8x32xf32>
    %688 = arith.mulf %687, %679 : vector<8x32xf32>
    %689 = arith.addf %686, %688 : vector<8x32xf32>
    %690 = vector.extract_strided_slice %669 {offsets = [0, 64], sizes = [8, 32], strides = [1, 1]} : vector<8x96xf32> to vector<8x32xf32>
    %691 = math.tanh %684 : vector<8x32xf32>
    %692 = arith.mulf %690, %691 : vector<8x32xf32>
    %693 = vector.extract_strided_slice %677 {offsets = [0, 64], sizes = [8, 32], strides = [1, 1]} : vector<8x96xf32> to vector<8x32xf32>
    %694 = math.tanh %689 : vector<8x32xf32>
    %695 = arith.mulf %693, %694 : vector<8x32xf32>
    %cst_202 = arith.constant 0.000000e+00 : f32
    %696 = vector.broadcast %cst_202 : f32 to vector<8x32xf32>
    %697 = arith.select %20, %692, %696 : vector<8x32xi1>, vector<8x32xf32>
    %c32_203 = arith.constant 32 : index
    %c0_204 = arith.constant 0 : index
    %698 = vector.load %arg15[%c32_203, %c0_204] : memref<64x64xf32, #tpu.memory_space<vmem>>, vector<8x32xf32>
    tpu.vector_store %arg15[%c32_203, %c0_204], %697 {strides = array<i32>} : memref<64x64xf32, #tpu.memory_space<vmem>>, vector<8x32xf32>,
    %cst_205 = arith.constant 0.000000e+00 : f32
    %699 = vector.broadcast %cst_205 : f32 to vector<8x32xf32>
    %700 = arith.select %16, %695, %699 : vector<8x32xi1>, vector<8x32xf32>
    %c24_206 = arith.constant 24 : index
    %c32_207 = arith.constant 32 : index
    %701 = vector.load %arg15[%c24_206, %c32_207] : memref<64x64xf32, #tpu.memory_space<vmem>>, vector<8x32xf32>
    tpu.vector_store %arg15[%c24_206, %c32_207], %700 {strides = array<i32>} : memref<64x64xf32, #tpu.memory_space<vmem>>, vector<8x32xf32>,
    %702 = arith.select %20, %692, %652 : vector<8x32xi1>, vector<8x32xf32>
    %703 = arith.select %16, %695, %653 : vector<8x32xi1>, vector<8x32xf32>
    %704 = arith.select %20, %684, %654 : vector<8x32xi1>, vector<8x32xf32>
    %705 = arith.select %16, %689, %655 : vector<8x32xi1>, vector<8x32xf32>
    %706 = arith.truncf %702 : vector<8x32xf32> to vector<8x32xbf16>
    %cst_208 = arith.constant dense<0.000000e+00> : vector<8x128xf32>
    %707 = tpu.matmul %706, %450, %cst_208 {dimension_numbers = #tpu.dot_dimension_numbers<[1], [0], [0], [1], [0, 0, 1, 1], [], []>} : vector<8x32xbf16>, vector<32x128xbf16>, vector<8x128xf32> -> vector<8x128xf32>
    %708 = arith.truncf %703 : vector<8x32xf32> to vector<8x32xbf16>
    %cst_209 = arith.constant dense<0.000000e+00> : vector<8x128xf32>
    %709 = tpu.matmul %708, %451, %cst_209 {dimension_numbers = #tpu.dot_dimension_numbers<[1], [0], [0], [1], [0, 0, 1, 1], [], []>} : vector<8x32xbf16>, vector<32x128xbf16>, vector<8x128xf32> -> vector<8x128xf32>
    %c40_210 = arith.constant 40 : index
    %c0_211 = arith.constant 0 : index
    %710 = vector.load %arg13[%c40_210, %c0_211] : memref<64x256xf32, #tpu.memory_space<vmem>>, vector<8x128xf32>
    %711 = arith.addf %710, %707 : vector<8x128xf32>
    %c16_212 = arith.constant 16 : index
    %c128_213 = arith.constant 128 : index
    %712 = vector.load %arg13[%c16_212, %c128_213] : memref<64x256xf32, #tpu.memory_space<vmem>>, vector<8x128xf32>
    %713 = arith.addf %712, %709 : vector<8x128xf32>
    %714 = vector.extract_strided_slice %711 {offsets = [0, 0], sizes = [8, 96], strides = [1, 1]} : vector<8x128xf32> to vector<8x96xf32>
    %715 = arith.negf %714 : vector<8x96xf32>
    %716 = math.exp %715 : vector<8x96xf32>
    %cst_214 = arith.constant 1.000000e+00 : f32
    %717 = vector.broadcast %cst_214 : f32 to vector<8x96xf32>
    %718 = arith.addf %717, %716 : vector<8x96xf32>
    %719 = arith.divf %717, %718 : vector<8x96xf32>
    %720 = vector.extract_strided_slice %711 {offsets = [0, 96], sizes = [8, 32], strides = [1, 1]} : vector<8x128xf32> to vector<8x32xf32>
    %721 = math.tanh %720 : vector<8x32xf32>
    %722 = vector.extract_strided_slice %713 {offsets = [0, 0], sizes = [8, 96], strides = [1, 1]} : vector<8x128xf32> to vector<8x96xf32>
    %723 = arith.negf %722 : vector<8x96xf32>
    %724 = math.exp %723 : vector<8x96xf32>
    %cst_215 = arith.constant 1.000000e+00 : f32
    %725 = vector.broadcast %cst_215 : f32 to vector<8x96xf32>
    %726 = arith.addf %725, %724 : vector<8x96xf32>
    %727 = arith.divf %725, %726 : vector<8x96xf32>
    %728 = vector.extract_strided_slice %713 {offsets = [0, 96], sizes = [8, 32], strides = [1, 1]} : vector<8x128xf32> to vector<8x32xf32>
    %729 = math.tanh %728 : vector<8x32xf32>
    %730 = vector.extract_strided_slice %719 {offsets = [0, 32], sizes = [8, 32], strides = [1, 1]} : vector<8x96xf32> to vector<8x32xf32>
    %731 = arith.mulf %730, %704 : vector<8x32xf32>
    %732 = vector.extract_strided_slice %719 {offsets = [0, 0], sizes = [8, 32], strides = [1, 1]} : vector<8x96xf32> to vector<8x32xf32>
    %733 = arith.mulf %732, %721 : vector<8x32xf32>
    %734 = arith.addf %731, %733 : vector<8x32xf32>
    %735 = vector.extract_strided_slice %727 {offsets = [0, 32], sizes = [8, 32], strides = [1, 1]} : vector<8x96xf32> to vector<8x32xf32>
    %736 = arith.mulf %735, %705 : vector<8x32xf32>
    %737 = vector.extract_strided_slice %727 {offsets = [0, 0], sizes = [8, 32], strides = [1, 1]} : vector<8x96xf32> to vector<8x32xf32>
    %738 = arith.mulf %737, %729 : vector<8x32xf32>
    %739 = arith.addf %736, %738 : vector<8x32xf32>
    %740 = vector.extract_strided_slice %719 {offsets = [0, 64], sizes = [8, 32], strides = [1, 1]} : vector<8x96xf32> to vector<8x32xf32>
    %741 = math.tanh %734 : vector<8x32xf32>
    %742 = arith.mulf %740, %741 : vector<8x32xf32>
    %743 = vector.extract_strided_slice %727 {offsets = [0, 64], sizes = [8, 32], strides = [1, 1]} : vector<8x96xf32> to vector<8x32xf32>
    %744 = math.tanh %739 : vector<8x32xf32>
    %745 = arith.mulf %743, %744 : vector<8x32xf32>
    %cst_216 = arith.constant 0.000000e+00 : f32
    %746 = vector.broadcast %cst_216 : f32 to vector<8x32xf32>
    %747 = arith.select %24, %742, %746 : vector<8x32xi1>, vector<8x32xf32>
    %c40_217 = arith.constant 40 : index
    %c0_218 = arith.constant 0 : index
    %748 = vector.load %arg15[%c40_217, %c0_218] : memref<64x64xf32, #tpu.memory_space<vmem>>, vector<8x32xf32>
    tpu.vector_store %arg15[%c40_217, %c0_218], %747 {strides = array<i32>} : memref<64x64xf32, #tpu.memory_space<vmem>>, vector<8x32xf32>,
    %cst_219 = arith.constant 0.000000e+00 : f32
    %749 = vector.broadcast %cst_219 : f32 to vector<8x32xf32>
    %750 = arith.select %12, %745, %749 : vector<8x32xi1>, vector<8x32xf32>
    %c16_220 = arith.constant 16 : index
    %c32_221 = arith.constant 32 : index
    %751 = vector.load %arg15[%c16_220, %c32_221] : memref<64x64xf32, #tpu.memory_space<vmem>>, vector<8x32xf32>
    tpu.vector_store %arg15[%c16_220, %c32_221], %750 {strides = array<i32>} : memref<64x64xf32, #tpu.memory_space<vmem>>, vector<8x32xf32>,
    %752 = arith.select %24, %742, %702 : vector<8x32xi1>, vector<8x32xf32>
    %753 = arith.select %12, %745, %703 : vector<8x32xi1>, vector<8x32xf32>
    %754 = arith.select %24, %734, %704 : vector<8x32xi1>, vector<8x32xf32>
    %755 = arith.select %12, %739, %705 : vector<8x32xi1>, vector<8x32xf32>
    %756 = arith.truncf %752 : vector<8x32xf32> to vector<8x32xbf16>
    %cst_222 = arith.constant dense<0.000000e+00> : vector<8x128xf32>
    %757 = tpu.matmul %756, %450, %cst_222 {dimension_numbers = #tpu.dot_dimension_numbers<[1], [0], [0], [1], [0, 0, 1, 1], [], []>} : vector<8x32xbf16>, vector<32x128xbf16>, vector<8x128xf32> -> vector<8x128xf32>
    %758 = arith.truncf %753 : vector<8x32xf32> to vector<8x32xbf16>
    %cst_223 = arith.constant dense<0.000000e+00> : vector<8x128xf32>
    %759 = tpu.matmul %758, %451, %cst_223 {dimension_numbers = #tpu.dot_dimension_numbers<[1], [0], [0], [1], [0, 0, 1, 1], [], []>} : vector<8x32xbf16>, vector<32x128xbf16>, vector<8x128xf32> -> vector<8x128xf32>
    %c48_224 = arith.constant 48 : index
    %c0_225 = arith.constant 0 : index
    %760 = vector.load %arg13[%c48_224, %c0_225] : memref<64x256xf32, #tpu.memory_space<vmem>>, vector<8x128xf32>
    %761 = arith.addf %760, %757 : vector<8x128xf32>
    %c8_226 = arith.constant 8 : index
    %c128_227 = arith.constant 128 : index
    %762 = vector.load %arg13[%c8_226, %c128_227] : memref<64x256xf32, #tpu.memory_space<vmem>>, vector<8x128xf32>
    %763 = arith.addf %762, %759 : vector<8x128xf32>
    %764 = vector.extract_strided_slice %761 {offsets = [0, 0], sizes = [8, 96], strides = [1, 1]} : vector<8x128xf32> to vector<8x96xf32>
    %765 = arith.negf %764 : vector<8x96xf32>
    %766 = math.exp %765 : vector<8x96xf32>
    %cst_228 = arith.constant 1.000000e+00 : f32
    %767 = vector.broadcast %cst_228 : f32 to vector<8x96xf32>
    %768 = arith.addf %767, %766 : vector<8x96xf32>
    %769 = arith.divf %767, %768 : vector<8x96xf32>
    %770 = vector.extract_strided_slice %761 {offsets = [0, 96], sizes = [8, 32], strides = [1, 1]} : vector<8x128xf32> to vector<8x32xf32>
    %771 = math.tanh %770 : vector<8x32xf32>
    %772 = vector.extract_strided_slice %763 {offsets = [0, 0], sizes = [8, 96], strides = [1, 1]} : vector<8x128xf32> to vector<8x96xf32>
    %773 = arith.negf %772 : vector<8x96xf32>
    %774 = math.exp %773 : vector<8x96xf32>
    %cst_229 = arith.constant 1.000000e+00 : f32
    %775 = vector.broadcast %cst_229 : f32 to vector<8x96xf32>
    %776 = arith.addf %775, %774 : vector<8x96xf32>
    %777 = arith.divf %775, %776 : vector<8x96xf32>
    %778 = vector.extract_strided_slice %763 {offsets = [0, 96], sizes = [8, 32], strides = [1, 1]} : vector<8x128xf32> to vector<8x32xf32>
    %779 = math.tanh %778 : vector<8x32xf32>
    %780 = vector.extract_strided_slice %769 {offsets = [0, 32], sizes = [8, 32], strides = [1, 1]} : vector<8x96xf32> to vector<8x32xf32>
    %781 = arith.mulf %780, %754 : vector<8x32xf32>
    %782 = vector.extract_strided_slice %769 {offsets = [0, 0], sizes = [8, 32], strides = [1, 1]} : vector<8x96xf32> to vector<8x32xf32>
    %783 = arith.mulf %782, %771 : vector<8x32xf32>
    %784 = arith.addf %781, %783 : vector<8x32xf32>
    %785 = vector.extract_strided_slice %777 {offsets = [0, 32], sizes = [8, 32], strides = [1, 1]} : vector<8x96xf32> to vector<8x32xf32>
    %786 = arith.mulf %785, %755 : vector<8x32xf32>
    %787 = vector.extract_strided_slice %777 {offsets = [0, 0], sizes = [8, 32], strides = [1, 1]} : vector<8x96xf32> to vector<8x32xf32>
    %788 = arith.mulf %787, %779 : vector<8x32xf32>
    %789 = arith.addf %786, %788 : vector<8x32xf32>
    %790 = vector.extract_strided_slice %769 {offsets = [0, 64], sizes = [8, 32], strides = [1, 1]} : vector<8x96xf32> to vector<8x32xf32>
    %791 = math.tanh %784 : vector<8x32xf32>
    %792 = arith.mulf %790, %791 : vector<8x32xf32>
    %793 = vector.extract_strided_slice %777 {offsets = [0, 64], sizes = [8, 32], strides = [1, 1]} : vector<8x96xf32> to vector<8x32xf32>
    %794 = math.tanh %789 : vector<8x32xf32>
    %795 = arith.mulf %793, %794 : vector<8x32xf32>
    %cst_230 = arith.constant 0.000000e+00 : f32
    %796 = vector.broadcast %cst_230 : f32 to vector<8x32xf32>
    %797 = arith.select %28, %792, %796 : vector<8x32xi1>, vector<8x32xf32>
    %c48_231 = arith.constant 48 : index
    %c0_232 = arith.constant 0 : index
    %798 = vector.load %arg15[%c48_231, %c0_232] : memref<64x64xf32, #tpu.memory_space<vmem>>, vector<8x32xf32>
    tpu.vector_store %arg15[%c48_231, %c0_232], %797 {strides = array<i32>} : memref<64x64xf32, #tpu.memory_space<vmem>>, vector<8x32xf32>,
    %cst_233 = arith.constant 0.000000e+00 : f32
    %799 = vector.broadcast %cst_233 : f32 to vector<8x32xf32>
    %800 = arith.select %8, %795, %799 : vector<8x32xi1>, vector<8x32xf32>
    %c8_234 = arith.constant 8 : index
    %c32_235 = arith.constant 32 : index
    %801 = vector.load %arg15[%c8_234, %c32_235] : memref<64x64xf32, #tpu.memory_space<vmem>>, vector<8x32xf32>
    tpu.vector_store %arg15[%c8_234, %c32_235], %800 {strides = array<i32>} : memref<64x64xf32, #tpu.memory_space<vmem>>, vector<8x32xf32>,
    %802 = arith.select %28, %792, %752 : vector<8x32xi1>, vector<8x32xf32>
    %803 = arith.select %8, %795, %753 : vector<8x32xi1>, vector<8x32xf32>
    %804 = arith.select %28, %784, %754 : vector<8x32xi1>, vector<8x32xf32>
    %805 = arith.select %8, %789, %755 : vector<8x32xi1>, vector<8x32xf32>
    %806 = arith.truncf %802 : vector<8x32xf32> to vector<8x32xbf16>
    %cst_236 = arith.constant dense<0.000000e+00> : vector<8x128xf32>
    %807 = tpu.matmul %806, %450, %cst_236 {dimension_numbers = #tpu.dot_dimension_numbers<[1], [0], [0], [1], [0, 0, 1, 1], [], []>} : vector<8x32xbf16>, vector<32x128xbf16>, vector<8x128xf32> -> vector<8x128xf32>
    %808 = arith.truncf %803 : vector<8x32xf32> to vector<8x32xbf16>
    %cst_237 = arith.constant dense<0.000000e+00> : vector<8x128xf32>
    %809 = tpu.matmul %808, %451, %cst_237 {dimension_numbers = #tpu.dot_dimension_numbers<[1], [0], [0], [1], [0, 0, 1, 1], [], []>} : vector<8x32xbf16>, vector<32x128xbf16>, vector<8x128xf32> -> vector<8x128xf32>
    %c56_238 = arith.constant 56 : index
    %c0_239 = arith.constant 0 : index
    %810 = vector.load %arg13[%c56_238, %c0_239] : memref<64x256xf32, #tpu.memory_space<vmem>>, vector<8x128xf32>
    %811 = arith.addf %810, %807 : vector<8x128xf32>
    %c0_240 = arith.constant 0 : index
    %c128_241 = arith.constant 128 : index
    %812 = vector.load %arg13[%c0_240, %c128_241] : memref<64x256xf32, #tpu.memory_space<vmem>>, vector<8x128xf32>
    %813 = arith.addf %812, %809 : vector<8x128xf32>
    %814 = vector.extract_strided_slice %811 {offsets = [0, 0], sizes = [8, 96], strides = [1, 1]} : vector<8x128xf32> to vector<8x96xf32>
    %815 = arith.negf %814 : vector<8x96xf32>
    %816 = math.exp %815 : vector<8x96xf32>
    %cst_242 = arith.constant 1.000000e+00 : f32
    %817 = vector.broadcast %cst_242 : f32 to vector<8x96xf32>
    %818 = arith.addf %817, %816 : vector<8x96xf32>
    %819 = arith.divf %817, %818 : vector<8x96xf32>
    %820 = vector.extract_strided_slice %811 {offsets = [0, 96], sizes = [8, 32], strides = [1, 1]} : vector<8x128xf32> to vector<8x32xf32>
    %821 = math.tanh %820 : vector<8x32xf32>
    %822 = vector.extract_strided_slice %813 {offsets = [0, 0], sizes = [8, 96], strides = [1, 1]} : vector<8x128xf32> to vector<8x96xf32>
    %823 = arith.negf %822 : vector<8x96xf32>
    %824 = math.exp %823 : vector<8x96xf32>
    %cst_243 = arith.constant 1.000000e+00 : f32
    %825 = vector.broadcast %cst_243 : f32 to vector<8x96xf32>
    %826 = arith.addf %825, %824 : vector<8x96xf32>
    %827 = arith.divf %825, %826 : vector<8x96xf32>
    %828 = vector.extract_strided_slice %813 {offsets = [0, 96], sizes = [8, 32], strides = [1, 1]} : vector<8x128xf32> to vector<8x32xf32>
    %829 = math.tanh %828 : vector<8x32xf32>
    %830 = vector.extract_strided_slice %819 {offsets = [0, 32], sizes = [8, 32], strides = [1, 1]} : vector<8x96xf32> to vector<8x32xf32>
    %831 = arith.mulf %830, %804 : vector<8x32xf32>
    %832 = vector.extract_strided_slice %819 {offsets = [0, 0], sizes = [8, 32], strides = [1, 1]} : vector<8x96xf32> to vector<8x32xf32>
    %833 = arith.mulf %832, %821 : vector<8x32xf32>
    %834 = arith.addf %831, %833 : vector<8x32xf32>
    %835 = vector.extract_strided_slice %827 {offsets = [0, 32], sizes = [8, 32], strides = [1, 1]} : vector<8x96xf32> to vector<8x32xf32>
    %836 = arith.mulf %835, %805 : vector<8x32xf32>
    %837 = vector.extract_strided_slice %827 {offsets = [0, 0], sizes = [8, 32], strides = [1, 1]} : vector<8x96xf32> to vector<8x32xf32>
    %838 = arith.mulf %837, %829 : vector<8x32xf32>
    %839 = arith.addf %836, %838 : vector<8x32xf32>
    %840 = vector.extract_strided_slice %819 {offsets = [0, 64], sizes = [8, 32], strides = [1, 1]} : vector<8x96xf32> to vector<8x32xf32>
    %841 = math.tanh %834 : vector<8x32xf32>
    %842 = arith.mulf %840, %841 : vector<8x32xf32>
    %843 = vector.extract_strided_slice %827 {offsets = [0, 64], sizes = [8, 32], strides = [1, 1]} : vector<8x96xf32> to vector<8x32xf32>
    %844 = math.tanh %839 : vector<8x32xf32>
    %845 = arith.mulf %843, %844 : vector<8x32xf32>
    %cst_244 = arith.constant 0.000000e+00 : f32
    %846 = vector.broadcast %cst_244 : f32 to vector<8x32xf32>
    %847 = arith.select %32, %842, %846 : vector<8x32xi1>, vector<8x32xf32>
    %c56_245 = arith.constant 56 : index
    %c0_246 = arith.constant 0 : index
    %848 = vector.load %arg15[%c56_245, %c0_246] : memref<64x64xf32, #tpu.memory_space<vmem>>, vector<8x32xf32>
    tpu.vector_store %arg15[%c56_245, %c0_246], %847 {strides = array<i32>} : memref<64x64xf32, #tpu.memory_space<vmem>>, vector<8x32xf32>,
    %cst_247 = arith.constant 0.000000e+00 : f32
    %849 = vector.broadcast %cst_247 : f32 to vector<8x32xf32>
    %850 = arith.select %4, %845, %849 : vector<8x32xi1>, vector<8x32xf32>
    %c0_248 = arith.constant 0 : index
    %c32_249 = arith.constant 32 : index
    %851 = vector.load %arg15[%c0_248, %c32_249] : memref<64x64xf32, #tpu.memory_space<vmem>>, vector<8x32xf32>
    tpu.vector_store %arg15[%c0_248, %c32_249], %850 {strides = array<i32>} : memref<64x64xf32, #tpu.memory_space<vmem>>, vector<8x32xf32>,
    %c0_250 = arith.constant 0 : index
    %c0_251 = arith.constant 0 : index
    %852 = vector.load %arg15[%c0_250, %c0_251] : memref<64x64xf32, #tpu.memory_space<vmem>>, vector<64x64xf32>
    %853 = arith.truncf %852 : vector<64x64xf32> to vector<64x64xbf16>
    %c0_252 = arith.constant 0 : index
    %c0_253 = arith.constant 0 : index
    %854 = vector.load %arg10[%c0_252, %c0_253] : memref<64x128xbf16, #tpu.memory_space<vmem>>, vector<64x128xbf16>
    %cst_254 = arith.constant dense<0.000000e+00> : vector<64x128xf32>
    %855 = tpu.matmul %853, %854, %cst_254 {dimension_numbers = #tpu.dot_dimension_numbers<[1], [0], [0], [1], [0, 0, 1, 1], [], []>} : vector<64x64xbf16>, vector<64x128xbf16>, vector<64x128xf32> -> vector<64x128xf32>
    %c0_255 = arith.constant 0 : index
    %c0_256 = arith.constant 0 : index
    %856 = vector.load %arg11[%c0_255, %c0_256] : memref<1x128xf32, #tpu.memory_space<vmem>>, vector<1x128xf32>
    %857 = vector.broadcast %856 : vector<1x128xf32> to vector<64x128xf32>
    %858 = arith.addf %855, %857 : vector<64x128xf32>
    %cst_257 = arith.constant dense<0xFF800000> : vector<64xf32>
    %859 = vector.multi_reduction <maximumf>, %858, %cst_257 [1] : vector<64x128xf32> to vector<64xf32>
    %860 = vector.shape_cast %859 : vector<64xf32> to vector<64x1xf32>
    %861 = vector.broadcast %860 : vector<64x1xf32> to vector<64x128xf32>
    %862 = arith.subf %858, %861 : vector<64x128xf32>
    %863 = math.exp %862 : vector<64x128xf32>
    %cst_258 = arith.constant dense<0.000000e+00> : vector<64xf32>
    %864 = vector.multi_reduction <add>, %863, %cst_258 [1] : vector<64x128xf32> to vector<64xf32>
    %865 = vector.shape_cast %864 : vector<64xf32> to vector<64x1xf32>
    %866 = math.log %865 : vector<64x1xf32>
    %867 = vector.broadcast %866 : vector<64x1xf32> to vector<64x128xf32>
    %868 = arith.subf %862, %867 : vector<64x128xf32>
    %c0_259 = arith.constant 0 : index
    %c0_260 = arith.constant 0 : index
    %869 = vector.load %arg12[%c0_259, %c0_260] : memref<64x128xf32, #tpu.memory_space<vmem>>, vector<64x128xf32>
    tpu.vector_store %arg12[%c0_259, %c0_260], %868 {strides = array<i32>} : memref<64x128xf32, #tpu.memory_space<vmem>>, vector<64x128xf32>,
    return
  }
}

</mosaic_0001>

<llo_original>
// kernel: tpu_custom_call.1
$region0: #{tpu_custom_call.1}
  #allocation0 [shape = 'u32[]', space=smem, size = 0x4, offset = 0x4, fixed_abs, tag = 'smem constant byte address 0x4 - core index']
  #allocation1 [shape = 'u32[144,128]{1,0:T(1,128)}', space=vmem, size = 0x12000, scoped, tag = 'internal scratch']
  #allocation2 [shape = 'f32[64,256]{1,0:T(8,128)}', space=vmem, size = 0x10000, scoped, tag = 'scratch operand']
  #allocation3 [shape = 'f32[64,64]{1,0:T(8,128)}', space=vmem, size = 0x8000, scoped, tag = 'scratch operand']
  #allocation4 [shape = 'f32[64,64]{1,0:T(8,128)}', space=vmem, size = 0x8000, scoped, tag = 'scratch operand']
  %s0 = inlined_call_operand.vmem [shape: bf16[64,8], index: 0, kind: input, shape index: {}]
  %s1 = inlined_call_operand.vmem [shape: s32[8,1], index: 1, kind: input, shape index: {}]
  %s2 = inlined_call_operand.vmem [shape: bf16[8,256], index: 2, kind: input, shape index: {}]
  %s3 = inlined_call_operand.vmem [shape: bf16[32,128], index: 3, kind: input, shape index: {}]
  %s4 = inlined_call_operand.hbm [shape: bf16[32,128], index: 4, kind: input, shape index: {}]
  %s5 = inlined_call_operand.vmem [shape: f32[1,256], index: 5, kind: input, shape index: {}]
  %s6 = inlined_call_operand.hbm [shape: bf16[64,256], index: 6, kind: input, shape index: {}]
  %s7 = inlined_call_operand.hbm [shape: bf16[32,128], index: 7, kind: input, shape index: {}]
  %s8 = inlined_call_operand.hbm [shape: bf16[32,128], index: 8, kind: input, shape index: {}]
  %s9 = inlined_call_operand.vmem [shape: f32[1,256], index: 9, kind: input, shape index: {}]
  %s10 = inlined_call_operand.vmem [shape: bf16[64,128], index: 10, kind: input, shape index: {}]
  %s11 = inlined_call_operand.vmem [shape: f32[1,128], index: 11, kind: input, shape index: {}]
  %s12 = inlined_call_operand.hbm [shape: f32[64,128], index: 12, kind: output, shape index: {}]
  %s13 = sld [smem:[#allocation0]]
  $region74: #{tpu_custom_call.1} parent=0
    _
  %s15 = ssub.s32 1, %s13
  %s16 = scalar_select 0, %s15, %s13
  $region1: #{tpu_custom_call.1} parent=0
    #allocation5 [shape = 'u8[8192]{0}', space=vmem, size = 0x2000, scoped, tag = 'input window, operand 4, single buffered']
    #allocation6 [shape = 's32[1]{0}', space=sflag, size = 0x4, scoped, tag = 'scoped memory for tpu_custom_call.1']
    #allocation7 [shape = 's32[1]{0}', space=sflag, size = 0x4, scoped, tag = 'scoped memory for tpu_custom_call.1']
    #allocation8 [shape = 'u8[32768]{0}', space=vmem, size = 0x8000, scoped, tag = 'input window, operand 6, single buffered']
    #allocation9 [shape = 's32[1]{0}', space=sflag, size = 0x4, scoped, tag = 'scoped memory for tpu_custom_call.1']
    #allocation10 [shape = 'u8[8192]{0}', space=vmem, size = 0x2000, scoped, tag = 'input window, operand 7, single buffered']
    #allocation11 [shape = 'u8[8192]{0}', space=vmem, size = 0x2000, scoped, tag = 'input window, operand 8, single buffered']
    #allocation12 [shape = 's32[1]{0}', space=sflag, size = 0x4, scoped, tag = 'scoped memory for tpu_custom_call.1']
    #allocation13 [shape = 'u8[32768]{0}', space=vmem, size = 0x8000, scoped, tag = 'output window, operand 0, single buffered']
    %17 = vsyncpa [#allocation6], 0
    %18 = vsyncpa [#allocation9], 0
    %19 = vsyncpa [#allocation12], 0
    %20 = vsyncpa [#allocation7], 0
    // Predicated region
    $region2: #{tpu_custom_call.1} parent=1 // pred_check
      _
    $region3: #{tpu_custom_call.1} parent=1 // pred_check_branch
      %22 = sbr.rel (0) target = $region5
    $region4: #{tpu_custom_call.1} parent=1 // pred_region
      _
    $region5: #{tpu_custom_call.1} parent=1 // pred_fallthru
      _
    // Predicated region
    $region6: #{tpu_custom_call.1} parent=1 // pred_check
      _
    $region7: #{tpu_custom_call.1} parent=1 // pred_check_branch
      %24 = sbr.rel (0) target = $region9
    $region8: #{tpu_custom_call.1} parent=1 // pred_region
      _
    $region9: #{tpu_custom_call.1} parent=1 // pred_fallthru
      _
    // Predicated region
    $region10: #{tpu_custom_call.1} parent=1 // pred_check
      _
    $region11: #{tpu_custom_call.1} parent=1 // pred_check_branch
      %26 = sbr.rel (0) target = $region13
    $region12: #{tpu_custom_call.1} parent=1 // pred_region
      _
    $region13: #{tpu_custom_call.1} parent=1 // pred_fallthru
      _
    // Predicated region
    $region14: #{tpu_custom_call.1} parent=1 // pred_check
      _
    $region15: #{tpu_custom_call.1} parent=1 // pred_check_branch
      %28 = sbr.rel (0) target = $region17
    $region16: #{tpu_custom_call.1} parent=1 // pred_region
      _
    $region17: #{tpu_custom_call.1} parent=1 // pred_fallthru
      _
    // Predicated region
    $region18: #{tpu_custom_call.1} parent=1 // pred_check
      _
    $region19: #{tpu_custom_call.1} parent=1 // pred_check_branch
      %30 = sbr.rel (0) target = $region21
    $region20: #{tpu_custom_call.1} parent=1 // pred_region
      %s32 = ssub.s32 256, 256
      %33 = vsyncadd [#allocation6], %s32
      %s34 = sshll.u32 [#allocation5], 4
      %s35 = int_to_ptr.vmem [resolvable:$true] %s34
      %40 = dma.hbm_to_vmem [thread:$0]  %s4, 256, %s35, [#allocation6], 64, 64, 4
    $region21: #{tpu_custom_call.1} parent=1 // pred_fallthru
      _
    // Predicated region
    $region22: #{tpu_custom_call.1} parent=1 // pred_check
      _
    $region23: #{tpu_custom_call.1} parent=1 // pred_check_branch
      %42 = sbr.rel (0) target = $region25
    $region24: #{tpu_custom_call.1} parent=1 // pred_region
      _
    $region25: #{tpu_custom_call.1} parent=1 // pred_fallthru
      _
    // Predicated region
    $region26: #{tpu_custom_call.1} parent=1 // pred_check
      _
    $region27: #{tpu_custom_call.1} parent=1 // pred_check_branch
      %44 = sbr.rel (0) target = $region29
    $region28: #{tpu_custom_call.1} parent=1 // pred_region
      %s46 = ssub.s32 1024, 1024
      %47 = vsyncadd [#allocation9], %s46
      %s48 = sshll.u32 [#allocation8], 4
      %s49 = int_to_ptr.vmem [resolvable:$true] %s48
      %54 = dma.hbm_to_vmem [thread:$0]  %s6, 1024, %s49, [#allocation9], 128, 128, 8
    $region29: #{tpu_custom_call.1} parent=1 // pred_fallthru
      _
    // Predicated region
    $region30: #{tpu_custom_call.1} parent=1 // pred_check
      _
    $region31: #{tpu_custom_call.1} parent=1 // pred_check_branch
      %56 = sbr.rel (0) target = $region33
    $region32: #{tpu_custom_call.1} parent=1 // pred_region
      %s58 = ssub.s32 256, 256
      %59 = vsyncadd [#allocation9], %s58
      %s60 = sshll.u32 [#allocation10], 4
      %s61 = int_to_ptr.vmem [resolvable:$true] %s60
      %66 = dma.hbm_to_vmem [thread:$0]  %s7, 256, %s61, [#allocation9], 64, 64, 4
    $region33: #{tpu_custom_call.1} parent=1 // pred_fallthru
      _
    // Predicated region
    $region34: #{tpu_custom_call.1} parent=1 // pred_check
      _
    $region35: #{tpu_custom_call.1} parent=1 // pred_check_branch
      %68 = sbr.rel (0) target = $region37
    $region36: #{tpu_custom_call.1} parent=1 // pred_region
      %s70 = ssub.s32 256, 256
      %71 = vsyncadd [#allocation12], %s70
      %s72 = sshll.u32 [#allocation11], 4
      %s73 = int_to_ptr.vmem [resolvable:$true] %s72
      %78 = dma.hbm_to_vmem [thread:$0]  %s8, 256, %s73, [#allocation12], 64, 64, 4
    $region37: #{tpu_custom_call.1} parent=1 // pred_fallthru
      _
    // Predicated region
    $region38: #{tpu_custom_call.1} parent=1 // pred_check
      _
    $region39: #{tpu_custom_call.1} parent=1 // pred_check_branch
      %80 = sbr.rel (0) target = $region41
    $region40: #{tpu_custom_call.1} parent=1 // pred_region
      _
    $region41: #{tpu_custom_call.1} parent=1 // pred_fallthru
      _
    // Predicated region
    $region42: #{tpu_custom_call.1} parent=1 // pred_check
      _
    $region43: #{tpu_custom_call.1} parent=1 // pred_check_branch
      %82 = sbr.rel (0) target = $region45
    $region44: #{tpu_custom_call.1} parent=1 // pred_region
      _
    $region45: #{tpu_custom_call.1} parent=1 // pred_fallthru
      _
    // Predicated region
    $region46: #{tpu_custom_call.1} parent=1 // pred_check
      _
    $region47: #{tpu_custom_call.1} parent=1 // pred_check_branch
      %84 = sbr.rel (0) target = $region49
    $region48: #{tpu_custom_call.1} parent=1 // pred_region
      _
    $region49: #{tpu_custom_call.1} parent=1 // pred_fallthru
      _
    // Predicated region
    $region50: #{tpu_custom_call.1} parent=1 // pred_check
      _
    $region51: #{tpu_custom_call.1} parent=1 // pred_check_branch
      %86 = sbr.rel (0) target = $region53
    $region52: #{tpu_custom_call.1} parent=1 // pred_region
      %87 = dma.done [#allocation6], 256
    $region53: #{tpu_custom_call.1} parent=1 // pred_fallthru
      _
    // Predicated region
    $region54: #{tpu_custom_call.1} parent=1 // pred_check
      _
    $region55: #{tpu_custom_call.1} parent=1 // pred_check_branch
      %89 = sbr.rel (0) target = $region57
    $region56: #{tpu_custom_call.1} parent=1 // pred_region
      %90 = dma.done [#allocation9], 1024
    $region57: #{tpu_custom_call.1} parent=1 // pred_fallthru
      _
    // Predicated region
    $region58: #{tpu_custom_call.1} parent=1 // pred_check
      _
    $region59: #{tpu_custom_call.1} parent=1 // pred_check_branch
      %92 = sbr.rel (0) target = $region61
    $region60: #{tpu_custom_call.1} parent=1 // pred_region
      %93 = dma.done [#allocation9], 256
    $region61: #{tpu_custom_call.1} parent=1 // pred_fallthru
      _
    // Predicated region
    $region62: #{tpu_custom_call.1} parent=1 // pred_check
      _
    $region63: #{tpu_custom_call.1} parent=1 // pred_check_branch
      %95 = sbr.rel (0) target = $region65
    $region64: #{tpu_custom_call.1} parent=1 // pred_region
      %96 = dma.done [#allocation12], 256
    $region65: #{tpu_custom_call.1} parent=1 // pred_fallthru
      _
    %v98 = vld [vmem:[%s1] sm:$0xff]
    %vm99 = vcmp.gt.s32.totalorder %v98, 0
    %v100 = vsel %vm99, 1, 0
    %101 = vset.pattern.permute.xlu0 0
    %102 = vperm.xlu0 %101, %v100
    %v103 = vpop.permute.xlu0 %102
    %vm104 = vcmp.eq.s32.totalorder %v103, 1
    %vm105 = vcmp.gt.s32.totalorder %v98, 1
    %v106 = vsel %vm105, 1, 0
    %107 = vset.pattern.permute.xlu0 0
    %108 = vperm.xlu0 %107, %v106
    %v109 = vpop.permute.xlu0 %108
    %vm110 = vcmp.eq.s32.totalorder %v109, 1
    %vm111 = vcmp.gt.s32.totalorder %v98, 2
    %v112 = vsel %vm111, 1, 0
    %113 = vset.pattern.permute.xlu0 0
    %114 = vperm.xlu0 %113, %v112
    %v115 = vpop.permute.xlu0 %114
    %vm116 = vcmp.eq.s32.totalorder %v115, 1
    %vm117 = vcmp.gt.s32.totalorder %v98, 3
    %v118 = vsel %vm117, 1, 0
    %119 = vset.pattern.permute.xlu0 0
    %120 = vperm.xlu0 %119, %v118
    %v121 = vpop.permute.xlu0 %120
    %vm122 = vcmp.eq.s32.totalorder %v121, 1
    %vm123 = vcmp.gt.s32.totalorder %v98, 4
    %v124 = vsel %vm123, 1, 0
    %125 = vset.pattern.permute.xlu0 0
    %126 = vperm.xlu0 %125, %v124
    %v127 = vpop.permute.xlu0 %126
    %vm128 = vcmp.eq.s32.totalorder %v127, 1
    %vm129 = vcmp.gt.s32.totalorder %v98, 5
    %v130 = vsel %vm129, 1, 0
    %131 = vset.pattern.permute.xlu0 0
    %132 = vperm.xlu0 %131, %v130
    %v133 = vpop.permute.xlu0 %132
    %vm134 = vcmp.eq.s32.totalorder %v133, 1
    %vm135 = vcmp.gt.s32.totalorder %v98, 6
    %v136 = vsel %vm135, 1, 0
    %137 = vset.pattern.permute.xlu0 0
    %138 = vperm.xlu0 %137, %v136
    %v139 = vpop.permute.xlu0 %138
    %vm140 = vcmp.eq.s32.totalorder %v139, 1
    %vm141 = vcmp.gt.s32.totalorder %v98, 7
    %v142 = vsel %vm141, 1, 0
    %143 = vset.pattern.permute.xlu0 0
    %144 = vperm.xlu0 %143, %v142
    %v145 = vpop.permute.xlu0 %144
    %vm146 = vcmp.eq.s32.totalorder %v145, 1
    %v147 = vld [vmem:[%s0] sm:$0xf]
    %v148 = vld [vmem:[%s0 + $0x4] sm:$0xf]
    %v149 = vld [vmem:[%s0 + $0x8] sm:$0xf]
    %v150 = vld [vmem:[%s0 + $0xc] sm:$0xf]
    %v151 = vld [vmem:[%s0 + $0x10] sm:$0xf]
    %v152 = vld [vmem:[%s0 + $0x14] sm:$0xf]
    %v153 = vld [vmem:[%s0 + $0x18] sm:$0xf]
    %v154 = vld [vmem:[%s0 + $0x1c] sm:$0xf]
    %v155 = vld [vmem:[%s2] sm:$0xff]
    %v156 = vld [vmem:[%s5] sm:$0x3]
    %v158 = vlaneseq
    %v159 = vshrl.u32 %v158, 7
    %v160 = vsub.s32 0, %v159
    %v161 = vrot.slane %v156, %v160
    %v162 = vlaneseq
    %v163 = vshrl.u32 %v162, 7
    %v164 = vsub.s32 1, %v163
    %v165 = vrot.slane %v156, %v164
    %v176 = vunpack.c.l.b16 %v147
    %v177 = vunpack.c.l.b16 %v148
    %v178 = vunpack.c.l.b16 %v149
    %v179 = vunpack.c.l.b16 %v150
    %v180 = vunpack.c.l.b16 %v151
    %v181 = vunpack.c.l.b16 %v152
    %v182 = vunpack.c.l.b16 %v153
    %v183 = vunpack.c.l.b16 %v154
    %v184 = vpack.c.b16 %v177, %v176
    %v185 = vpack.c.b16 %v179, %v178
    %v186 = vpack.c.b16 %v181, %v180
    %v187 = vpack.c.b16 %v183, %v182
    %v189 = vunpack.c.l.b16 %v155
    %v190 = vunpack.c.h.b16 %v155
    %v191 = vpack.c.b16 %v189, %v189
    %v192 = vpack.c.b16 %v190, %v190
    %vm193 = vcmask 64512
    %v195 = vsel %vm193, %v184, 0
    %v198 = vsel %vm193, %v185, 0
    %v201 = vsel %vm193, %v186, 0
    %v204 = vsel %vm193, %v187, 0
    %vm206 = vcmask 1043456
    %v208 = vsel %vm206, %v191, 0
    %v211 = vsel %vm206, %v192, 0
    %213 = vmatprep.subr.bf16.mxu0 0
    %214 = vmatpush1.bf16.msra.mxu0 0
    %215 = vmatprep.subr.bf16.mxu0 0
    %216 = vmatpush1.bf16.msra.mxu0 0
    %217 = vmatprep.subr.bf16.mxu0 0
    %218 = vmatpush1.bf16.msra.mxu0 0
    %219 = vmatprep.subr.bf16.mxu0 0
    %220 = vmatpush1.bf16.msra.mxu0 0
    %221 = vmatprep.subr.bf16.mxu0 0
    %222 = vmatpush1.bf16.msra.mxu0 0
    %223 = vmatprep.subr.bf16.mxu0 0
    %224 = vmatpush1.bf16.msra.mxu0 0
    %225 = vmatprep.subr.bf16.mxu0 0
    %226 = vmatpush1.bf16.msra.mxu0 0
    %227 = vmatprep.subr.bf16.mxu0 %v211
    %228 = vmatpush1.bf16.msra.mxu0 %v208
    %229 = vmatprep.subr.bf16.mxu0 0
    %230 = vmatpush2.bf16.msra.mxu0 0
    %231 = vmatprep.subr.bf16.mxu0 0
    %232 = vmatpush2.bf16.msra.mxu0 0
    %233 = vmatprep.subr.bf16.mxu0 0
    %234 = vmatpush2.bf16.msra.mxu0 0
    %235 = vmatprep.subr.bf16.mxu0 0
    %236 = vmatpush2.bf16.msra.mxu0 0
    %237 = vmatprep.subr.bf16.mxu0 0
    %238 = vmatpush2.bf16.msra.mxu0 0
    %239 = vmatprep.subr.bf16.mxu0 0
    %240 = vmatpush2.bf16.msra.mxu0 0
    %241 = vmatprep.subr.bf16.mxu0 0
    %242 = vmatpush2.bf16.msra.mxu0 0
    %243 = vmatprep.subr.bf16.mxu0 0
    %244 = vmatpush2.bf16.msra.mxu0 0
    %245 = vmatprep.mubr.bf16.mxu0 0
    %246 = vmatmul.mubr.bf16.gmra.mxu0 %v195
    %v247 = vpop.f32.mrf.mxu0
    %v248 = vadd.f32 %v161, %v247
    %v249 = vpop.f32.mrf.mxu0
    %v250 = vadd.f32 %v165, %v249
    %v251 = vpop.f32.mrf.mxu0
    %v252 = vadd.f32 %v161, %v251
    %v253 = vpop.f32.mrf.mxu0
    %v254 = vadd.f32 %v165, %v253
    %255 = vmatprep.mubr.bf16.mxu0 0
    %256 = vmatmul.mubr.bf16.gmra.mxu0 %v198
    %v257 = vpop.f32.mrf.mxu0
    %v258 = vadd.f32 %v161, %v257
    %v259 = vpop.f32.mrf.mxu0
    %v260 = vadd.f32 %v165, %v259
    %v261 = vpop.f32.mrf.mxu0
    %v262 = vadd.f32 %v161, %v261
    %v263 = vpop.f32.mrf.mxu0
    %v264 = vadd.f32 %v165, %v263
    %265 = vmatprep.mubr.bf16.mxu0 0
    %266 = vmatmul.mubr.bf16.gmra.mxu0 %v201
    %v267 = vpop.f32.mrf.mxu0
    %v268 = vadd.f32 %v161, %v267
    %v269 = vpop.f32.mrf.mxu0
    %v270 = vadd.f32 %v165, %v269
    %v271 = vpop.f32.mrf.mxu0
    %v272 = vadd.f32 %v161, %v271
    %v273 = vpop.f32.mrf.mxu0
    %v274 = vadd.f32 %v165, %v273
    %275 = vmatprep.mubr.bf16.mxu0 0
    %276 = vmatmul.mubr.bf16.gmra.mxu0 %v204
    %v277 = vpop.f32.mrf.mxu0
    %v278 = vadd.f32 %v161, %v277
    %v279 = vpop.f32.mrf.mxu0
    %v280 = vadd.f32 %v165, %v279
    %v281 = vpop.f32.mrf.mxu0
    %v282 = vadd.f32 %v161, %v281
    %v283 = vpop.f32.mrf.mxu0
    %v284 = vadd.f32 %v165, %v283
    %285 = vdwg.mxu0
    %286 = vst [vmem:[#allocation2] sm:$0xff] %v248
    %287 = vst [vmem:[#allocation2 + $0x8] sm:$0xff] %v250
    %288 = vst [vmem:[#allocation2 + $0x10] sm:$0xff] %v252
    %289 = vst [vmem:[#allocation2 + $0x18] sm:$0xff] %v254
    %290 = vst [vmem:[#allocation2 + $0x20] sm:$0xff] %v258
    %291 = vst [vmem:[#allocation2 + $0x28] sm:$0xff] %v260
    %292 = vst [vmem:[#allocation2 + $0x30] sm:$0xff] %v262
    %293 = vst [vmem:[#allocation2 + $0x38] sm:$0xff] %v264
    %294 = vst [vmem:[#allocation2 + $0x40] sm:$0xff] %v268
    %295 = vst [vmem:[#allocation2 + $0x48] sm:$0xff] %v270
    %296 = vst [vmem:[#allocation2 + $0x50] sm:$0xff] %v272
    %297 = vst [vmem:[#allocation2 + $0x58] sm:$0xff] %v274
    %298 = vst [vmem:[#allocation2 + $0x60] sm:$0xff] %v278
    %299 = vst [vmem:[#allocation2 + $0x68] sm:$0xff] %v280
    %300 = vst [vmem:[#allocation2 + $0x70] sm:$0xff] %v282
    %301 = vst [vmem:[#allocation2 + $0x78] sm:$0xff] %v284
    %v302 = vld [vmem:[%s3] sm:$0xf]
    %v303 = vld [vmem:[%s3 + $0x4] sm:$0xf]
    %v304 = vld [vmem:[%s3 + $0x8] sm:$0xf]
    %v305 = vld [vmem:[%s3 + $0xc] sm:$0xf]
    %v306 = vld [vmem:[#allocation5] sm:$0xf]
    %v307 = vld [vmem:[#allocation5 + $0x4] sm:$0xf]
    %v308 = vld [vmem:[#allocation5 + $0x8] sm:$0xf]
    %v309 = vld [vmem:[#allocation5 + $0xc] sm:$0xf]
    %v314 = vunpack.c.l.b16 %v302
    %v315 = vunpack.c.l.b16 %v303
    %v316 = vunpack.c.l.b16 %v304
    %v317 = vunpack.c.l.b16 %v305
    %v318 = vpack.c.b16 %v315, %v314
    %v319 = vpack.c.b16 %v317, %v316
    %vm322 = vcmask 261120
    %v324 = vsel %vm322, 0, 0
    %326 = vmatprep.subr.bf16.mxu0 0
    %327 = vmatpush1.bf16.msra.mxu0 0
    %328 = vmatprep.subr.bf16.mxu0 0
    %329 = vmatpush1.bf16.msra.mxu0 0
    %330 = vmatprep.subr.bf16.mxu0 0
    %331 = vmatpush1.bf16.msra.mxu0 0
    %332 = vmatprep.subr.bf16.mxu0 0
    %333 = vmatpush1.bf16.msra.mxu0 0
    %334 = vmatprep.subr.bf16.mxu0 0
    %335 = vmatpush1.bf16.msra.mxu0 0
    %336 = vmatprep.subr.bf16.mxu0 0
    %337 = vmatpush1.bf16.msra.mxu0 0
    %338 = vmatprep.subr.bf16.mxu0 0
    %339 = vmatpush1.bf16.msra.mxu0 %v319
    %340 = vmatprep.subr.bf16.mxu0 0
    %341 = vmatpush1.bf16.msra.mxu0 %v318
    %342 = vmatprep.subr.bf16.mxu0 0
    %343 = vmatpush2.bf16.msra.mxu0 0
    %344 = vmatprep.subr.bf16.mxu0 0
    %345 = vmatpush2.bf16.msra.mxu0 0
    %346 = vmatprep.subr.bf16.mxu0 0
    %347 = vmatpush2.bf16.msra.mxu0 0
    %348 = vmatprep.subr.bf16.mxu0 0
    %349 = vmatpush2.bf16.msra.mxu0 0
    %350 = vmatprep.subr.bf16.mxu0 0
    %351 = vmatpush2.bf16.msra.mxu0 0
    %352 = vmatprep.subr.bf16.mxu0 0
    %353 = vmatpush2.bf16.msra.mxu0 0
    %354 = vmatprep.subr.bf16.mxu0 0
    %355 = vmatpush2.bf16.msra.mxu0 0
    %356 = vmatprep.subr.bf16.mxu0 0
    %357 = vmatpush2.bf16.msra.mxu0 0
    %358 = vmatprep.mubr.bf16.mxu0 0
    %359 = vmatmul.mubr.bf16.gmra.mxu0 %v324
    %v360 = vpop.f32.mrf.mxu0
    %v361 = vadd.f32 0.0, %v360
    %v362 = vpop.f32.mrf.mxu0
    %v363 = vpop.f32.mrf.mxu0
    %v364 = vpop.f32.mrf.mxu0
    %365 = vdwg.mxu0
    %v370 = vunpack.c.l.b16 %v306
    %v371 = vunpack.c.l.b16 %v307
    %v372 = vunpack.c.l.b16 %v308
    %v373 = vunpack.c.l.b16 %v309
    %v374 = vpack.c.b16 %v371, %v370
    %v375 = vpack.c.b16 %v373, %v372
    %378 = vmatprep.subr.bf16.mxu0 0
    %379 = vmatpush1.bf16.msra.mxu0 0
    %380 = vmatprep.subr.bf16.mxu0 0
    %381 = vmatpush1.bf16.msra.mxu0 0
    %382 = vmatprep.subr.bf16.mxu0 0
    %383 = vmatpush1.bf16.msra.mxu0 0
    %384 = vmatprep.subr.bf16.mxu0 0
    %385 = vmatpush1.bf16.msra.mxu0 0
    %386 = vmatprep.subr.bf16.mxu0 0
    %387 = vmatpush1.bf16.msra.mxu0 0
    %388 = vmatprep.subr.bf16.mxu0 0
    %389 = vmatpush1.bf16.msra.mxu0 0
    %390 = vmatprep.subr.bf16.mxu0 0
    %391 = vmatpush1.bf16.msra.mxu0 %v375
    %392 = vmatprep.subr.bf16.mxu0 0
    %393 = vmatpush1.bf16.msra.mxu0 %v374
    %394 = vmatprep.subr.bf16.mxu0 0
    %395 = vmatpush2.bf16.msra.mxu0 0
    %396 = vmatprep.subr.bf16.mxu0 0
    %397 = vmatpush2.bf16.msra.mxu0 0
    %398 = vmatprep.subr.bf16.mxu0 0
    %399 = vmatpush2.bf16.msra.mxu0 0
    %400 = vmatprep.subr.bf16.mxu0 0
    %401 = vmatpush2.bf16.msra.mxu0 0
    %402 = vmatprep.subr.bf16.mxu0 0
    %403 = vmatpush2.bf16.msra.mxu0 0
    %404 = vmatprep.subr.bf16.mxu0 0
    %405 = vmatpush2.bf16.msra.mxu0 0
    %406 = vmatprep.subr.bf16.mxu0 0
    %407 = vmatpush2.bf16.msra.mxu0 0
    %408 = vmatprep.subr.bf16.mxu0 0
    %409 = vmatpush2.bf16.msra.mxu0 0
    %410 = vmatprep.mubr.bf16.mxu0 0
    %411 = vmatmul.mubr.bf16.gmra.mxu0 %v324
    %v412 = vpop.f32.mrf.mxu0
    %v413 = vadd.f32 0.0, %v412
    %v414 = vpop.f32.mrf.mxu0
    %v415 = vpop.f32.mrf.mxu0
    %v416 = vpop.f32.mrf.mxu0
    %417 = vdwg.mxu0
    %v418 = vld [vmem:[#allocation2] sm:$0xff]
    %v419 = vadd.f32 %v418, %v361
    %v420 = vld [vmem:[#allocation2 + $0x78] sm:$0xff]
    %v421 = vadd.f32 %v420, %v413
    %v422 = vxor.u32 %v419, 2147483648
    %v423 = vmul.f32 %v422, 1.442695
    %v424 = vpow.pop %v423
    %v425 = vadd.f32 %v424, 1.0
    %v426 = vrcp.pop %v425
    %v427 = vmul.f32 1.0, %v426
    %v428 = vtanh.pop %v419
    %v429 = vxor.u32 %v421, 2147483648
    %v430 = vmul.f32 %v429, 1.442695
    %v431 = vpow.pop %v430
    %v432 = vadd.f32 %v431, 1.0
    %v433 = vrcp.pop %v432
    %v434 = vmul.f32 1.0, %v433
    %v435 = vtanh.pop %v421
    %v436 = vmul.f32 %v427, 0.0
    %438 = vrot.lane.b32.xlu0 %v428, 32
    %v439 = vpop.permute.xlu0 %438
    %v441 = vmul.f32 %v427, %v439
    %443 = vrot.lane.b32.xlu0 %v441, 32
    %v444 = vpop.permute.xlu0 %443
    %v446 = vadd.f32 %v436, %v444
    %v447 = vmul.f32 %v434, 0.0
    %449 = vrot.lane.b32.xlu0 %v435, 32
    %v450 = vpop.permute.xlu0 %449
    %v452 = vmul.f32 %v434, %v450
    %454 = vrot.lane.b32.xlu0 %v452, 32
    %v455 = vpop.permute.xlu0 %454
    %v457 = vadd.f32 %v447, %v455
    %v458 = vtanh.pop %v446
    %460 = vrot.lane.b32.xlu0 %v458, 32
    %v461 = vpop.permute.xlu0 %460
    %v463 = vmul.f32 %v427, %v461
    %v464 = vtanh.pop %v457
    %466 = vrot.lane.b32.xlu0 %v464, 32
    %v467 = vpop.permute.xlu0 %466
    %v469 = vmul.f32 %v434, %v467
    %v470 = vsel %vm104, %v463, 0.0
    %472 = vrot.lane.b32.xlu0 %v470, 64
    %v473 = vpop.permute.xlu0 %472
    %475 = vst.msk [vmem:[#allocation3] sm:$0xff] %vm322, %v473
    %v476 = vsel %vm146, %v469, 0.0
    %478 = vrot.lane.b32.xlu0 %v476, 96
    %v479 = vpop.permute.xlu0 %478
    %vm481 = vcmask 523520
    %482 = vst.msk [vmem:[#allocation3 + $0x38] sm:$0xff] %vm481, %v479
    %v483 = vsel %vm104, %v446, 0.0
    %v484 = vsel %vm146, %v457, 0.0
    %v485 = vpack.c.bf16 %v470, %v470
    %487 = vrot.lane.b32.xlu0 %v485, 64
    %v488 = vpop.permute.xlu0 %487
    %v490 = vsel %vm322, %v488, 0
    %492 = vmatprep.subr.bf16.mxu0 0
    %493 = vmatpush1.bf16.msra.mxu0 0
    %494 = vmatprep.subr.bf16.mxu0 0
    %495 = vmatpush1.bf16.msra.mxu0 0
    %496 = vmatprep.subr.bf16.mxu0 0
    %497 = vmatpush1.bf16.msra.mxu0 0
    %498 = vmatprep.subr.bf16.mxu0 0
    %499 = vmatpush1.bf16.msra.mxu0 0
    %500 = vmatprep.subr.bf16.mxu0 0
    %501 = vmatpush1.bf16.msra.mxu0 0
    %502 = vmatprep.subr.bf16.mxu0 0
    %503 = vmatpush1.bf16.msra.mxu0 0
    %504 = vmatprep.subr.bf16.mxu0 0
    %505 = vmatpush1.bf16.msra.mxu0 %v319
    %506 = vmatprep.subr.bf16.mxu0 0
    %507 = vmatpush1.bf16.msra.mxu0 %v318
    %508 = vmatprep.subr.bf16.mxu0 0
    %509 = vmatpush2.bf16.msra.mxu0 0
    %510 = vmatprep.subr.bf16.mxu0 0
    %511 = vmatpush2.bf16.msra.mxu0 0
    %512 = vmatprep.subr.bf16.mxu0 0
    %513 = vmatpush2.bf16.msra.mxu0 0
    %514 = vmatprep.subr.bf16.mxu0 0
    %515 = vmatpush2.bf16.msra.mxu0 0
    %516 = vmatprep.subr.bf16.mxu0 0
    %517 = vmatpush2.bf16.msra.mxu0 0
    %518 = vmatprep.subr.bf16.mxu0 0
    %519 = vmatpush2.bf16.msra.mxu0 0
    %520 = vmatprep.subr.bf16.mxu0 0
    %521 = vmatpush2.bf16.msra.mxu0 0
    %522 = vmatprep.subr.bf16.mxu0 0
    %523 = vmatpush2.bf16.msra.mxu0 0
    %524 = vmatprep.mubr.bf16.mxu0 0
    %525 = vmatmul.mubr.bf16.gmra.mxu0 %v490
    %v526 = vpop.f32.mrf.mxu0
    %v527 = vadd.f32 0.0, %v526
    %v528 = vpop.f32.mrf.mxu0
    %v529 = vpop.f32.mrf.mxu0
    %v530 = vpop.f32.mrf.mxu0
    %531 = vdwg.mxu0
    %v532 = vpack.c.bf16 %v476, %v476
    %534 = vrot.lane.b32.xlu0 %v532, 64
    %v535 = vpop.permute.xlu0 %534
    %v537 = vsel %vm322, %v535, 0
    %539 = vmatprep.subr.bf16.mxu0 0
    %540 = vmatpush1.bf16.msra.mxu0 0
    %541 = vmatprep.subr.bf16.mxu0 0
    %542 = vmatpush1.bf16.msra.mxu0 0
    %543 = vmatprep.subr.bf16.mxu0 0
    %544 = vmatpush1.bf16.msra.mxu0 0
    %545 = vmatprep.subr.bf16.mxu0 0
    %546 = vmatpush1.bf16.msra.mxu0 0
    %547 = vmatprep.subr.bf16.mxu0 0
    %548 = vmatpush1.bf16.msra.mxu0 0
    %549 = vmatprep.subr.bf16.mxu0 0
    %550 = vmatpush1.bf16.msra.mxu0 0
    %551 = vmatprep.subr.bf16.mxu0 0
    %552 = vmatpush1.bf16.msra.mxu0 %v375
    %553 = vmatprep.subr.bf16.mxu0 0
    %554 = vmatpush1.bf16.msra.mxu0 %v374
    %555 = vmatprep.subr.bf16.mxu0 0
    %556 = vmatpush2.bf16.msra.mxu0 0
    %557 = vmatprep.subr.bf16.mxu0 0
    %558 = vmatpush2.bf16.msra.mxu0 0
    %559 = vmatprep.subr.bf16.mxu0 0
    %560 = vmatpush2.bf16.msra.mxu0 0
    %561 = vmatprep.subr.bf16.mxu0 0
    %562 = vmatpush2.bf16.msra.mxu0 0
    %563 = vmatprep.subr.bf16.mxu0 0
    %564 = vmatpush2.bf16.msra.mxu0 0
    %565 = vmatprep.subr.bf16.mxu0 0
    %566 = vmatpush2.bf16.msra.mxu0 0
    %567 = vmatprep.subr.bf16.mxu0 0
    %568 = vmatpush2.bf16.msra.mxu0 0
    %569 = vmatprep.subr.bf16.mxu0 0
    %570 = vmatpush2.bf16.msra.mxu0 0
    %571 = vmatprep.mubr.bf16.mxu0 0
    %572 = vmatmul.mubr.bf16.gmra.mxu0 %v537
    %v573 = vpop.f32.mrf.mxu0
    %v574 = vadd.f32 0.0, %v573
    %v575 = vpop.f32.mrf.mxu0
    %v576 = vpop.f32.mrf.mxu0
    %v577 = vpop.f32.mrf.mxu0
    %578 = vdwg.mxu0
    %v579 = vld [vmem:[#allocation2 + $0x10] sm:$0xff]
    %v580 = vadd.f32 %v579, %v527
    %v581 = vld [vmem:[#allocation2 + $0x68] sm:$0xff]
    %v582 = vadd.f32 %v581, %v574
    %v583 = vxor.u32 %v580, 2147483648
    %v584 = vmul.f32 %v583, 1.442695
    %v585 = vpow.pop %v584
    %v586 = vadd.f32 %v585, 1.0
    %v587 = vrcp.pop %v586
    %v588 = vmul.f32 1.0, %v587
    %v589 = vtanh.pop %v580
    %v590 = vxor.u32 %v582, 2147483648
    %v591 = vmul.f32 %v590, 1.442695
    %v592 = vpow.pop %v591
    %v593 = vadd.f32 %v592, 1.0
    %v594 = vrcp.pop %v593
    %v595 = vmul.f32 1.0, %v594
    %v596 = vtanh.pop %v582
    %v597 = vmul.f32 %v588, %v483
    %599 = vrot.lane.b32.xlu0 %v589, 32
    %v600 = vpop.permute.xlu0 %599
    %v602 = vmul.f32 %v588, %v600
    %604 = vrot.lane.b32.xlu0 %v602, 32
    %v605 = vpop.permute.xlu0 %604
    %v607 = vadd.f32 %v597, %v605
    %v608 = vmul.f32 %v595, %v484
    %610 = vrot.lane.b32.xlu0 %v596, 32
    %v611 = vpop.permute.xlu0 %610
    %v613 = vmul.f32 %v595, %v611
    %615 = vrot.lane.b32.xlu0 %v613, 32
    %v616 = vpop.permute.xlu0 %615
    %v618 = vadd.f32 %v608, %v616
    %v619 = vtanh.pop %v607
    %621 = vrot.lane.b32.xlu0 %v619, 32
    %v622 = vpop.permute.xlu0 %621
    %v624 = vmul.f32 %v588, %v622
    %v625 = vtanh.pop %v618
    %627 = vrot.lane.b32.xlu0 %v625, 32
    %v628 = vpop.permute.xlu0 %627
    %v630 = vmul.f32 %v595, %v628
    %v631 = vsel %vm110, %v624, 0.0
    %633 = vrot.lane.b32.xlu0 %v631, 64
    %v634 = vpop.permute.xlu0 %633
    %636 = vst.msk [vmem:[#allocation3 + $0x8] sm:$0xff] %vm322, %v634
    %v637 = vsel %vm140, %v630, 0.0
    %639 = vrot.lane.b32.xlu0 %v637, 96
    %v640 = vpop.permute.xlu0 %639
    %642 = vst.msk [vmem:[#allocation3 + $0x30] sm:$0xff] %vm481, %v640
    %v643 = vsel %vm110, %v624, %v470
    %v644 = vsel %vm140, %v630, %v476
    %v645 = vsel %vm110, %v607, %v483
    %v646 = vsel %vm140, %v618, %v484
    %v647 = vpack.c.bf16 %v643, %v643
    %649 = vrot.lane.b32.xlu0 %v647, 64
    %v650 = vpop.permute.xlu0 %649
    %v652 = vsel %vm322, %v650, 0
    %654 = vmatprep.subr.bf16.mxu0 0
    %655 = vmatpush1.bf16.msra.mxu0 0
    %656 = vmatprep.subr.bf16.mxu0 0
    %657 = vmatpush1.bf16.msra.mxu0 0
    %658 = vmatprep.subr.bf16.mxu0 0
    %659 = vmatpush1.bf16.msra.mxu0 0
    %660 = vmatprep.subr.bf16.mxu0 0
    %661 = vmatpush1.bf16.msra.mxu0 0
    %662 = vmatprep.subr.bf16.mxu0 0
    %663 = vmatpush1.bf16.msra.mxu0 0
    %664 = vmatprep.subr.bf16.mxu0 0
    %665 = vmatpush1.bf16.msra.mxu0 0
    %666 = vmatprep.subr.bf16.mxu0 0
    %667 = vmatpush1.bf16.msra.mxu0 %v319
    %668 = vmatprep.subr.bf16.mxu0 0
    %669 = vmatpush1.bf16.msra.mxu0 %v318
    %670 = vmatprep.subr.bf16.mxu0 0
    %671 = vmatpush2.bf16.msra.mxu0 0
    %672 = vmatprep.subr.bf16.mxu0 0
    %673 = vmatpush2.bf16.msra.mxu0 0
    %674 = vmatprep.subr.bf16.mxu0 0
    %675 = vmatpush2.bf16.msra.mxu0 0
    %676 = vmatprep.subr.bf16.mxu0 0
    %677 = vmatpush2.bf16.msra.mxu0 0
    %678 = vmatprep.subr.bf16.mxu0 0
    %679 = vmatpush2.bf16.msra.mxu0 0
    %680 = vmatprep.subr.bf16.mxu0 0
    %681 = vmatpush2.bf16.msra.mxu0 0
    %682 = vmatprep.subr.bf16.mxu0 0
    %683 = vmatpush2.bf16.msra.mxu0 0
    %684 = vmatprep.subr.bf16.mxu0 0
    %685 = vmatpush2.bf16.msra.mxu0 0
    %686 = vmatprep.mubr.bf16.mxu0 0
    %687 = vmatmul.mubr.bf16.gmra.mxu0 %v652
    %v688 = vpop.f32.mrf.mxu0
    %v689 = vadd.f32 0.0, %v688
    %v690 = vpop.f32.mrf.mxu0
    %v691 = vpop.f32.mrf.mxu0
    %v692 = vpop.f32.mrf.mxu0
    %693 = vdwg.mxu0
    %v694 = vpack.c.bf16 %v644, %v644
    %696 = vrot.lane.b32.xlu0 %v694, 64
    %v697 = vpop.permute.xlu0 %696
    %v699 = vsel %vm322, %v697, 0
    %701 = vmatprep.subr.bf16.mxu0 0
    %702 = vmatpush1.bf16.msra.mxu0 0
    %703 = vmatprep.subr.bf16.mxu0 0
    %704 = vmatpush1.bf16.msra.mxu0 0
    %705 = vmatprep.subr.bf16.mxu0 0
    %706 = vmatpush1.bf16.msra.mxu0 0
    %707 = vmatprep.subr.bf16.mxu0 0
    %708 = vmatpush1.bf16.msra.mxu0 0
    %709 = vmatprep.subr.bf16.mxu0 0
    %710 = vmatpush1.bf16.msra.mxu0 0
    %711 = vmatprep.subr.bf16.mxu0 0
    %712 = vmatpush1.bf16.msra.mxu0 0
    %713 = vmatprep.subr.bf16.mxu0 0
    %714 = vmatpush1.bf16.msra.mxu0 %v375
    %715 = vmatprep.subr.bf16.mxu0 0
    %716 = vmatpush1.bf16.msra.mxu0 %v374
    %717 = vmatprep.subr.bf16.mxu0 0
    %718 = vmatpush2.bf16.msra.mxu0 0
    %719 = vmatprep.subr.bf16.mxu0 0
    %720 = vmatpush2.bf16.msra.mxu0 0
    %721 = vmatprep.subr.bf16.mxu0 0
    %722 = vmatpush2.bf16.msra.mxu0 0
    %723 = vmatprep.subr.bf16.mxu0 0
    %724 = vmatpush2.bf16.msra.mxu0 0
    %725 = vmatprep.subr.bf16.mxu0 0
    %726 = vmatpush2.bf16.msra.mxu0 0
    %727 = vmatprep.subr.bf16.mxu0 0
    %728 = vmatpush2.bf16.msra.mxu0 0
    %729 = vmatprep.subr.bf16.mxu0 0
    %730 = vmatpush2.bf16.msra.mxu0 0
    %731 = vmatprep.subr.bf16.mxu0 0
    %732 = vmatpush2.bf16.msra.mxu0 0
    %733 = vmatprep.mubr.bf16.mxu0 0
    %734 = vmatmul.mubr.bf16.gmra.mxu0 %v699
    %v735 = vpop.f32.mrf.mxu0
    %v736 = vadd.f32 0.0, %v735
    %v737 = vpop.f32.mrf.mxu0
    %v738 = vpop.f32.mrf.mxu0
    %v739 = vpop.f32.mrf.mxu0
    %740 = vdwg.mxu0
    %v741 = vld [vmem:[#allocation2 + $0x20] sm:$0xff]
    %v742 = vadd.f32 %v741, %v689
    %v743 = vld [vmem:[#allocation2 + $0x58] sm:$0xff]
    %v744 = vadd.f32 %v743, %v736
    %v745 = vxor.u32 %v742, 2147483648
    %v746 = vmul.f32 %v745, 1.442695
    %v747 = vpow.pop %v746
    %v748 = vadd.f32 %v747, 1.0
    %v749 = vrcp.pop %v748
    %v750 = vmul.f32 1.0, %v749
    %v751 = vtanh.pop %v742
    %v752 = vxor.u32 %v744, 2147483648
    %v753 = vmul.f32 %v752, 1.442695
    %v754 = vpow.pop %v753
    %v755 = vadd.f32 %v754, 1.0
    %v756 = vrcp.pop %v755
    %v757 = vmul.f32 1.0, %v756
    %v758 = vtanh.pop %v744
    %v759 = vmul.f32 %v750, %v645
    %761 = vrot.lane.b32.xlu0 %v751, 32
    %v762 = vpop.permute.xlu0 %761
    %v764 = vmul.f32 %v750, %v762
    %766 = vrot.lane.b32.xlu0 %v764, 32
    %v767 = vpop.permute.xlu0 %766
    %v769 = vadd.f32 %v759, %v767
    %v770 = vmul.f32 %v757, %v646
    %772 = vrot.lane.b32.xlu0 %v758, 32
    %v773 = vpop.permute.xlu0 %772
    %v775 = vmul.f32 %v757, %v773
    %777 = vrot.lane.b32.xlu0 %v775, 32
    %v778 = vpop.permute.xlu0 %777
    %v780 = vadd.f32 %v770, %v778
    %v781 = vtanh.pop %v769
    %783 = vrot.lane.b32.xlu0 %v781, 32
    %v784 = vpop.permute.xlu0 %783
    %v786 = vmul.f32 %v750, %v784
    %v787 = vtanh.pop %v780
    %789 = vrot.lane.b32.xlu0 %v787, 32
    %v790 = vpop.permute.xlu0 %789
    %v792 = vmul.f32 %v757, %v790
    %v793 = vsel %vm116, %v786, 0.0
    %795 = vrot.lane.b32.xlu0 %v793, 64
    %v796 = vpop.permute.xlu0 %795
    %798 = vst.msk [vmem:[#allocation3 + $0x10] sm:$0xff] %vm322, %v796
    %v799 = vsel %vm134, %v792, 0.0
    %801 = vrot.lane.b32.xlu0 %v799, 96
    %v802 = vpop.permute.xlu0 %801
    %804 = vst.msk [vmem:[#allocation3 + $0x28] sm:$0xff] %vm481, %v802
    %v805 = vsel %vm116, %v786, %v643
    %v806 = vsel %vm134, %v792, %v644
    %v807 = vsel %vm116, %v769, %v645
    %v808 = vsel %vm134, %v780, %v646
    %v809 = vpack.c.bf16 %v805, %v805
    %811 = vrot.lane.b32.xlu0 %v809, 64
    %v812 = vpop.permute.xlu0 %811
    %v814 = vsel %vm322, %v812, 0
    %816 = vmatprep.subr.bf16.mxu0 0
    %817 = vmatpush1.bf16.msra.mxu0 0
    %818 = vmatprep.subr.bf16.mxu0 0
    %819 = vmatpush1.bf16.msra.mxu0 0
    %820 = vmatprep.subr.bf16.mxu0 0
    %821 = vmatpush1.bf16.msra.mxu0 0
    %822 = vmatprep.subr.bf16.mxu0 0
    %823 = vmatpush1.bf16.msra.mxu0 0
    %824 = vmatprep.subr.bf16.mxu0 0
    %825 = vmatpush1.bf16.msra.mxu0 0
    %826 = vmatprep.subr.bf16.mxu0 0
    %827 = vmatpush1.bf16.msra.mxu0 0
    %828 = vmatprep.subr.bf16.mxu0 0
    %829 = vmatpush1.bf16.msra.mxu0 %v319
    %830 = vmatprep.subr.bf16.mxu0 0
    %831 = vmatpush1.bf16.msra.mxu0 %v318
    %832 = vmatprep.subr.bf16.mxu0 0
    %833 = vmatpush2.bf16.msra.mxu0 0
    %834 = vmatprep.subr.bf16.mxu0 0
    %835 = vmatpush2.bf16.msra.mxu0 0
    %836 = vmatprep.subr.bf16.mxu0 0
    %837 = vmatpush2.bf16.msra.mxu0 0
    %838 = vmatprep.subr.bf16.mxu0 0
    %839 = vmatpush2.bf16.msra.mxu0 0
    %840 = vmatprep.subr.bf16.mxu0 0
    %841 = vmatpush2.bf16.msra.mxu0 0
    %842 = vmatprep.subr.bf16.mxu0 0
    %843 = vmatpush2.bf16.msra.mxu0 0
    %844 = vmatprep.subr.bf16.mxu0 0
    %845 = vmatpush2.bf16.msra.mxu0 0
    %846 = vmatprep.subr.bf16.mxu0 0
    %847 = vmatpush2.bf16.msra.mxu0 0
    %848 = vmatprep.mubr.bf16.mxu0 0
    %849 = vmatmul.mubr.bf16.gmra.mxu0 %v814
    %v850 = vpop.f32.mrf.mxu0
    %v851 = vadd.f32 0.0, %v850
    %v852 = vpop.f32.mrf.mxu0
    %v853 = vpop.f32.mrf.mxu0
    %v854 = vpop.f32.mrf.mxu0
    %855 = vdwg.mxu0
    %v856 = vpack.c.bf16 %v806, %v806
    %858 = vrot.lane.b32.xlu0 %v856, 64
    %v859 = vpop.permute.xlu0 %858
    %v861 = vsel %vm322, %v859, 0
    %863 = vmatprep.subr.bf16.mxu0 0
    %864 = vmatpush1.bf16.msra.mxu0 0
    %865 = vmatprep.subr.bf16.mxu0 0
    %866 = vmatpush1.bf16.msra.mxu0 0
    %867 = vmatprep.subr.bf16.mxu0 0
    %868 = vmatpush1.bf16.msra.mxu0 0
    %869 = vmatprep.subr.bf16.mxu0 0
    %870 = vmatpush1.bf16.msra.mxu0 0
    %871 = vmatprep.subr.bf16.mxu0 0
    %872 = vmatpush1.bf16.msra.mxu0 0
    %873 = vmatprep.subr.bf16.mxu0 0
    %874 = vmatpush1.bf16.msra.mxu0 0
    %875 = vmatprep.subr.bf16.mxu0 0
    %876 = vmatpush1.bf16.msra.mxu0 %v375
    %877 = vmatprep.subr.bf16.mxu0 0
    %878 = vmatpush1.bf16.msra.mxu0 %v374
    %879 = vmatprep.subr.bf16.mxu0 0
    %880 = vmatpush2.bf16.msra.mxu0 0
    %881 = vmatprep.subr.bf16.mxu0 0
    %882 = vmatpush2.bf16.msra.mxu0 0
    %883 = vmatprep.subr.bf16.mxu0 0
    %884 = vmatpush2.bf16.msra.mxu0 0
    %885 = vmatprep.subr.bf16.mxu0 0
    %886 = vmatpush2.bf16.msra.mxu0 0
    %887 = vmatprep.subr.bf16.mxu0 0
    %888 = vmatpush2.bf16.msra.mxu0 0
    %889 = vmatprep.subr.bf16.mxu0 0
    %890 = vmatpush2.bf16.msra.mxu0 0
    %891 = vmatprep.subr.bf16.mxu0 0
    %892 = vmatpush2.bf16.msra.mxu0 0
    %893 = vmatprep.subr.bf16.mxu0 0
    %894 = vmatpush2.bf16.msra.mxu0 0
    %895 = vmatprep.mubr.bf16.mxu0 0
    %896 = vmatmul.mubr.bf16.gmra.mxu0 %v861
    %v897 = vpop.f32.mrf.mxu0
    %v898 = vadd.f32 0.0, %v897
    %v899 = vpop.f32.mrf.mxu0
    %v900 = vpop.f32.mrf.mxu0
    %v901 = vpop.f32.mrf.mxu0
    %902 = vdwg.mxu0
    %v903 = vld [vmem:[#allocation2 + $0x30] sm:$0xff]
    %v904 = vadd.f32 %v903, %v851
    %v905 = vld [vmem:[#allocation2 + $0x48] sm:$0xff]
    %v906 = vadd.f32 %v905, %v898
    %v907 = vxor.u32 %v904, 2147483648
    %v908 = vmul.f32 %v907, 1.442695
    %v909 = vpow.pop %v908
    %v910 = vadd.f32 %v909, 1.0
    %v911 = vrcp.pop %v910
    %v912 = vmul.f32 1.0, %v911
    %v913 = vtanh.pop %v904
    %v914 = vxor.u32 %v906, 2147483648
    %v915 = vmul.f32 %v914, 1.442695
    %v916 = vpow.pop %v915
    %v917 = vadd.f32 %v916, 1.0
    %v918 = vrcp.pop %v917
    %v919 = vmul.f32 1.0, %v918
    %v920 = vtanh.pop %v906
    %v921 = vmul.f32 %v912, %v807
    %923 = vrot.lane.b32.xlu0 %v913, 32
    %v924 = vpop.permute.xlu0 %923
    %v926 = vmul.f32 %v912, %v924
    %928 = vrot.lane.b32.xlu0 %v926, 32
    %v929 = vpop.permute.xlu0 %928
    %v931 = vadd.f32 %v921, %v929
    %v932 = vmul.f32 %v919, %v808
    %934 = vrot.lane.b32.xlu0 %v920, 32
    %v935 = vpop.permute.xlu0 %934
    %v937 = vmul.f32 %v919, %v935
    %939 = vrot.lane.b32.xlu0 %v937, 32
    %v940 = vpop.permute.xlu0 %939
    %v942 = vadd.f32 %v932, %v940
    %v943 = vtanh.pop %v931
    %945 = vrot.lane.b32.xlu0 %v943, 32
    %v946 = vpop.permute.xlu0 %945
    %v948 = vmul.f32 %v912, %v946
    %v949 = vtanh.pop %v942
    %951 = vrot.lane.b32.xlu0 %v949, 32
    %v952 = vpop.permute.xlu0 %951
    %v954 = vmul.f32 %v919, %v952
    %v955 = vsel %vm122, %v948, 0.0
    %957 = vrot.lane.b32.xlu0 %v955, 64
    %v958 = vpop.permute.xlu0 %957
    %960 = vst.msk [vmem:[#allocation3 + $0x18] sm:$0xff] %vm322, %v958
    %v961 = vsel %vm128, %v954, 0.0
    %963 = vrot.lane.b32.xlu0 %v961, 96
    %v964 = vpop.permute.xlu0 %963
    %966 = vst.msk [vmem:[#allocation3 + $0x20] sm:$0xff] %vm481, %v964
    %v967 = vsel %vm122, %v948, %v805
    %v968 = vsel %vm128, %v954, %v806
    %v969 = vsel %vm122, %v931, %v807
    %v970 = vsel %vm128, %v942, %v808
    %v971 = vpack.c.bf16 %v967, %v967
    %973 = vrot.lane.b32.xlu0 %v971, 64
    %v974 = vpop.permute.xlu0 %973
    %v976 = vsel %vm322, %v974, 0
    %978 = vmatprep.subr.bf16.mxu0 0
    %979 = vmatpush1.bf16.msra.mxu0 0
    %980 = vmatprep.subr.bf16.mxu0 0
    %981 = vmatpush1.bf16.msra.mxu0 0
    %982 = vmatprep.subr.bf16.mxu0 0
    %983 = vmatpush1.bf16.msra.mxu0 0
    %984 = vmatprep.subr.bf16.mxu0 0
    %985 = vmatpush1.bf16.msra.mxu0 0
    %986 = vmatprep.subr.bf16.mxu0 0
    %987 = vmatpush1.bf16.msra.mxu0 0
    %988 = vmatprep.subr.bf16.mxu0 0
    %989 = vmatpush1.bf16.msra.mxu0 0
    %990 = vmatprep.subr.bf16.mxu0 0
    %991 = vmatpush1.bf16.msra.mxu0 %v319
    %992 = vmatprep.subr.bf16.mxu0 0
    %993 = vmatpush1.bf16.msra.mxu0 %v318
    %994 = vmatprep.subr.bf16.mxu0 0
    %995 = vmatpush2.bf16.msra.mxu0 0
    %996 = vmatprep.subr.bf16.mxu0 0
    %997 = vmatpush2.bf16.msra.mxu0 0
    %998 = vmatprep.subr.bf16.mxu0 0
    %999 = vmatpush2.bf16.msra.mxu0 0
    %1000 = vmatprep.subr.bf16.mxu0 0
    %1001 = vmatpush2.bf16.msra.mxu0 0
    %1002 = vmatprep.subr.bf16.mxu0 0
    %1003 = vmatpush2.bf16.msra.mxu0 0
    %1004 = vmatprep.subr.bf16.mxu0 0
    %1005 = vmatpush2.bf16.msra.mxu0 0
    %1006 = vmatprep.subr.bf16.mxu0 0
    %1007 = vmatpush2.bf16.msra.mxu0 0
    %1008 = vmatprep.subr.bf16.mxu0 0
    %1009 = vmatpush2.bf16.msra.mxu0 0
    %1010 = vmatprep.mubr.bf16.mxu0 0
    %1011 = vmatmul.mubr.bf16.gmra.mxu0 %v976
    %v1012 = vpop.f32.mrf.mxu0
    %v1013 = vadd.f32 0.0, %v1012
    %v1014 = vpop.f32.mrf.mxu0
    %v1015 = vpop.f32.mrf.mxu0
    %v1016 = vpop.f32.mrf.mxu0
    %1017 = vdwg.mxu0
    %v1018 = vpack.c.bf16 %v968, %v968
    %1020 = vrot.lane.b32.xlu0 %v1018, 64
    %v1021 = vpop.permute.xlu0 %1020
    %v1023 = vsel %vm322, %v1021, 0
    %1025 = vmatprep.subr.bf16.mxu0 0
    %1026 = vmatpush1.bf16.msra.mxu0 0
    %1027 = vmatprep.subr.bf16.mxu0 0
    %1028 = vmatpush1.bf16.msra.mxu0 0
    %1029 = vmatprep.subr.bf16.mxu0 0
    %1030 = vmatpush1.bf16.msra.mxu0 0
    %1031 = vmatprep.subr.bf16.mxu0 0
    %1032 = vmatpush1.bf16.msra.mxu0 0
    %1033 = vmatprep.subr.bf16.mxu0 0
    %1034 = vmatpush1.bf16.msra.mxu0 0
    %1035 = vmatprep.subr.bf16.mxu0 0
    %1036 = vmatpush1.bf16.msra.mxu0 0
    %1037 = vmatprep.subr.bf16.mxu0 0
    %1038 = vmatpush1.bf16.msra.mxu0 %v375
    %1039 = vmatprep.subr.bf16.mxu0 0
    %1040 = vmatpush1.bf16.msra.mxu0 %v374
    %1041 = vmatprep.subr.bf16.mxu0 0
    %1042 = vmatpush2.bf16.msra.mxu0 0
    %1043 = vmatprep.subr.bf16.mxu0 0
    %1044 = vmatpush2.bf16.msra.mxu0 0
    %1045 = vmatprep.subr.bf16.mxu0 0
    %1046 = vmatpush2.bf16.msra.mxu0 0
    %1047 = vmatprep.subr.bf16.mxu0 0
    %1048 = vmatpush2.bf16.msra.mxu0 0
    %1049 = vmatprep.subr.bf16.mxu0 0
    %1050 = vmatpush2.bf16.msra.mxu0 0
    %1051 = vmatprep.subr.bf16.mxu0 0
    %1052 = vmatpush2.bf16.msra.mxu0 0
    %1053 = vmatprep.subr.bf16.mxu0 0
    %1054 = vmatpush2.bf16.msra.mxu0 0
    %1055 = vmatprep.subr.bf16.mxu0 0
    %1056 = vmatpush2.bf16.msra.mxu0 0
    %1057 = vmatprep.mubr.bf16.mxu0 0
    %1058 = vmatmul.mubr.bf16.gmra.mxu0 %v1023
    %v1059 = vpop.f32.mrf.mxu0
    %v1060 = vadd.f32 0.0, %v1059
    %v1061 = vpop.f32.mrf.mxu0
    %v1062 = vpop.f32.mrf.mxu0
    %v1063 = vpop.f32.mrf.mxu0
    %1064 = vdwg.mxu0
    %v1065 = vld [vmem:[#allocation2 + $0x40] sm:$0xff]
    %v1066 = vadd.f32 %v1065, %v1013
    %v1067 = vld [vmem:[#allocation2 + $0x38] sm:$0xff]
    %v1068 = vadd.f32 %v1067, %v1060
    %v1069 = vxor.u32 %v1066, 2147483648
    %v1070 = vmul.f32 %v1069, 1.442695
    %v1071 = vpow.pop %v1070
    %v1072 = vadd.f32 %v1071, 1.0
    %v1073 = vrcp.pop %v1072
    %v1074 = vmul.f32 1.0, %v1073
    %v1075 = vtanh.pop %v1066
    %v1076 = vxor.u32 %v1068, 2147483648
    %v1077 = vmul.f32 %v1076, 1.442695
    %v1078 = vpow.pop %v1077
    %v1079 = vadd.f32 %v1078, 1.0
    %v1080 = vrcp.pop %v1079
    %v1081 = vmul.f32 1.0, %v1080
    %v1082 = vtanh.pop %v1068
    %v1083 = vmul.f32 %v1074, %v969
    %1085 = vrot.lane.b32.xlu0 %v1075, 32
    %v1086 = vpop.permute.xlu0 %1085
    %v1088 = vmul.f32 %v1074, %v1086
    %1090 = vrot.lane.b32.xlu0 %v1088, 32
    %v1091 = vpop.permute.xlu0 %1090
    %v1093 = vadd.f32 %v1083, %v1091
    %v1094 = vmul.f32 %v1081, %v970
    %1096 = vrot.lane.b32.xlu0 %v1082, 32
    %v1097 = vpop.permute.xlu0 %1096
    %v1099 = vmul.f32 %v1081, %v1097
    %1101 = vrot.lane.b32.xlu0 %v1099, 32
    %v1102 = vpop.permute.xlu0 %1101
    %v1104 = vadd.f32 %v1094, %v1102
    %v1105 = vtanh.pop %v1093
    %1107 = vrot.lane.b32.xlu0 %v1105, 32
    %v1108 = vpop.permute.xlu0 %1107
    %v1110 = vmul.f32 %v1074, %v1108
    %v1111 = vtanh.pop %v1104
    %1113 = vrot.lane.b32.xlu0 %v1111, 32
    %v1114 = vpop.permute.xlu0 %1113
    %v1116 = vmul.f32 %v1081, %v1114
    %v1117 = vsel %vm128, %v1110, 0.0
    %1119 = vrot.lane.b32.xlu0 %v1117, 64
    %v1120 = vpop.permute.xlu0 %1119
    %1122 = vst.msk [vmem:[#allocation3 + $0x20] sm:$0xff] %vm322, %v1120
    %v1123 = vsel %vm122, %v1116, 0.0
    %1125 = vrot.lane.b32.xlu0 %v1123, 96
    %v1126 = vpop.permute.xlu0 %1125
    %1128 = vst.msk [vmem:[#allocation3 + $0x18] sm:$0xff] %vm481, %v1126
    %v1129 = vsel %vm128, %v1110, %v967
    %v1130 = vsel %vm122, %v1116, %v968
    %v1131 = vsel %vm128, %v1093, %v969
    %v1132 = vsel %vm122, %v1104, %v970
    %v1133 = vpack.c.bf16 %v1129, %v1129
    %1135 = vrot.lane.b32.xlu0 %v1133, 64
    %v1136 = vpop.permute.xlu0 %1135
    %v1138 = vsel %vm322, %v1136, 0
    %1140 = vmatprep.subr.bf16.mxu0 0
    %1141 = vmatpush1.bf16.msra.mxu0 0
    %1142 = vmatprep.subr.bf16.mxu0 0
    %1143 = vmatpush1.bf16.msra.mxu0 0
    %1144 = vmatprep.subr.bf16.mxu0 0
    %1145 = vmatpush1.bf16.msra.mxu0 0
    %1146 = vmatprep.subr.bf16.mxu0 0
    %1147 = vmatpush1.bf16.msra.mxu0 0
    %1148 = vmatprep.subr.bf16.mxu0 0
    %1149 = vmatpush1.bf16.msra.mxu0 0
    %1150 = vmatprep.subr.bf16.mxu0 0
    %1151 = vmatpush1.bf16.msra.mxu0 0
    %1152 = vmatprep.subr.bf16.mxu0 0
    %1153 = vmatpush1.bf16.msra.mxu0 %v319
    %1154 = vmatprep.subr.bf16.mxu0 0
    %1155 = vmatpush1.bf16.msra.mxu0 %v318
    %1156 = vmatprep.subr.bf16.mxu0 0
    %1157 = vmatpush2.bf16.msra.mxu0 0
    %1158 = vmatprep.subr.bf16.mxu0 0
    %1159 = vmatpush2.bf16.msra.mxu0 0
    %1160 = vmatprep.subr.bf16.mxu0 0
    %1161 = vmatpush2.bf16.msra.mxu0 0
    %1162 = vmatprep.subr.bf16.mxu0 0
    %1163 = vmatpush2.bf16.msra.mxu0 0
    %1164 = vmatprep.subr.bf16.mxu0 0
    %1165 = vmatpush2.bf16.msra.mxu0 0
    %1166 = vmatprep.subr.bf16.mxu0 0
    %1167 = vmatpush2.bf16.msra.mxu0 0
    %1168 = vmatprep.subr.bf16.mxu0 0
    %1169 = vmatpush2.bf16.msra.mxu0 0
    %1170 = vmatprep.subr.bf16.mxu0 0
    %1171 = vmatpush2.bf16.msra.mxu0 0
    %1172 = vmatprep.mubr.bf16.mxu0 0
    %1173 = vmatmul.mubr.bf16.gmra.mxu0 %v1138
    %v1174 = vpop.f32.mrf.mxu0
    %v1175 = vadd.f32 0.0, %v1174
    %v1176 = vpop.f32.mrf.mxu0
    %v1177 = vpop.f32.mrf.mxu0
    %v1178 = vpop.f32.mrf.mxu0
    %1179 = vdwg.mxu0
    %v1180 = vpack.c.bf16 %v1130, %v1130
    %1182 = vrot.lane.b32.xlu0 %v1180, 64
    %v1183 = vpop.permute.xlu0 %1182
    %v1185 = vsel %vm322, %v1183, 0
    %1187 = vmatprep.subr.bf16.mxu0 0
    %1188 = vmatpush1.bf16.msra.mxu0 0
    %1189 = vmatprep.subr.bf16.mxu0 0
    %1190 = vmatpush1.bf16.msra.mxu0 0
    %1191 = vmatprep.subr.bf16.mxu0 0
    %1192 = vmatpush1.bf16.msra.mxu0 0
    %1193 = vmatprep.subr.bf16.mxu0 0
    %1194 = vmatpush1.bf16.msra.mxu0 0
    %1195 = vmatprep.subr.bf16.mxu0 0
    %1196 = vmatpush1.bf16.msra.mxu0 0
    %1197 = vmatprep.subr.bf16.mxu0 0
    %1198 = vmatpush1.bf16.msra.mxu0 0
    %1199 = vmatprep.subr.bf16.mxu0 0
    %1200 = vmatpush1.bf16.msra.mxu0 %v375
    %1201 = vmatprep.subr.bf16.mxu0 0
    %1202 = vmatpush1.bf16.msra.mxu0 %v374
    %1203 = vmatprep.subr.bf16.mxu0 0
    %1204 = vmatpush2.bf16.msra.mxu0 0
    %1205 = vmatprep.subr.bf16.mxu0 0
    %1206 = vmatpush2.bf16.msra.mxu0 0
    %1207 = vmatprep.subr.bf16.mxu0 0
    %1208 = vmatpush2.bf16.msra.mxu0 0
    %1209 = vmatprep.subr.bf16.mxu0 0
    %1210 = vmatpush2.bf16.msra.mxu0 0
    %1211 = vmatprep.subr.bf16.mxu0 0
    %1212 = vmatpush2.bf16.msra.mxu0 0
    %1213 = vmatprep.subr.bf16.mxu0 0
    %1214 = vmatpush2.bf16.msra.mxu0 0
    %1215 = vmatprep.subr.bf16.mxu0 0
    %1216 = vmatpush2.bf16.msra.mxu0 0
    %1217 = vmatprep.subr.bf16.mxu0 0
    %1218 = vmatpush2.bf16.msra.mxu0 0
    %1219 = vmatprep.mubr.bf16.mxu0 0
    %1220 = vmatmul.mubr.bf16.gmra.mxu0 %v1185
    %v1221 = vpop.f32.mrf.mxu0
    %v1222 = vadd.f32 0.0, %v1221
    %v1223 = vpop.f32.mrf.mxu0
    %v1224 = vpop.f32.mrf.mxu0
    %v1225 = vpop.f32.mrf.mxu0
    %1226 = vdwg.mxu0
    %v1227 = vld [vmem:[#allocation2 + $0x50] sm:$0xff]
    %v1228 = vadd.f32 %v1227, %v1175
    %v1229 = vld [vmem:[#allocation2 + $0x28] sm:$0xff]
    %v1230 = vadd.f32 %v1229, %v1222
    %v1231 = vxor.u32 %v1228, 2147483648
    %v1232 = vmul.f32 %v1231, 1.442695
    %v1233 = vpow.pop %v1232
    %v1234 = vadd.f32 %v1233, 1.0
    %v1235 = vrcp.pop %v1234
    %v1236 = vmul.f32 1.0, %v1235
    %v1237 = vtanh.pop %v1228
    %v1238 = vxor.u32 %v1230, 2147483648
    %v1239 = vmul.f32 %v1238, 1.442695
    %v1240 = vpow.pop %v1239
    %v1241 = vadd.f32 %v1240, 1.0
    %v1242 = vrcp.pop %v1241
    %v1243 = vmul.f32 1.0, %v1242
    %v1244 = vtanh.pop %v1230
    %v1245 = vmul.f32 %v1236, %v1131
    %1247 = vrot.lane.b32.xlu0 %v1237, 32
    %v1248 = vpop.permute.xlu0 %1247
    %v1250 = vmul.f32 %v1236, %v1248
    %1252 = vrot.lane.b32.xlu0 %v1250, 32
    %v1253 = vpop.permute.xlu0 %1252
    %v1255 = vadd.f32 %v1245, %v1253
    %v1256 = vmul.f32 %v1243, %v1132
    %1258 = vrot.lane.b32.xlu0 %v1244, 32
    %v1259 = vpop.permute.xlu0 %1258
    %v1261 = vmul.f32 %v1243, %v1259
    %1263 = vrot.lane.b32.xlu0 %v1261, 32
    %v1264 = vpop.permute.xlu0 %1263
    %v1266 = vadd.f32 %v1256, %v1264
    %v1267 = vtanh.pop %v1255
    %1269 = vrot.lane.b32.xlu0 %v1267, 32
    %v1270 = vpop.permute.xlu0 %1269
    %v1272 = vmul.f32 %v1236, %v1270
    %v1273 = vtanh.pop %v1266
    %1275 = vrot.lane.b32.xlu0 %v1273, 32
    %v1276 = vpop.permute.xlu0 %1275
    %v1278 = vmul.f32 %v1243, %v1276
    %v1279 = vsel %vm134, %v1272, 0.0
    %1281 = vrot.lane.b32.xlu0 %v1279, 64
    %v1282 = vpop.permute.xlu0 %1281
    %1284 = vst.msk [vmem:[#allocation3 + $0x28] sm:$0xff] %vm322, %v1282
    %v1285 = vsel %vm116, %v1278, 0.0
    %1287 = vrot.lane.b32.xlu0 %v1285, 96
    %v1288 = vpop.permute.xlu0 %1287
    %1290 = vst.msk [vmem:[#allocation3 + $0x10] sm:$0xff] %vm481, %v1288
    %v1291 = vsel %vm134, %v1272, %v1129
    %v1292 = vsel %vm116, %v1278, %v1130
    %v1293 = vsel %vm134, %v1255, %v1131
    %v1294 = vsel %vm116, %v1266, %v1132
    %v1295 = vpack.c.bf16 %v1291, %v1291
    %1297 = vrot.lane.b32.xlu0 %v1295, 64
    %v1298 = vpop.permute.xlu0 %1297
    %v1300 = vsel %vm322, %v1298, 0
    %1302 = vmatprep.subr.bf16.mxu0 0
    %1303 = vmatpush1.bf16.msra.mxu0 0
    %1304 = vmatprep.subr.bf16.mxu0 0
    %1305 = vmatpush1.bf16.msra.mxu0 0
    %1306 = vmatprep.subr.bf16.mxu0 0
    %1307 = vmatpush1.bf16.msra.mxu0 0
    %1308 = vmatprep.subr.bf16.mxu0 0
    %1309 = vmatpush1.bf16.msra.mxu0 0
    %1310 = vmatprep.subr.bf16.mxu0 0
    %1311 = vmatpush1.bf16.msra.mxu0 0
    %1312 = vmatprep.subr.bf16.mxu0 0
    %1313 = vmatpush1.bf16.msra.mxu0 0
    %1314 = vmatprep.subr.bf16.mxu0 0
    %1315 = vmatpush1.bf16.msra.mxu0 %v319
    %1316 = vmatprep.subr.bf16.mxu0 0
    %1317 = vmatpush1.bf16.msra.mxu0 %v318
    %1318 = vmatprep.subr.bf16.mxu0 0
    %1319 = vmatpush2.bf16.msra.mxu0 0
    %1320 = vmatprep.subr.bf16.mxu0 0
    %1321 = vmatpush2.bf16.msra.mxu0 0
    %1322 = vmatprep.subr.bf16.mxu0 0
    %1323 = vmatpush2.bf16.msra.mxu0 0
    %1324 = vmatprep.subr.bf16.mxu0 0
    %1325 = vmatpush2.bf16.msra.mxu0 0
    %1326 = vmatprep.subr.bf16.mxu0 0
    %1327 = vmatpush2.bf16.msra.mxu0 0
    %1328 = vmatprep.subr.bf16.mxu0 0
    %1329 = vmatpush2.bf16.msra.mxu0 0
    %1330 = vmatprep.subr.bf16.mxu0 0
    %1331 = vmatpush2.bf16.msra.mxu0 0
    %1332 = vmatprep.subr.bf16.mxu0 0
    %1333 = vmatpush2.bf16.msra.mxu0 0
    %1334 = vmatprep.mubr.bf16.mxu0 0
    %1335 = vmatmul.mubr.bf16.gmra.mxu0 %v1300
    %v1336 = vpop.f32.mrf.mxu0
    %v1337 = vadd.f32 0.0, %v1336
    %v1338 = vpop.f32.mrf.mxu0
    %v1339 = vpop.f32.mrf.mxu0
    %v1340 = vpop.f32.mrf.mxu0
    %1341 = vdwg.mxu0
    %v1342 = vpack.c.bf16 %v1292, %v1292
    %1344 = vrot.lane.b32.xlu0 %v1342, 64
    %v1345 = vpop.permute.xlu0 %1344
    %v1347 = vsel %vm322, %v1345, 0
    %1349 = vmatprep.subr.bf16.mxu0 0
    %1350 = vmatpush1.bf16.msra.mxu0 0
    %1351 = vmatprep.subr.bf16.mxu0 0
    %1352 = vmatpush1.bf16.msra.mxu0 0
    %1353 = vmatprep.subr.bf16.mxu0 0
    %1354 = vmatpush1.bf16.msra.mxu0 0
    %1355 = vmatprep.subr.bf16.mxu0 0
    %1356 = vmatpush1.bf16.msra.mxu0 0
    %1357 = vmatprep.subr.bf16.mxu0 0
    %1358 = vmatpush1.bf16.msra.mxu0 0
    %1359 = vmatprep.subr.bf16.mxu0 0
    %1360 = vmatpush1.bf16.msra.mxu0 0
    %1361 = vmatprep.subr.bf16.mxu0 0
    %1362 = vmatpush1.bf16.msra.mxu0 %v375
    %1363 = vmatprep.subr.bf16.mxu0 0
    %1364 = vmatpush1.bf16.msra.mxu0 %v374
    %1365 = vmatprep.subr.bf16.mxu0 0
    %1366 = vmatpush2.bf16.msra.mxu0 0
    %1367 = vmatprep.subr.bf16.mxu0 0
    %1368 = vmatpush2.bf16.msra.mxu0 0
    %1369 = vmatprep.subr.bf16.mxu0 0
    %1370 = vmatpush2.bf16.msra.mxu0 0
    %1371 = vmatprep.subr.bf16.mxu0 0
    %1372 = vmatpush2.bf16.msra.mxu0 0
    %1373 = vmatprep.subr.bf16.mxu0 0
    %1374 = vmatpush2.bf16.msra.mxu0 0
    %1375 = vmatprep.subr.bf16.mxu0 0
    %1376 = vmatpush2.bf16.msra.mxu0 0
    %1377 = vmatprep.subr.bf16.mxu0 0
    %1378 = vmatpush2.bf16.msra.mxu0 0
    %1379 = vmatprep.subr.bf16.mxu0 0
    %1380 = vmatpush2.bf16.msra.mxu0 0
    %1381 = vmatprep.mubr.bf16.mxu0 0
    %1382 = vmatmul.mubr.bf16.gmra.mxu0 %v1347
    %v1383 = vpop.f32.mrf.mxu0
    %v1384 = vadd.f32 0.0, %v1383
    %v1385 = vpop.f32.mrf.mxu0
    %v1386 = vpop.f32.mrf.mxu0
    %v1387 = vpop.f32.mrf.mxu0
    %1388 = vdwg.mxu0
    %v1389 = vld [vmem:[#allocation2 + $0x60] sm:$0xff]
    %v1390 = vadd.f32 %v1389, %v1337
    %v1391 = vld [vmem:[#allocation2 + $0x18] sm:$0xff]
    %v1392 = vadd.f32 %v1391, %v1384
    %v1393 = vxor.u32 %v1390, 2147483648
    %v1394 = vmul.f32 %v1393, 1.442695
    %v1395 = vpow.pop %v1394
    %v1396 = vadd.f32 %v1395, 1.0
    %v1397 = vrcp.pop %v1396
    %v1398 = vmul.f32 1.0, %v1397
    %v1399 = vtanh.pop %v1390
    %v1400 = vxor.u32 %v1392, 2147483648
    %v1401 = vmul.f32 %v1400, 1.442695
    %v1402 = vpow.pop %v1401
    %v1403 = vadd.f32 %v1402, 1.0
    %v1404 = vrcp.pop %v1403
    %v1405 = vmul.f32 1.0, %v1404
    %v1406 = vtanh.pop %v1392
    %v1407 = vmul.f32 %v1398, %v1293
    %1409 = vrot.lane.b32.xlu0 %v1399, 32
    %v1410 = vpop.permute.xlu0 %1409
    %v1412 = vmul.f32 %v1398, %v1410
    %1414 = vrot.lane.b32.xlu0 %v1412, 32
    %v1415 = vpop.permute.xlu0 %1414
    %v1417 = vadd.f32 %v1407, %v1415
    %v1418 = vmul.f32 %v1405, %v1294
    %1420 = vrot.lane.b32.xlu0 %v1406, 32
    %v1421 = vpop.permute.xlu0 %1420
    %v1423 = vmul.f32 %v1405, %v1421
    %1425 = vrot.lane.b32.xlu0 %v1423, 32
    %v1426 = vpop.permute.xlu0 %1425
    %v1428 = vadd.f32 %v1418, %v1426
    %v1429 = vtanh.pop %v1417
    %1431 = vrot.lane.b32.xlu0 %v1429, 32
    %v1432 = vpop.permute.xlu0 %1431
    %v1434 = vmul.f32 %v1398, %v1432
    %v1435 = vtanh.pop %v1428
    %1437 = vrot.lane.b32.xlu0 %v1435, 32
    %v1438 = vpop.permute.xlu0 %1437
    %v1440 = vmul.f32 %v1405, %v1438
    %v1441 = vsel %vm140, %v1434, 0.0
    %1443 = vrot.lane.b32.xlu0 %v1441, 64
    %v1444 = vpop.permute.xlu0 %1443
    %1446 = vst.msk [vmem:[#allocation3 + $0x30] sm:$0xff] %vm322, %v1444
    %v1447 = vsel %vm110, %v1440, 0.0
    %1449 = vrot.lane.b32.xlu0 %v1447, 96
    %v1450 = vpop.permute.xlu0 %1449
    %1452 = vst.msk [vmem:[#allocation3 + $0x8] sm:$0xff] %vm481, %v1450
    %v1453 = vsel %vm140, %v1434, %v1291
    %v1454 = vsel %vm110, %v1440, %v1292
    %v1455 = vsel %vm140, %v1417, %v1293
    %v1456 = vsel %vm110, %v1428, %v1294
    %v1457 = vpack.c.bf16 %v1453, %v1453
    %1459 = vrot.lane.b32.xlu0 %v1457, 64
    %v1460 = vpop.permute.xlu0 %1459
    %v1462 = vsel %vm322, %v1460, 0
    %1464 = vmatprep.subr.bf16.mxu0 0
    %1465 = vmatpush1.bf16.msra.mxu0 0
    %1466 = vmatprep.subr.bf16.mxu0 0
    %1467 = vmatpush1.bf16.msra.mxu0 0
    %1468 = vmatprep.subr.bf16.mxu0 0
    %1469 = vmatpush1.bf16.msra.mxu0 0
    %1470 = vmatprep.subr.bf16.mxu0 0
    %1471 = vmatpush1.bf16.msra.mxu0 0
    %1472 = vmatprep.subr.bf16.mxu0 0
    %1473 = vmatpush1.bf16.msra.mxu0 0
    %1474 = vmatprep.subr.bf16.mxu0 0
    %1475 = vmatpush1.bf16.msra.mxu0 0
    %1476 = vmatprep.subr.bf16.mxu0 0
    %1477 = vmatpush1.bf16.msra.mxu0 %v319
    %1478 = vmatprep.subr.bf16.mxu0 0
    %1479 = vmatpush1.bf16.msra.mxu0 %v318
    %1480 = vmatprep.subr.bf16.mxu0 0
    %1481 = vmatpush2.bf16.msra.mxu0 0
    %1482 = vmatprep.subr.bf16.mxu0 0
    %1483 = vmatpush2.bf16.msra.mxu0 0
    %1484 = vmatprep.subr.bf16.mxu0 0
    %1485 = vmatpush2.bf16.msra.mxu0 0
    %1486 = vmatprep.subr.bf16.mxu0 0
    %1487 = vmatpush2.bf16.msra.mxu0 0
    %1488 = vmatprep.subr.bf16.mxu0 0
    %1489 = vmatpush2.bf16.msra.mxu0 0
    %1490 = vmatprep.subr.bf16.mxu0 0
    %1491 = vmatpush2.bf16.msra.mxu0 0
    %1492 = vmatprep.subr.bf16.mxu0 0
    %1493 = vmatpush2.bf16.msra.mxu0 0
    %1494 = vmatprep.subr.bf16.mxu0 0
    %1495 = vmatpush2.bf16.msra.mxu0 0
    %1496 = vmatprep.mubr.bf16.mxu0 0
    %1497 = vmatmul.mubr.bf16.gmra.mxu0 %v1462
    %v1498 = vpop.f32.mrf.mxu0
    %v1499 = vadd.f32 0.0, %v1498
    %v1500 = vpop.f32.mrf.mxu0
    %v1501 = vpop.f32.mrf.mxu0
    %v1502 = vpop.f32.mrf.mxu0
    %1503 = vdwg.mxu0
    %v1504 = vpack.c.bf16 %v1454, %v1454
    %1506 = vrot.lane.b32.xlu0 %v1504, 64
    %v1507 = vpop.permute.xlu0 %1506
    %v1509 = vsel %vm322, %v1507, 0
    %1511 = vmatprep.subr.bf16.mxu0 0
    %1512 = vmatpush1.bf16.msra.mxu0 0
    %1513 = vmatprep.subr.bf16.mxu0 0
    %1514 = vmatpush1.bf16.msra.mxu0 0
    %1515 = vmatprep.subr.bf16.mxu0 0
    %1516 = vmatpush1.bf16.msra.mxu0 0
    %1517 = vmatprep.subr.bf16.mxu0 0
    %1518 = vmatpush1.bf16.msra.mxu0 0
    %1519 = vmatprep.subr.bf16.mxu0 0
    %1520 = vmatpush1.bf16.msra.mxu0 0
    %1521 = vmatprep.subr.bf16.mxu0 0
    %1522 = vmatpush1.bf16.msra.mxu0 0
    %1523 = vmatprep.subr.bf16.mxu0 0
    %1524 = vmatpush1.bf16.msra.mxu0 %v375
    %1525 = vmatprep.subr.bf16.mxu0 0
    %1526 = vmatpush1.bf16.msra.mxu0 %v374
    %1527 = vmatprep.subr.bf16.mxu0 0
    %1528 = vmatpush2.bf16.msra.mxu0 0
    %1529 = vmatprep.subr.bf16.mxu0 0
    %1530 = vmatpush2.bf16.msra.mxu0 0
    %1531 = vmatprep.subr.bf16.mxu0 0
    %1532 = vmatpush2.bf16.msra.mxu0 0
    %1533 = vmatprep.subr.bf16.mxu0 0
    %1534 = vmatpush2.bf16.msra.mxu0 0
    %1535 = vmatprep.subr.bf16.mxu0 0
    %1536 = vmatpush2.bf16.msra.mxu0 0
    %1537 = vmatprep.subr.bf16.mxu0 0
    %1538 = vmatpush2.bf16.msra.mxu0 0
    %1539 = vmatprep.subr.bf16.mxu0 0
    %1540 = vmatpush2.bf16.msra.mxu0 0
    %1541 = vmatprep.subr.bf16.mxu0 0
    %1542 = vmatpush2.bf16.msra.mxu0 0
    %1543 = vmatprep.mubr.bf16.mxu0 0
    %1544 = vmatmul.mubr.bf16.gmra.mxu0 %v1509
    %v1545 = vpop.f32.mrf.mxu0
    %v1546 = vadd.f32 0.0, %v1545
    %v1547 = vpop.f32.mrf.mxu0
    %v1548 = vpop.f32.mrf.mxu0
    %v1549 = vpop.f32.mrf.mxu0
    %1550 = vdwg.mxu0
    %v1551 = vld [vmem:[#allocation2 + $0x70] sm:$0xff]
    %v1552 = vadd.f32 %v1551, %v1499
    %v1553 = vld [vmem:[#allocation2 + $0x8] sm:$0xff]
    %v1554 = vadd.f32 %v1553, %v1546
    %v1555 = vxor.u32 %v1552, 2147483648
    %v1556 = vmul.f32 %v1555, 1.442695
    %v1557 = vpow.pop %v1556
    %v1558 = vadd.f32 %v1557, 1.0
    %v1559 = vrcp.pop %v1558
    %v1560 = vmul.f32 1.0, %v1559
    %v1561 = vtanh.pop %v1552
    %v1562 = vxor.u32 %v1554, 2147483648
    %v1563 = vmul.f32 %v1562, 1.442695
    %v1564 = vpow.pop %v1563
    %v1565 = vadd.f32 %v1564, 1.0
    %v1566 = vrcp.pop %v1565
    %v1567 = vmul.f32 1.0, %v1566
    %v1568 = vtanh.pop %v1554
    %v1569 = vmul.f32 %v1560, %v1455
    %1571 = vrot.lane.b32.xlu0 %v1561, 32
    %v1572 = vpop.permute.xlu0 %1571
    %v1574 = vmul.f32 %v1560, %v1572
    %1576 = vrot.lane.b32.xlu0 %v1574, 32
    %v1577 = vpop.permute.xlu0 %1576
    %v1579 = vadd.f32 %v1569, %v1577
    %v1580 = vmul.f32 %v1567, %v1456
    %1582 = vrot.lane.b32.xlu0 %v1568, 32
    %v1583 = vpop.permute.xlu0 %1582
    %v1585 = vmul.f32 %v1567, %v1583
    %1587 = vrot.lane.b32.xlu0 %v1585, 32
    %v1588 = vpop.permute.xlu0 %1587
    %v1590 = vadd.f32 %v1580, %v1588
    %v1591 = vtanh.pop %v1579
    %1593 = vrot.lane.b32.xlu0 %v1591, 32
    %v1594 = vpop.permute.xlu0 %1593
    %v1596 = vmul.f32 %v1560, %v1594
    %v1597 = vtanh.pop %v1590
    %1599 = vrot.lane.b32.xlu0 %v1597, 32
    %v1600 = vpop.permute.xlu0 %1599
    %v1602 = vmul.f32 %v1567, %v1600
    %v1603 = vsel %vm146, %v1596, 0.0
    %1605 = vrot.lane.b32.xlu0 %v1603, 64
    %v1606 = vpop.permute.xlu0 %1605
    %1608 = vst.msk [vmem:[#allocation3 + $0x38] sm:$0xff] %vm322, %v1606
    %v1609 = vsel %vm104, %v1602, 0.0
    %1611 = vrot.lane.b32.xlu0 %v1609, 96
    %v1612 = vpop.permute.xlu0 %1611
    %1614 = vst.msk [vmem:[#allocation3] sm:$0xff] %vm481, %v1612
    %v1615 = vld [vmem:[#allocation3] sm:$0xff]
    %v1616 = vld [vmem:[#allocation3 + $0x8] sm:$0xff]
    %v1617 = vld [vmem:[#allocation3 + $0x10] sm:$0xff]
    %v1618 = vld [vmem:[#allocation3 + $0x18] sm:$0xff]
    %v1619 = vld [vmem:[#allocation3 + $0x20] sm:$0xff]
    %v1620 = vld [vmem:[#allocation3 + $0x28] sm:$0xff]
    %v1621 = vld [vmem:[#allocation3 + $0x30] sm:$0xff]
    %v1622 = vld [vmem:[#allocation3 + $0x38] sm:$0xff]
    %v1623 = vpack.c.bf16 %v1616, %v1615
    %v1624 = vpack.c.bf16 %v1618, %v1617
    %v1625 = vpack.c.bf16 %v1620, %v1619
    %v1626 = vpack.c.bf16 %v1622, %v1621
    %v1627 = vld [vmem:[#allocation8] sm:$0xff]
    %v1628 = vld [vmem:[#allocation8 + $0x8] sm:$0xff]
    %v1629 = vld [vmem:[#allocation8 + $0x10] sm:$0xff]
    %v1630 = vld [vmem:[#allocation8 + $0x18] sm:$0xff]
    %v1631 = vld [vmem:[#allocation8 + $0x20] sm:$0xff]
    %v1632 = vld [vmem:[#allocation8 + $0x28] sm:$0xff]
    %v1633 = vld [vmem:[#allocation8 + $0x30] sm:$0xff]
    %v1634 = vld [vmem:[#allocation8 + $0x38] sm:$0xff]
    %v1635 = vld [vmem:[%s9] sm:$0x3]
    %v1637 = vlaneseq
    %v1638 = vshrl.u32 %v1637, 7
    %v1639 = vsub.s32 0, %v1638
    %v1640 = vrot.slane %v1635, %v1639
    %v1641 = vlaneseq
    %v1642 = vshrl.u32 %v1641, 7
    %v1643 = vsub.s32 1, %v1642
    %v1644 = vrot.slane %v1635, %v1643
    %v1655 = vunpack.c.l.b16 %v1627
    %v1656 = vunpack.c.h.b16 %v1627
    %v1657 = vunpack.c.l.b16 %v1628
    %v1658 = vunpack.c.h.b16 %v1628
    %v1659 = vunpack.c.l.b16 %v1629
    %v1660 = vunpack.c.h.b16 %v1629
    %v1661 = vunpack.c.l.b16 %v1630
    %v1662 = vunpack.c.h.b16 %v1630
    %v1663 = vunpack.c.l.b16 %v1631
    %v1664 = vunpack.c.h.b16 %v1631
    %v1665 = vunpack.c.l.b16 %v1632
    %v1666 = vunpack.c.h.b16 %v1632
    %v1667 = vunpack.c.l.b16 %v1633
    %v1668 = vunpack.c.h.b16 %v1633
    %v1669 = vunpack.c.l.b16 %v1634
    %v1670 = vunpack.c.h.b16 %v1634
    %v1671 = vpack.c.b16 %v1657, %v1655
    %v1672 = vpack.c.b16 %v1658, %v1656
    %v1673 = vpack.c.b16 %v1661, %v1659
    %v1674 = vpack.c.b16 %v1662, %v1660
    %v1675 = vpack.c.b16 %v1665, %v1663
    %v1676 = vpack.c.b16 %v1666, %v1664
    %v1677 = vpack.c.b16 %v1669, %v1667
    %v1678 = vpack.c.b16 %v1670, %v1668
    %vm1687 = vcmask 523264
    %v1689 = vsel %vm1687, %v1623, 0
    %v1692 = vsel %vm1687, %v1624, 0
    %v1695 = vsel %vm1687, %v1625, 0
    %v1698 = vsel %vm1687, %v1626, 0
    %1700 = vmatprep.subr.bf16.mxu0 0
    %1701 = vmatpush1.bf16.msra.mxu0 0
    %1702 = vmatprep.subr.bf16.mxu0 0
    %1703 = vmatpush1.bf16.msra.mxu0 0
    %1704 = vmatprep.subr.bf16.mxu0 0
    %1705 = vmatpush1.bf16.msra.mxu0 0
    %1706 = vmatprep.subr.bf16.mxu0 0
    %1707 = vmatpush1.bf16.msra.mxu0 0
    %1708 = vmatprep.subr.bf16.mxu0 %v1678
    %1709 = vmatpush1.bf16.msra.mxu0 %v1677
    %1710 = vmatprep.subr.bf16.mxu0 %v1676
    %1711 = vmatpush1.bf16.msra.mxu0 %v1675
    %1712 = vmatprep.subr.bf16.mxu0 %v1674
    %1713 = vmatpush1.bf16.msra.mxu0 %v1673
    %1714 = vmatprep.subr.bf16.mxu0 %v1672
    %1715 = vmatpush1.bf16.msra.mxu0 %v1671
    %1716 = vmatprep.subr.bf16.mxu0 0
    %1717 = vmatpush2.bf16.msra.mxu0 0
    %1718 = vmatprep.subr.bf16.mxu0 0
    %1719 = vmatpush2.bf16.msra.mxu0 0
    %1720 = vmatprep.subr.bf16.mxu0 0
    %1721 = vmatpush2.bf16.msra.mxu0 0
    %1722 = vmatprep.subr.bf16.mxu0 0
    %1723 = vmatpush2.bf16.msra.mxu0 0
    %1724 = vmatprep.subr.bf16.mxu0 0
    %1725 = vmatpush2.bf16.msra.mxu0 0
    %1726 = vmatprep.subr.bf16.mxu0 0
    %1727 = vmatpush2.bf16.msra.mxu0 0
    %1728 = vmatprep.subr.bf16.mxu0 0
    %1729 = vmatpush2.bf16.msra.mxu0 0
    %1730 = vmatprep.subr.bf16.mxu0 0
    %1731 = vmatpush2.bf16.msra.mxu0 0
    %1732 = vmatprep.mubr.bf16.mxu0 0
    %1733 = vmatmul.mubr.bf16.gmra.mxu0 %v1689
    %v1734 = vpop.f32.mrf.mxu0
    %v1735 = vadd.f32 %v1640, %v1734
    %v1736 = vpop.f32.mrf.mxu0
    %v1737 = vadd.f32 %v1644, %v1736
    %v1738 = vpop.f32.mrf.mxu0
    %v1739 = vadd.f32 %v1640, %v1738
    %v1740 = vpop.f32.mrf.mxu0
    %v1741 = vadd.f32 %v1644, %v1740
    %1742 = vmatprep.mubr.bf16.mxu0 0
    %1743 = vmatmul.mubr.bf16.gmra.mxu0 %v1692
    %v1744 = vpop.f32.mrf.mxu0
    %v1745 = vadd.f32 %v1640, %v1744
    %v1746 = vpop.f32.mrf.mxu0
    %v1747 = vadd.f32 %v1644, %v1746
    %v1748 = vpop.f32.mrf.mxu0
    %v1749 = vadd.f32 %v1640, %v1748
    %v1750 = vpop.f32.mrf.mxu0
    %v1751 = vadd.f32 %v1644, %v1750
    %1752 = vmatprep.mubr.bf16.mxu0 0
    %1753 = vmatmul.mubr.bf16.gmra.mxu0 %v1695
    %v1754 = vpop.f32.mrf.mxu0
    %v1755 = vadd.f32 %v1640, %v1754
    %v1756 = vpop.f32.mrf.mxu0
    %v1757 = vadd.f32 %v1644, %v1756
    %v1758 = vpop.f32.mrf.mxu0
    %v1759 = vadd.f32 %v1640, %v1758
    %v1760 = vpop.f32.mrf.mxu0
    %v1761 = vadd.f32 %v1644, %v1760
    %1762 = vmatprep.mubr.bf16.mxu0 0
    %1763 = vmatmul.mubr.bf16.gmra.mxu0 %v1698
    %v1764 = vpop.f32.mrf.mxu0
    %v1765 = vadd.f32 %v1640, %v1764
    %v1766 = vpop.f32.mrf.mxu0
    %v1767 = vadd.f32 %v1644, %v1766
    %v1768 = vpop.f32.mrf.mxu0
    %v1769 = vadd.f32 %v1640, %v1768
    %v1770 = vpop.f32.mrf.mxu0
    %v1771 = vadd.f32 %v1644, %v1770
    %1772 = vdwg.mxu0
    %1773 = vst [vmem:[#allocation2] sm:$0xff] %v1735
    %1774 = vst [vmem:[#allocation2 + $0x8] sm:$0xff] %v1737
    %1775 = vst [vmem:[#allocation2 + $0x10] sm:$0xff] %v1739
    %1776 = vst [vmem:[#allocation2 + $0x18] sm:$0xff] %v1741
    %1777 = vst [vmem:[#allocation2 + $0x20] sm:$0xff] %v1745
    %1778 = vst [vmem:[#allocation2 + $0x28] sm:$0xff] %v1747
    %1779 = vst [vmem:[#allocation2 + $0x30] sm:$0xff] %v1749
    %1780 = vst [vmem:[#allocation2 + $0x38] sm:$0xff] %v1751
    %1781 = vst [vmem:[#allocation2 + $0x40] sm:$0xff] %v1755
    %1782 = vst [vmem:[#allocation2 + $0x48] sm:$0xff] %v1757
    %1783 = vst [vmem:[#allocation2 + $0x50] sm:$0xff] %v1759
    %1784 = vst [vmem:[#allocation2 + $0x58] sm:$0xff] %v1761
    %1785 = vst [vmem:[#allocation2 + $0x60] sm:$0xff] %v1765
    %1786 = vst [vmem:[#allocation2 + $0x68] sm:$0xff] %v1767
    %1787 = vst [vmem:[#allocation2 + $0x70] sm:$0xff] %v1769
    %1788 = vst [vmem:[#allocation2 + $0x78] sm:$0xff] %v1771
    %v1789 = vld [vmem:[#allocation10] sm:$0xf]
    %v1790 = vld [vmem:[#allocation10 + $0x4] sm:$0xf]
    %v1791 = vld [vmem:[#allocation10 + $0x8] sm:$0xf]
    %v1792 = vld [vmem:[#allocation10 + $0xc] sm:$0xf]
    %v1793 = vld [vmem:[#allocation11] sm:$0xf]
    %v1794 = vld [vmem:[#allocation11 + $0x4] sm:$0xf]
    %v1795 = vld [vmem:[#allocation11 + $0x8] sm:$0xf]
    %v1796 = vld [vmem:[#allocation11 + $0xc] sm:$0xf]
    %v1801 = vunpack.c.l.b16 %v1789
    %v1802 = vunpack.c.l.b16 %v1790
    %v1803 = vunpack.c.l.b16 %v1791
    %v1804 = vunpack.c.l.b16 %v1792
    %v1805 = vpack.c.b16 %v1802, %v1801
    %v1806 = vpack.c.b16 %v1804, %v1803
    %1809 = vmatprep.subr.bf16.mxu0 0
    %1810 = vmatpush1.bf16.msra.mxu0 0
    %1811 = vmatprep.subr.bf16.mxu0 0
    %1812 = vmatpush1.bf16.msra.mxu0 0
    %1813 = vmatprep.subr.bf16.mxu0 0
    %1814 = vmatpush1.bf16.msra.mxu0 0
    %1815 = vmatprep.subr.bf16.mxu0 0
    %1816 = vmatpush1.bf16.msra.mxu0 0
    %1817 = vmatprep.subr.bf16.mxu0 0
    %1818 = vmatpush1.bf16.msra.mxu0 0
    %1819 = vmatprep.subr.bf16.mxu0 0
    %1820 = vmatpush1.bf16.msra.mxu0 0
    %1821 = vmatprep.subr.bf16.mxu0 0
    %1822 = vmatpush1.bf16.msra.mxu0 %v1806
    %1823 = vmatprep.subr.bf16.mxu0 0
    %1824 = vmatpush1.bf16.msra.mxu0 %v1805
    %1825 = vmatprep.subr.bf16.mxu0 0
    %1826 = vmatpush2.bf16.msra.mxu0 0
    %1827 = vmatprep.subr.bf16.mxu0 0
    %1828 = vmatpush2.bf16.msra.mxu0 0
    %1829 = vmatprep.subr.bf16.mxu0 0
    %1830 = vmatpush2.bf16.msra.mxu0 0
    %1831 = vmatprep.subr.bf16.mxu0 0
    %1832 = vmatpush2.bf16.msra.mxu0 0
    %1833 = vmatprep.subr.bf16.mxu0 0
    %1834 = vmatpush2.bf16.msra.mxu0 0
    %1835 = vmatprep.subr.bf16.mxu0 0
    %1836 = vmatpush2.bf16.msra.mxu0 0
    %1837 = vmatprep.subr.bf16.mxu0 0
    %1838 = vmatpush2.bf16.msra.mxu0 0
    %1839 = vmatprep.subr.bf16.mxu0 0
    %1840 = vmatpush2.bf16.msra.mxu0 0
    %1841 = vmatprep.mubr.bf16.mxu0 0
    %1842 = vmatmul.mubr.bf16.gmra.mxu0 %v324
    %v1843 = vpop.f32.mrf.mxu0
    %v1844 = vadd.f32 0.0, %v1843
    %v1845 = vpop.f32.mrf.mxu0
    %v1846 = vpop.f32.mrf.mxu0
    %v1847 = vpop.f32.mrf.mxu0
    %1848 = vdwg.mxu0
    %v1853 = vunpack.c.l.b16 %v1793
    %v1854 = vunpack.c.l.b16 %v1794
    %v1855 = vunpack.c.l.b16 %v1795
    %v1856 = vunpack.c.l.b16 %v1796
    %v1857 = vpack.c.b16 %v1854, %v1853
    %v1858 = vpack.c.b16 %v1856, %v1855
    %1861 = vmatprep.subr.bf16.mxu0 0
    %1862 = vmatpush1.bf16.msra.mxu0 0
    %1863 = vmatprep.subr.bf16.mxu0 0
    %1864 = vmatpush1.bf16.msra.mxu0 0
    %1865 = vmatprep.subr.bf16.mxu0 0
    %1866 = vmatpush1.bf16.msra.mxu0 0
    %1867 = vmatprep.subr.bf16.mxu0 0
    %1868 = vmatpush1.bf16.msra.mxu0 0
    %1869 = vmatprep.subr.bf16.mxu0 0
    %1870 = vmatpush1.bf16.msra.mxu0 0
    %1871 = vmatprep.subr.bf16.mxu0 0
    %1872 = vmatpush1.bf16.msra.mxu0 0
    %1873 = vmatprep.subr.bf16.mxu0 0
    %1874 = vmatpush1.bf16.msra.mxu0 %v1858
    %1875 = vmatprep.subr.bf16.mxu0 0
    %1876 = vmatpush1.bf16.msra.mxu0 %v1857
    %1877 = vmatprep.subr.bf16.mxu0 0
    %1878 = vmatpush2.bf16.msra.mxu0 0
    %1879 = vmatprep.subr.bf16.mxu0 0
    %1880 = vmatpush2.bf16.msra.mxu0 0
    %1881 = vmatprep.subr.bf16.mxu0 0
    %1882 = vmatpush2.bf16.msra.mxu0 0
    %1883 = vmatprep.subr.bf16.mxu0 0
    %1884 = vmatpush2.bf16.msra.mxu0 0
    %1885 = vmatprep.subr.bf16.mxu0 0
    %1886 = vmatpush2.bf16.msra.mxu0 0
    %1887 = vmatprep.subr.bf16.mxu0 0
    %1888 = vmatpush2.bf16.msra.mxu0 0
    %1889 = vmatprep.subr.bf16.mxu0 0
    %1890 = vmatpush2.bf16.msra.mxu0 0
    %1891 = vmatprep.subr.bf16.mxu0 0
    %1892 = vmatpush2.bf16.msra.mxu0 0
    %1893 = vmatprep.mubr.bf16.mxu0 0
    %1894 = vmatmul.mubr.bf16.gmra.mxu0 %v324
    %v1895 = vpop.f32.mrf.mxu0
    %v1896 = vadd.f32 0.0, %v1895
    %v1897 = vpop.f32.mrf.mxu0
    %v1898 = vpop.f32.mrf.mxu0
    %v1899 = vpop.f32.mrf.mxu0
    %1900 = vdwg.mxu0
    %v1901 = vld [vmem:[#allocation2] sm:$0xff]
    %v1902 = vadd.f32 %v1901, %v1844
    %v1903 = vld [vmem:[#allocation2 + $0x78] sm:$0xff]
    %v1904 = vadd.f32 %v1903, %v1896
    %v1905 = vxor.u32 %v1902, 2147483648
    %v1906 = vmul.f32 %v1905, 1.442695
    %v1907 = vpow.pop %v1906
    %v1908 = vadd.f32 %v1907, 1.0
    %v1909 = vrcp.pop %v1908
    %v1910 = vmul.f32 1.0, %v1909
    %v1911 = vtanh.pop %v1902
    %v1912 = vxor.u32 %v1904, 2147483648
    %v1913 = vmul.f32 %v1912, 1.442695
    %v1914 = vpow.pop %v1913
    %v1915 = vadd.f32 %v1914, 1.0
    %v1916 = vrcp.pop %v1915
    %v1917 = vmul.f32 1.0, %v1916
    %v1918 = vtanh.pop %v1904
    %v1919 = vmul.f32 %v1910, 0.0
    %1921 = vrot.lane.b32.xlu0 %v1911, 32
    %v1922 = vpop.permute.xlu0 %1921
    %v1924 = vmul.f32 %v1910, %v1922
    %1926 = vrot.lane.b32.xlu0 %v1924, 32
    %v1927 = vpop.permute.xlu0 %1926
    %v1929 = vadd.f32 %v1919, %v1927
    %v1930 = vmul.f32 %v1917, 0.0
    %1932 = vrot.lane.b32.xlu0 %v1918, 32
    %v1933 = vpop.permute.xlu0 %1932
    %v1935 = vmul.f32 %v1917, %v1933
    %1937 = vrot.lane.b32.xlu0 %v1935, 32
    %v1938 = vpop.permute.xlu0 %1937
    %v1940 = vadd.f32 %v1930, %v1938
    %v1941 = vtanh.pop %v1929
    %1943 = vrot.lane.b32.xlu0 %v1941, 32
    %v1944 = vpop.permute.xlu0 %1943
    %v1946 = vmul.f32 %v1910, %v1944
    %v1947 = vtanh.pop %v1940
    %1949 = vrot.lane.b32.xlu0 %v1947, 32
    %v1950 = vpop.permute.xlu0 %1949
    %v1952 = vmul.f32 %v1917, %v1950
    %v1953 = vsel %vm104, %v1946, 0.0
    %1955 = vrot.lane.b32.xlu0 %v1953, 64
    %v1956 = vpop.permute.xlu0 %1955
    %1958 = vst.msk [vmem:[#allocation4] sm:$0xff] %vm322, %v1956
    %v1959 = vsel %vm146, %v1952, 0.0
    %1961 = vrot.lane.b32.xlu0 %v1959, 96
    %v1962 = vpop.permute.xlu0 %1961
    %1964 = vst.msk [vmem:[#allocation4 + $0x38] sm:$0xff] %vm481, %v1962
    %v1965 = vsel %vm104, %v1929, 0.0
    %v1966 = vsel %vm146, %v1940, 0.0
    %v1967 = vpack.c.bf16 %v1953, %v1953
    %1969 = vrot.lane.b32.xlu0 %v1967, 64
    %v1970 = vpop.permute.xlu0 %1969
    %v1972 = vsel %vm322, %v1970, 0
    %1974 = vmatprep.subr.bf16.mxu0 0
    %1975 = vmatpush1.bf16.msra.mxu0 0
    %1976 = vmatprep.subr.bf16.mxu0 0
    %1977 = vmatpush1.bf16.msra.mxu0 0
    %1978 = vmatprep.subr.bf16.mxu0 0
    %1979 = vmatpush1.bf16.msra.mxu0 0
    %1980 = vmatprep.subr.bf16.mxu0 0
    %1981 = vmatpush1.bf16.msra.mxu0 0
    %1982 = vmatprep.subr.bf16.mxu0 0
    %1983 = vmatpush1.bf16.msra.mxu0 0
    %1984 = vmatprep.subr.bf16.mxu0 0
    %1985 = vmatpush1.bf16.msra.mxu0 0
    %1986 = vmatprep.subr.bf16.mxu0 0
    %1987 = vmatpush1.bf16.msra.mxu0 %v1806
    %1988 = vmatprep.subr.bf16.mxu0 0
    %1989 = vmatpush1.bf16.msra.mxu0 %v1805
    %1990 = vmatprep.subr.bf16.mxu0 0
    %1991 = vmatpush2.bf16.msra.mxu0 0
    %1992 = vmatprep.subr.bf16.mxu0 0
    %1993 = vmatpush2.bf16.msra.mxu0 0
    %1994 = vmatprep.subr.bf16.mxu0 0
    %1995 = vmatpush2.bf16.msra.mxu0 0
    %1996 = vmatprep.subr.bf16.mxu0 0
    %1997 = vmatpush2.bf16.msra.mxu0 0
    %1998 = vmatprep.subr.bf16.mxu0 0
    %1999 = vmatpush2.bf16.msra.mxu0 0
    %2000 = vmatprep.subr.bf16.mxu0 0
    %2001 = vmatpush2.bf16.msra.mxu0 0
    %2002 = vmatprep.subr.bf16.mxu0 0
    %2003 = vmatpush2.bf16.msra.mxu0 0
    %2004 = vmatprep.subr.bf16.mxu0 0
    %2005 = vmatpush2.bf16.msra.mxu0 0
    %2006 = vmatprep.mubr.bf16.mxu0 0
    %2007 = vmatmul.mubr.bf16.gmra.mxu0 %v1972
    %v2008 = vpop.f32.mrf.mxu0
    %v2009 = vadd.f32 0.0, %v2008
    %v2010 = vpop.f32.mrf.mxu0
    %v2011 = vpop.f32.mrf.mxu0
    %v2012 = vpop.f32.mrf.mxu0
    %2013 = vdwg.mxu0
    %v2014 = vpack.c.bf16 %v1959, %v1959
    %2016 = vrot.lane.b32.xlu0 %v2014, 64
    %v2017 = vpop.permute.xlu0 %2016
    %v2019 = vsel %vm322, %v2017, 0
    %2021 = vmatprep.subr.bf16.mxu0 0
    %2022 = vmatpush1.bf16.msra.mxu0 0
    %2023 = vmatprep.subr.bf16.mxu0 0
    %2024 = vmatpush1.bf16.msra.mxu0 0
    %2025 = vmatprep.subr.bf16.mxu0 0
    %2026 = vmatpush1.bf16.msra.mxu0 0
    %2027 = vmatprep.subr.bf16.mxu0 0
    %2028 = vmatpush1.bf16.msra.mxu0 0
    %2029 = vmatprep.subr.bf16.mxu0 0
    %2030 = vmatpush1.bf16.msra.mxu0 0
    %2031 = vmatprep.subr.bf16.mxu0 0
    %2032 = vmatpush1.bf16.msra.mxu0 0
    %2033 = vmatprep.subr.bf16.mxu0 0
    %2034 = vmatpush1.bf16.msra.mxu0 %v1858
    %2035 = vmatprep.subr.bf16.mxu0 0
    %2036 = vmatpush1.bf16.msra.mxu0 %v1857
    %2037 = vmatprep.subr.bf16.mxu0 0
    %2038 = vmatpush2.bf16.msra.mxu0 0
    %2039 = vmatprep.subr.bf16.mxu0 0
    %2040 = vmatpush2.bf16.msra.mxu0 0
    %2041 = vmatprep.subr.bf16.mxu0 0
    %2042 = vmatpush2.bf16.msra.mxu0 0
    %2043 = vmatprep.subr.bf16.mxu0 0
    %2044 = vmatpush2.bf16.msra.mxu0 0
    %2045 = vmatprep.subr.bf16.mxu0 0
    %2046 = vmatpush2.bf16.msra.mxu0 0
    %2047 = vmatprep.subr.bf16.mxu0 0
    %2048 = vmatpush2.bf16.msra.mxu0 0
    %2049 = vmatprep.subr.bf16.mxu0 0
    %2050 = vmatpush2.bf16.msra.mxu0 0
    %2051 = vmatprep.subr.bf16.mxu0 0
    %2052 = vmatpush2.bf16.msra.mxu0 0
    %2053 = vmatprep.mubr.bf16.mxu0 0
    %2054 = vmatmul.mubr.bf16.gmra.mxu0 %v2019
    %v2055 = vpop.f32.mrf.mxu0
    %v2056 = vadd.f32 0.0, %v2055
    %v2057 = vpop.f32.mrf.mxu0
    %v2058 = vpop.f32.mrf.mxu0
    %v2059 = vpop.f32.mrf.mxu0
    %2060 = vdwg.mxu0
    %v2061 = vld [vmem:[#allocation2 + $0x10] sm:$0xff]
    %v2062 = vadd.f32 %v2061, %v2009
    %v2063 = vld [vmem:[#allocation2 + $0x68] sm:$0xff]
    %v2064 = vadd.f32 %v2063, %v2056
    %v2065 = vxor.u32 %v2062, 2147483648
    %v2066 = vmul.f32 %v2065, 1.442695
    %v2067 = vpow.pop %v2066
    %v2068 = vadd.f32 %v2067, 1.0
    %v2069 = vrcp.pop %v2068
    %v2070 = vmul.f32 1.0, %v2069
    %v2071 = vtanh.pop %v2062
    %v2072 = vxor.u32 %v2064, 2147483648
    %v2073 = vmul.f32 %v2072, 1.442695
    %v2074 = vpow.pop %v2073
    %v2075 = vadd.f32 %v2074, 1.0
    %v2076 = vrcp.pop %v2075
    %v2077 = vmul.f32 1.0, %v2076
    %v2078 = vtanh.pop %v2064
    %v2079 = vmul.f32 %v2070, %v1965
    %2081 = vrot.lane.b32.xlu0 %v2071, 32
    %v2082 = vpop.permute.xlu0 %2081
    %v2084 = vmul.f32 %v2070, %v2082
    %2086 = vrot.lane.b32.xlu0 %v2084, 32
    %v2087 = vpop.permute.xlu0 %2086
    %v2089 = vadd.f32 %v2079, %v2087
    %v2090 = vmul.f32 %v2077, %v1966
    %2092 = vrot.lane.b32.xlu0 %v2078, 32
    %v2093 = vpop.permute.xlu0 %2092
    %v2095 = vmul.f32 %v2077, %v2093
    %2097 = vrot.lane.b32.xlu0 %v2095, 32
    %v2098 = vpop.permute.xlu0 %2097
    %v2100 = vadd.f32 %v2090, %v2098
    %v2101 = vtanh.pop %v2089
    %2103 = vrot.lane.b32.xlu0 %v2101, 32
    %v2104 = vpop.permute.xlu0 %2103
    %v2106 = vmul.f32 %v2070, %v2104
    %v2107 = vtanh.pop %v2100
    %2109 = vrot.lane.b32.xlu0 %v2107, 32
    %v2110 = vpop.permute.xlu0 %2109
    %v2112 = vmul.f32 %v2077, %v2110
    %v2113 = vsel %vm110, %v2106, 0.0
    %2115 = vrot.lane.b32.xlu0 %v2113, 64
    %v2116 = vpop.permute.xlu0 %2115
    %2118 = vst.msk [vmem:[#allocation4 + $0x8] sm:$0xff] %vm322, %v2116
    %v2119 = vsel %vm140, %v2112, 0.0
    %2121 = vrot.lane.b32.xlu0 %v2119, 96
    %v2122 = vpop.permute.xlu0 %2121
    %2124 = vst.msk [vmem:[#allocation4 + $0x30] sm:$0xff] %vm481, %v2122
    %v2125 = vsel %vm110, %v2106, %v1953
    %v2126 = vsel %vm140, %v2112, %v1959
    %v2127 = vsel %vm110, %v2089, %v1965
    %v2128 = vsel %vm140, %v2100, %v1966
    %v2129 = vpack.c.bf16 %v2125, %v2125
    %2131 = vrot.lane.b32.xlu0 %v2129, 64
    %v2132 = vpop.permute.xlu0 %2131
    %v2134 = vsel %vm322, %v2132, 0
    %2136 = vmatprep.subr.bf16.mxu0 0
    %2137 = vmatpush1.bf16.msra.mxu0 0
    %2138 = vmatprep.subr.bf16.mxu0 0
    %2139 = vmatpush1.bf16.msra.mxu0 0
    %2140 = vmatprep.subr.bf16.mxu0 0
    %2141 = vmatpush1.bf16.msra.mxu0 0
    %2142 = vmatprep.subr.bf16.mxu0 0
    %2143 = vmatpush1.bf16.msra.mxu0 0
    %2144 = vmatprep.subr.bf16.mxu0 0
    %2145 = vmatpush1.bf16.msra.mxu0 0
    %2146 = vmatprep.subr.bf16.mxu0 0
    %2147 = vmatpush1.bf16.msra.mxu0 0
    %2148 = vmatprep.subr.bf16.mxu0 0
    %2149 = vmatpush1.bf16.msra.mxu0 %v1806
    %2150 = vmatprep.subr.bf16.mxu0 0
    %2151 = vmatpush1.bf16.msra.mxu0 %v1805
    %2152 = vmatprep.subr.bf16.mxu0 0
    %2153 = vmatpush2.bf16.msra.mxu0 0
    %2154 = vmatprep.subr.bf16.mxu0 0
    %2155 = vmatpush2.bf16.msra.mxu0 0
    %2156 = vmatprep.subr.bf16.mxu0 0
    %2157 = vmatpush2.bf16.msra.mxu0 0
    %2158 = vmatprep.subr.bf16.mxu0 0
    %2159 = vmatpush2.bf16.msra.mxu0 0
    %2160 = vmatprep.subr.bf16.mxu0 0
    %2161 = vmatpush2.bf16.msra.mxu0 0
    %2162 = vmatprep.subr.bf16.mxu0 0
    %2163 = vmatpush2.bf16.msra.mxu0 0
    %2164 = vmatprep.subr.bf16.mxu0 0
    %2165 = vmatpush2.bf16.msra.mxu0 0
    %2166 = vmatprep.subr.bf16.mxu0 0
    %2167 = vmatpush2.bf16.msra.mxu0 0
    %2168 = vmatprep.mubr.bf16.mxu0 0
    %2169 = vmatmul.mubr.bf16.gmra.mxu0 %v2134
    %v2170 = vpop.f32.mrf.mxu0
    %v2171 = vadd.f32 0.0, %v2170
    %v2172 = vpop.f32.mrf.mxu0
    %v2173 = vpop.f32.mrf.mxu0
    %v2174 = vpop.f32.mrf.mxu0
    %2175 = vdwg.mxu0
    %v2176 = vpack.c.bf16 %v2126, %v2126
    %2178 = vrot.lane.b32.xlu0 %v2176, 64
    %v2179 = vpop.permute.xlu0 %2178
    %v2181 = vsel %vm322, %v2179, 0
    %2183 = vmatprep.subr.bf16.mxu0 0
    %2184 = vmatpush1.bf16.msra.mxu0 0
    %2185 = vmatprep.subr.bf16.mxu0 0
    %2186 = vmatpush1.bf16.msra.mxu0 0
    %2187 = vmatprep.subr.bf16.mxu0 0
    %2188 = vmatpush1.bf16.msra.mxu0 0
    %2189 = vmatprep.subr.bf16.mxu0 0
    %2190 = vmatpush1.bf16.msra.mxu0 0
    %2191 = vmatprep.subr.bf16.mxu0 0
    %2192 = vmatpush1.bf16.msra.mxu0 0
    %2193 = vmatprep.subr.bf16.mxu0 0
    %2194 = vmatpush1.bf16.msra.mxu0 0
    %2195 = vmatprep.subr.bf16.mxu0 0
    %2196 = vmatpush1.bf16.msra.mxu0 %v1858
    %2197 = vmatprep.subr.bf16.mxu0 0
    %2198 = vmatpush1.bf16.msra.mxu0 %v1857
    %2199 = vmatprep.subr.bf16.mxu0 0
    %2200 = vmatpush2.bf16.msra.mxu0 0
    %2201 = vmatprep.subr.bf16.mxu0 0
    %2202 = vmatpush2.bf16.msra.mxu0 0
    %2203 = vmatprep.subr.bf16.mxu0 0
    %2204 = vmatpush2.bf16.msra.mxu0 0
    %2205 = vmatprep.subr.bf16.mxu0 0
    %2206 = vmatpush2.bf16.msra.mxu0 0
    %2207 = vmatprep.subr.bf16.mxu0 0
    %2208 = vmatpush2.bf16.msra.mxu0 0
    %2209 = vmatprep.subr.bf16.mxu0 0
    %2210 = vmatpush2.bf16.msra.mxu0 0
    %2211 = vmatprep.subr.bf16.mxu0 0
    %2212 = vmatpush2.bf16.msra.mxu0 0
    %2213 = vmatprep.subr.bf16.mxu0 0
    %2214 = vmatpush2.bf16.msra.mxu0 0
    %2215 = vmatprep.mubr.bf16.mxu0 0
    %2216 = vmatmul.mubr.bf16.gmra.mxu0 %v2181
    %v2217 = vpop.f32.mrf.mxu0
    %v2218 = vadd.f32 0.0, %v2217
    %v2219 = vpop.f32.mrf.mxu0
    %v2220 = vpop.f32.mrf.mxu0
    %v2221 = vpop.f32.mrf.mxu0
    %2222 = vdwg.mxu0
    %v2223 = vld [vmem:[#allocation2 + $0x20] sm:$0xff]
    %v2224 = vadd.f32 %v2223, %v2171
    %v2225 = vld [vmem:[#allocation2 + $0x58] sm:$0xff]
    %v2226 = vadd.f32 %v2225, %v2218
    %v2227 = vxor.u32 %v2224, 2147483648
    %v2228 = vmul.f32 %v2227, 1.442695
    %v2229 = vpow.pop %v2228
    %v2230 = vadd.f32 %v2229, 1.0
    %v2231 = vrcp.pop %v2230
    %v2232 = vmul.f32 1.0, %v2231
    %v2233 = vtanh.pop %v2224
    %v2234 = vxor.u32 %v2226, 2147483648
    %v2235 = vmul.f32 %v2234, 1.442695
    %v2236 = vpow.pop %v2235
    %v2237 = vadd.f32 %v2236, 1.0
    %v2238 = vrcp.pop %v2237
    %v2239 = vmul.f32 1.0, %v2238
    %v2240 = vtanh.pop %v2226
    %v2241 = vmul.f32 %v2232, %v2127
    %2243 = vrot.lane.b32.xlu0 %v2233, 32
    %v2244 = vpop.permute.xlu0 %2243
    %v2246 = vmul.f32 %v2232, %v2244
    %2248 = vrot.lane.b32.xlu0 %v2246, 32
    %v2249 = vpop.permute.xlu0 %2248
    %v2251 = vadd.f32 %v2241, %v2249
    %v2252 = vmul.f32 %v2239, %v2128
    %2254 = vrot.lane.b32.xlu0 %v2240, 32
    %v2255 = vpop.permute.xlu0 %2254
    %v2257 = vmul.f32 %v2239, %v2255
    %2259 = vrot.lane.b32.xlu0 %v2257, 32
    %v2260 = vpop.permute.xlu0 %2259
    %v2262 = vadd.f32 %v2252, %v2260
    %v2263 = vtanh.pop %v2251
    %2265 = vrot.lane.b32.xlu0 %v2263, 32
    %v2266 = vpop.permute.xlu0 %2265
    %v2268 = vmul.f32 %v2232, %v2266
    %v2269 = vtanh.pop %v2262
    %2271 = vrot.lane.b32.xlu0 %v2269, 32
    %v2272 = vpop.permute.xlu0 %2271
    %v2274 = vmul.f32 %v2239, %v2272
    %v2275 = vsel %vm116, %v2268, 0.0
    %2277 = vrot.lane.b32.xlu0 %v2275, 64
    %v2278 = vpop.permute.xlu0 %2277
    %2280 = vst.msk [vmem:[#allocation4 + $0x10] sm:$0xff] %vm322, %v2278
    %v2281 = vsel %vm134, %v2274, 0.0
    %2283 = vrot.lane.b32.xlu0 %v2281, 96
    %v2284 = vpop.permute.xlu0 %2283
    %2286 = vst.msk [vmem:[#allocation4 + $0x28] sm:$0xff] %vm481, %v2284
    %v2287 = vsel %vm116, %v2268, %v2125
    %v2288 = vsel %vm134, %v2274, %v2126
    %v2289 = vsel %vm116, %v2251, %v2127
    %v2290 = vsel %vm134, %v2262, %v2128
    %v2291 = vpack.c.bf16 %v2287, %v2287
    %2293 = vrot.lane.b32.xlu0 %v2291, 64
    %v2294 = vpop.permute.xlu0 %2293
    %v2296 = vsel %vm322, %v2294, 0
    %2298 = vmatprep.subr.bf16.mxu0 0
    %2299 = vmatpush1.bf16.msra.mxu0 0
    %2300 = vmatprep.subr.bf16.mxu0 0
    %2301 = vmatpush1.bf16.msra.mxu0 0
    %2302 = vmatprep.subr.bf16.mxu0 0
    %2303 = vmatpush1.bf16.msra.mxu0 0
    %2304 = vmatprep.subr.bf16.mxu0 0
    %2305 = vmatpush1.bf16.msra.mxu0 0
    %2306 = vmatprep.subr.bf16.mxu0 0
    %2307 = vmatpush1.bf16.msra.mxu0 0
    %2308 = vmatprep.subr.bf16.mxu0 0
    %2309 = vmatpush1.bf16.msra.mxu0 0
    %2310 = vmatprep.subr.bf16.mxu0 0
    %2311 = vmatpush1.bf16.msra.mxu0 %v1806
    %2312 = vmatprep.subr.bf16.mxu0 0
    %2313 = vmatpush1.bf16.msra.mxu0 %v1805
    %2314 = vmatprep.subr.bf16.mxu0 0
    %2315 = vmatpush2.bf16.msra.mxu0 0
    %2316 = vmatprep.subr.bf16.mxu0 0
    %2317 = vmatpush2.bf16.msra.mxu0 0
    %2318 = vmatprep.subr.bf16.mxu0 0
    %2319 = vmatpush2.bf16.msra.mxu0 0
    %2320 = vmatprep.subr.bf16.mxu0 0
    %2321 = vmatpush2.bf16.msra.mxu0 0
    %2322 = vmatprep.subr.bf16.mxu0 0
    %2323 = vmatpush2.bf16.msra.mxu0 0
    %2324 = vmatprep.subr.bf16.mxu0 0
    %2325 = vmatpush2.bf16.msra.mxu0 0
    %2326 = vmatprep.subr.bf16.mxu0 0
    %2327 = vmatpush2.bf16.msra.mxu0 0
    %2328 = vmatprep.subr.bf16.mxu0 0
    %2329 = vmatpush2.bf16.msra.mxu0 0
    %2330 = vmatprep.mubr.bf16.mxu0 0
    %2331 = vmatmul.mubr.bf16.gmra.mxu0 %v2296
    %v2332 = vpop.f32.mrf.mxu0
    %v2333 = vadd.f32 0.0, %v2332
    %v2334 = vpop.f32.mrf.mxu0
    %v2335 = vpop.f32.mrf.mxu0
    %v2336 = vpop.f32.mrf.mxu0
    %2337 = vdwg.mxu0
    %v2338 = vpack.c.bf16 %v2288, %v2288
    %2340 = vrot.lane.b32.xlu0 %v2338, 64
    %v2341 = vpop.permute.xlu0 %2340
    %v2343 = vsel %vm322, %v2341, 0
    %2345 = vmatprep.subr.bf16.mxu0 0
    %2346 = vmatpush1.bf16.msra.mxu0 0
    %2347 = vmatprep.subr.bf16.mxu0 0
    %2348 = vmatpush1.bf16.msra.mxu0 0
    %2349 = vmatprep.subr.bf16.mxu0 0
    %2350 = vmatpush1.bf16.msra.mxu0 0
    %2351 = vmatprep.subr.bf16.mxu0 0
    %2352 = vmatpush1.bf16.msra.mxu0 0
    %2353 = vmatprep.subr.bf16.mxu0 0
    %2354 = vmatpush1.bf16.msra.mxu0 0
    %2355 = vmatprep.subr.bf16.mxu0 0
    %2356 = vmatpush1.bf16.msra.mxu0 0
    %2357 = vmatprep.subr.bf16.mxu0 0
    %2358 = vmatpush1.bf16.msra.mxu0 %v1858
    %2359 = vmatprep.subr.bf16.mxu0 0
    %2360 = vmatpush1.bf16.msra.mxu0 %v1857
    %2361 = vmatprep.subr.bf16.mxu0 0
    %2362 = vmatpush2.bf16.msra.mxu0 0
    %2363 = vmatprep.subr.bf16.mxu0 0
    %2364 = vmatpush2.bf16.msra.mxu0 0
    %2365 = vmatprep.subr.bf16.mxu0 0
    %2366 = vmatpush2.bf16.msra.mxu0 0
    %2367 = vmatprep.subr.bf16.mxu0 0
    %2368 = vmatpush2.bf16.msra.mxu0 0
    %2369 = vmatprep.subr.bf16.mxu0 0
    %2370 = vmatpush2.bf16.msra.mxu0 0
    %2371 = vmatprep.subr.bf16.mxu0 0
    %2372 = vmatpush2.bf16.msra.mxu0 0
    %2373 = vmatprep.subr.bf16.mxu0 0
    %2374 = vmatpush2.bf16.msra.mxu0 0
    %2375 = vmatprep.subr.bf16.mxu0 0
    %2376 = vmatpush2.bf16.msra.mxu0 0
    %2377 = vmatprep.mubr.bf16.mxu0 0
    %2378 = vmatmul.mubr.bf16.gmra.mxu0 %v2343
    %v2379 = vpop.f32.mrf.mxu0
    %v2380 = vadd.f32 0.0, %v2379
    %v2381 = vpop.f32.mrf.mxu0
    %v2382 = vpop.f32.mrf.mxu0
    %v2383 = vpop.f32.mrf.mxu0
    %2384 = vdwg.mxu0
    %v2385 = vld [vmem:[#allocation2 + $0x30] sm:$0xff]
    %v2386 = vadd.f32 %v2385, %v2333
    %v2387 = vld [vmem:[#allocation2 + $0x48] sm:$0xff]
    %v2388 = vadd.f32 %v2387, %v2380
    %v2389 = vxor.u32 %v2386, 2147483648
    %v2390 = vmul.f32 %v2389, 1.442695
    %v2391 = vpow.pop %v2390
    %v2392 = vadd.f32 %v2391, 1.0
    %v2393 = vrcp.pop %v2392
    %v2394 = vmul.f32 1.0, %v2393
    %v2395 = vtanh.pop %v2386
    %v2396 = vxor.u32 %v2388, 2147483648
    %v2397 = vmul.f32 %v2396, 1.442695
    %v2398 = vpow.pop %v2397
    %v2399 = vadd.f32 %v2398, 1.0
    %v2400 = vrcp.pop %v2399
    %v2401 = vmul.f32 1.0, %v2400
    %v2402 = vtanh.pop %v2388
    %v2403 = vmul.f32 %v2394, %v2289
    %2405 = vrot.lane.b32.xlu0 %v2395, 32
    %v2406 = vpop.permute.xlu0 %2405
    %v2408 = vmul.f32 %v2394, %v2406
    %2410 = vrot.lane.b32.xlu0 %v2408, 32
    %v2411 = vpop.permute.xlu0 %2410
    %v2413 = vadd.f32 %v2403, %v2411
    %v2414 = vmul.f32 %v2401, %v2290
    %2416 = vrot.lane.b32.xlu0 %v2402, 32
    %v2417 = vpop.permute.xlu0 %2416
    %v2419 = vmul.f32 %v2401, %v2417
    %2421 = vrot.lane.b32.xlu0 %v2419, 32
    %v2422 = vpop.permute.xlu0 %2421
    %v2424 = vadd.f32 %v2414, %v2422
    %v2425 = vtanh.pop %v2413
    %2427 = vrot.lane.b32.xlu0 %v2425, 32
    %v2428 = vpop.permute.xlu0 %2427
    %v2430 = vmul.f32 %v2394, %v2428
    %v2431 = vtanh.pop %v2424
    %2433 = vrot.lane.b32.xlu0 %v2431, 32
    %v2434 = vpop.permute.xlu0 %2433
    %v2436 = vmul.f32 %v2401, %v2434
    %v2437 = vsel %vm122, %v2430, 0.0
    %2439 = vrot.lane.b32.xlu0 %v2437, 64
    %v2440 = vpop.permute.xlu0 %2439
    %2442 = vst.msk [vmem:[#allocation4 + $0x18] sm:$0xff] %vm322, %v2440
    %v2443 = vsel %vm128, %v2436, 0.0
    %2445 = vrot.lane.b32.xlu0 %v2443, 96
    %v2446 = vpop.permute.xlu0 %2445
    %2448 = vst.msk [vmem:[#allocation4 + $0x20] sm:$0xff] %vm481, %v2446
    %v2449 = vsel %vm122, %v2430, %v2287
    %v2450 = vsel %vm128, %v2436, %v2288
    %v2451 = vsel %vm122, %v2413, %v2289
    %v2452 = vsel %vm128, %v2424, %v2290
    %v2453 = vpack.c.bf16 %v2449, %v2449
    %2455 = vrot.lane.b32.xlu0 %v2453, 64
    %v2456 = vpop.permute.xlu0 %2455
    %v2458 = vsel %vm322, %v2456, 0
    %2460 = vmatprep.subr.bf16.mxu0 0
    %2461 = vmatpush1.bf16.msra.mxu0 0
    %2462 = vmatprep.subr.bf16.mxu0 0
    %2463 = vmatpush1.bf16.msra.mxu0 0
    %2464 = vmatprep.subr.bf16.mxu0 0
    %2465 = vmatpush1.bf16.msra.mxu0 0
    %2466 = vmatprep.subr.bf16.mxu0 0
    %2467 = vmatpush1.bf16.msra.mxu0 0
    %2468 = vmatprep.subr.bf16.mxu0 0
    %2469 = vmatpush1.bf16.msra.mxu0 0
    %2470 = vmatprep.subr.bf16.mxu0 0
    %2471 = vmatpush1.bf16.msra.mxu0 0
    %2472 = vmatprep.subr.bf16.mxu0 0
    %2473 = vmatpush1.bf16.msra.mxu0 %v1806
    %2474 = vmatprep.subr.bf16.mxu0 0
    %2475 = vmatpush1.bf16.msra.mxu0 %v1805
    %2476 = vmatprep.subr.bf16.mxu0 0
    %2477 = vmatpush2.bf16.msra.mxu0 0
    %2478 = vmatprep.subr.bf16.mxu0 0
    %2479 = vmatpush2.bf16.msra.mxu0 0
    %2480 = vmatprep.subr.bf16.mxu0 0
    %2481 = vmatpush2.bf16.msra.mxu0 0
    %2482 = vmatprep.subr.bf16.mxu0 0
    %2483 = vmatpush2.bf16.msra.mxu0 0
    %2484 = vmatprep.subr.bf16.mxu0 0
    %2485 = vmatpush2.bf16.msra.mxu0 0
    %2486 = vmatprep.subr.bf16.mxu0 0
    %2487 = vmatpush2.bf16.msra.mxu0 0
    %2488 = vmatprep.subr.bf16.mxu0 0
    %2489 = vmatpush2.bf16.msra.mxu0 0
    %2490 = vmatprep.subr.bf16.mxu0 0
    %2491 = vmatpush2.bf16.msra.mxu0 0
    %2492 = vmatprep.mubr.bf16.mxu0 0
    %2493 = vmatmul.mubr.bf16.gmra.mxu0 %v2458
    %v2494 = vpop.f32.mrf.mxu0
    %v2495 = vadd.f32 0.0, %v2494
    %v2496 = vpop.f32.mrf.mxu0
    %v2497 = vpop.f32.mrf.mxu0
    %v2498 = vpop.f32.mrf.mxu0
    %2499 = vdwg.mxu0
    %v2500 = vpack.c.bf16 %v2450, %v2450
    %2502 = vrot.lane.b32.xlu0 %v2500, 64
    %v2503 = vpop.permute.xlu0 %2502
    %v2505 = vsel %vm322, %v2503, 0
    %2507 = vmatprep.subr.bf16.mxu0 0
    %2508 = vmatpush1.bf16.msra.mxu0 0
    %2509 = vmatprep.subr.bf16.mxu0 0
    %2510 = vmatpush1.bf16.msra.mxu0 0
    %2511 = vmatprep.subr.bf16.mxu0 0
    %2512 = vmatpush1.bf16.msra.mxu0 0
    %2513 = vmatprep.subr.bf16.mxu0 0
    %2514 = vmatpush1.bf16.msra.mxu0 0
    %2515 = vmatprep.subr.bf16.mxu0 0
    %2516 = vmatpush1.bf16.msra.mxu0 0
    %2517 = vmatprep.subr.bf16.mxu0 0
    %2518 = vmatpush1.bf16.msra.mxu0 0
    %2519 = vmatprep.subr.bf16.mxu0 0
    %2520 = vmatpush1.bf16.msra.mxu0 %v1858
    %2521 = vmatprep.subr.bf16.mxu0 0
    %2522 = vmatpush1.bf16.msra.mxu0 %v1857
    %2523 = vmatprep.subr.bf16.mxu0 0
    %2524 = vmatpush2.bf16.msra.mxu0 0
    %2525 = vmatprep.subr.bf16.mxu0 0
    %2526 = vmatpush2.bf16.msra.mxu0 0
    %2527 = vmatprep.subr.bf16.mxu0 0
    %2528 = vmatpush2.bf16.msra.mxu0 0
    %2529 = vmatprep.subr.bf16.mxu0 0
    %2530 = vmatpush2.bf16.msra.mxu0 0
    %2531 = vmatprep.subr.bf16.mxu0 0
    %2532 = vmatpush2.bf16.msra.mxu0 0
    %2533 = vmatprep.subr.bf16.mxu0 0
    %2534 = vmatpush2.bf16.msra.mxu0 0
    %2535 = vmatprep.subr.bf16.mxu0 0
    %2536 = vmatpush2.bf16.msra.mxu0 0
    %2537 = vmatprep.subr.bf16.mxu0 0
    %2538 = vmatpush2.bf16.msra.mxu0 0
    %2539 = vmatprep.mubr.bf16.mxu0 0
    %2540 = vmatmul.mubr.bf16.gmra.mxu0 %v2505
    %v2541 = vpop.f32.mrf.mxu0
    %v2542 = vadd.f32 0.0, %v2541
    %v2543 = vpop.f32.mrf.mxu0
    %v2544 = vpop.f32.mrf.mxu0
    %v2545 = vpop.f32.mrf.mxu0
    %2546 = vdwg.mxu0
    %v2547 = vld [vmem:[#allocation2 + $0x40] sm:$0xff]
    %v2548 = vadd.f32 %v2547, %v2495
    %v2549 = vld [vmem:[#allocation2 + $0x38] sm:$0xff]
    %v2550 = vadd.f32 %v2549, %v2542
    %v2551 = vxor.u32 %v2548, 2147483648
    %v2552 = vmul.f32 %v2551, 1.442695
    %v2553 = vpow.pop %v2552
    %v2554 = vadd.f32 %v2553, 1.0
    %v2555 = vrcp.pop %v2554
    %v2556 = vmul.f32 1.0, %v2555
    %v2557 = vtanh.pop %v2548
    %v2558 = vxor.u32 %v2550, 2147483648
    %v2559 = vmul.f32 %v2558, 1.442695
    %v2560 = vpow.pop %v2559
    %v2561 = vadd.f32 %v2560, 1.0
    %v2562 = vrcp.pop %v2561
    %v2563 = vmul.f32 1.0, %v2562
    %v2564 = vtanh.pop %v2550
    %v2565 = vmul.f32 %v2556, %v2451
    %2567 = vrot.lane.b32.xlu0 %v2557, 32
    %v2568 = vpop.permute.xlu0 %2567
    %v2570 = vmul.f32 %v2556, %v2568
    %2572 = vrot.lane.b32.xlu0 %v2570, 32
    %v2573 = vpop.permute.xlu0 %2572
    %v2575 = vadd.f32 %v2565, %v2573
    %v2576 = vmul.f32 %v2563, %v2452
    %2578 = vrot.lane.b32.xlu0 %v2564, 32
    %v2579 = vpop.permute.xlu0 %2578
    %v2581 = vmul.f32 %v2563, %v2579
    %2583 = vrot.lane.b32.xlu0 %v2581, 32
    %v2584 = vpop.permute.xlu0 %2583
    %v2586 = vadd.f32 %v2576, %v2584
    %v2587 = vtanh.pop %v2575
    %2589 = vrot.lane.b32.xlu0 %v2587, 32
    %v2590 = vpop.permute.xlu0 %2589
    %v2592 = vmul.f32 %v2556, %v2590
    %v2593 = vtanh.pop %v2586
    %2595 = vrot.lane.b32.xlu0 %v2593, 32
    %v2596 = vpop.permute.xlu0 %2595
    %v2598 = vmul.f32 %v2563, %v2596
    %v2599 = vsel %vm128, %v2592, 0.0
    %2601 = vrot.lane.b32.xlu0 %v2599, 64
    %v2602 = vpop.permute.xlu0 %2601
    %2604 = vst.msk [vmem:[#allocation4 + $0x20] sm:$0xff] %vm322, %v2602
    %v2605 = vsel %vm122, %v2598, 0.0
    %2607 = vrot.lane.b32.xlu0 %v2605, 96
    %v2608 = vpop.permute.xlu0 %2607
    %2610 = vst.msk [vmem:[#allocation4 + $0x18] sm:$0xff] %vm481, %v2608
    %v2611 = vsel %vm128, %v2592, %v2449
    %v2612 = vsel %vm122, %v2598, %v2450
    %v2613 = vsel %vm128, %v2575, %v2451
    %v2614 = vsel %vm122, %v2586, %v2452
    %v2615 = vpack.c.bf16 %v2611, %v2611
    %2617 = vrot.lane.b32.xlu0 %v2615, 64
    %v2618 = vpop.permute.xlu0 %2617
    %v2620 = vsel %vm322, %v2618, 0
    %2622 = vmatprep.subr.bf16.mxu0 0
    %2623 = vmatpush1.bf16.msra.mxu0 0
    %2624 = vmatprep.subr.bf16.mxu0 0
    %2625 = vmatpush1.bf16.msra.mxu0 0
    %2626 = vmatprep.subr.bf16.mxu0 0
    %2627 = vmatpush1.bf16.msra.mxu0 0
    %2628 = vmatprep.subr.bf16.mxu0 0
    %2629 = vmatpush1.bf16.msra.mxu0 0
    %2630 = vmatprep.subr.bf16.mxu0 0
    %2631 = vmatpush1.bf16.msra.mxu0 0
    %2632 = vmatprep.subr.bf16.mxu0 0
    %2633 = vmatpush1.bf16.msra.mxu0 0
    %2634 = vmatprep.subr.bf16.mxu0 0
    %2635 = vmatpush1.bf16.msra.mxu0 %v1806
    %2636 = vmatprep.subr.bf16.mxu0 0
    %2637 = vmatpush1.bf16.msra.mxu0 %v1805
    %2638 = vmatprep.subr.bf16.mxu0 0
    %2639 = vmatpush2.bf16.msra.mxu0 0
    %2640 = vmatprep.subr.bf16.mxu0 0
    %2641 = vmatpush2.bf16.msra.mxu0 0
    %2642 = vmatprep.subr.bf16.mxu0 0
    %2643 = vmatpush2.bf16.msra.mxu0 0
    %2644 = vmatprep.subr.bf16.mxu0 0
    %2645 = vmatpush2.bf16.msra.mxu0 0
    %2646 = vmatprep.subr.bf16.mxu0 0
    %2647 = vmatpush2.bf16.msra.mxu0 0
    %2648 = vmatprep.subr.bf16.mxu0 0
    %2649 = vmatpush2.bf16.msra.mxu0 0
    %2650 = vmatprep.subr.bf16.mxu0 0
    %2651 = vmatpush2.bf16.msra.mxu0 0
    %2652 = vmatprep.subr.bf16.mxu0 0
    %2653 = vmatpush2.bf16.msra.mxu0 0
    %2654 = vmatprep.mubr.bf16.mxu0 0
    %2655 = vmatmul.mubr.bf16.gmra.mxu0 %v2620
    %v2656 = vpop.f32.mrf.mxu0
    %v2657 = vadd.f32 0.0, %v2656
    %v2658 = vpop.f32.mrf.mxu0
    %v2659 = vpop.f32.mrf.mxu0
    %v2660 = vpop.f32.mrf.mxu0
    %2661 = vdwg.mxu0
    %v2662 = vpack.c.bf16 %v2612, %v2612
    %2664 = vrot.lane.b32.xlu0 %v2662, 64
    %v2665 = vpop.permute.xlu0 %2664
    %v2667 = vsel %vm322, %v2665, 0
    %2669 = vmatprep.subr.bf16.mxu0 0
    %2670 = vmatpush1.bf16.msra.mxu0 0
    %2671 = vmatprep.subr.bf16.mxu0 0
    %2672 = vmatpush1.bf16.msra.mxu0 0
    %2673 = vmatprep.subr.bf16.mxu0 0
    %2674 = vmatpush1.bf16.msra.mxu0 0
    %2675 = vmatprep.subr.bf16.mxu0 0
    %2676 = vmatpush1.bf16.msra.mxu0 0
    %2677 = vmatprep.subr.bf16.mxu0 0
    %2678 = vmatpush1.bf16.msra.mxu0 0
    %2679 = vmatprep.subr.bf16.mxu0 0
    %2680 = vmatpush1.bf16.msra.mxu0 0
    %2681 = vmatprep.subr.bf16.mxu0 0
    %2682 = vmatpush1.bf16.msra.mxu0 %v1858
    %2683 = vmatprep.subr.bf16.mxu0 0
    %2684 = vmatpush1.bf16.msra.mxu0 %v1857
    %2685 = vmatprep.subr.bf16.mxu0 0
    %2686 = vmatpush2.bf16.msra.mxu0 0
    %2687 = vmatprep.subr.bf16.mxu0 0
    %2688 = vmatpush2.bf16.msra.mxu0 0
    %2689 = vmatprep.subr.bf16.mxu0 0
    %2690 = vmatpush2.bf16.msra.mxu0 0
    %2691 = vmatprep.subr.bf16.mxu0 0
    %2692 = vmatpush2.bf16.msra.mxu0 0
    %2693 = vmatprep.subr.bf16.mxu0 0
    %2694 = vmatpush2.bf16.msra.mxu0 0
    %2695 = vmatprep.subr.bf16.mxu0 0
    %2696 = vmatpush2.bf16.msra.mxu0 0
    %2697 = vmatprep.subr.bf16.mxu0 0
    %2698 = vmatpush2.bf16.msra.mxu0 0
    %2699 = vmatprep.subr.bf16.mxu0 0
    %2700 = vmatpush2.bf16.msra.mxu0 0
    %2701 = vmatprep.mubr.bf16.mxu0 0
    %2702 = vmatmul.mubr.bf16.gmra.mxu0 %v2667
    %v2703 = vpop.f32.mrf.mxu0
    %v2704 = vadd.f32 0.0, %v2703
    %v2705 = vpop.f32.mrf.mxu0
    %v2706 = vpop.f32.mrf.mxu0
    %v2707 = vpop.f32.mrf.mxu0
    %2708 = vdwg.mxu0
    %v2709 = vld [vmem:[#allocation2 + $0x50] sm:$0xff]
    %v2710 = vadd.f32 %v2709, %v2657
    %v2711 = vld [vmem:[#allocation2 + $0x28] sm:$0xff]
    %v2712 = vadd.f32 %v2711, %v2704
    %v2713 = vxor.u32 %v2710, 2147483648
    %v2714 = vmul.f32 %v2713, 1.442695
    %v2715 = vpow.pop %v2714
    %v2716 = vadd.f32 %v2715, 1.0
    %v2717 = vrcp.pop %v2716
    %v2718 = vmul.f32 1.0, %v2717
    %v2719 = vtanh.pop %v2710
    %v2720 = vxor.u32 %v2712, 2147483648
    %v2721 = vmul.f32 %v2720, 1.442695
    %v2722 = vpow.pop %v2721
    %v2723 = vadd.f32 %v2722, 1.0
    %v2724 = vrcp.pop %v2723
    %v2725 = vmul.f32 1.0, %v2724
    %v2726 = vtanh.pop %v2712
    %v2727 = vmul.f32 %v2718, %v2613
    %2729 = vrot.lane.b32.xlu0 %v2719, 32
    %v2730 = vpop.permute.xlu0 %2729
    %v2732 = vmul.f32 %v2718, %v2730
    %2734 = vrot.lane.b32.xlu0 %v2732, 32
    %v2735 = vpop.permute.xlu0 %2734
    %v2737 = vadd.f32 %v2727, %v2735
    %v2738 = vmul.f32 %v2725, %v2614
    %2740 = vrot.lane.b32.xlu0 %v2726, 32
    %v2741 = vpop.permute.xlu0 %2740
    %v2743 = vmul.f32 %v2725, %v2741
    %2745 = vrot.lane.b32.xlu0 %v2743, 32
    %v2746 = vpop.permute.xlu0 %2745
    %v2748 = vadd.f32 %v2738, %v2746
    %v2749 = vtanh.pop %v2737
    %2751 = vrot.lane.b32.xlu0 %v2749, 32
    %v2752 = vpop.permute.xlu0 %2751
    %v2754 = vmul.f32 %v2718, %v2752
    %v2755 = vtanh.pop %v2748
    %2757 = vrot.lane.b32.xlu0 %v2755, 32
    %v2758 = vpop.permute.xlu0 %2757
    %v2760 = vmul.f32 %v2725, %v2758
    %v2761 = vsel %vm134, %v2754, 0.0
    %2763 = vrot.lane.b32.xlu0 %v2761, 64
    %v2764 = vpop.permute.xlu0 %2763
    %2766 = vst.msk [vmem:[#allocation4 + $0x28] sm:$0xff] %vm322, %v2764
    %v2767 = vsel %vm116, %v2760, 0.0
    %2769 = vrot.lane.b32.xlu0 %v2767, 96
    %v2770 = vpop.permute.xlu0 %2769
    %2772 = vst.msk [vmem:[#allocation4 + $0x10] sm:$0xff] %vm481, %v2770
    %v2773 = vsel %vm134, %v2754, %v2611
    %v2774 = vsel %vm116, %v2760, %v2612
    %v2775 = vsel %vm134, %v2737, %v2613
    %v2776 = vsel %vm116, %v2748, %v2614
    %v2777 = vpack.c.bf16 %v2773, %v2773
    %2779 = vrot.lane.b32.xlu0 %v2777, 64
    %v2780 = vpop.permute.xlu0 %2779
    %v2782 = vsel %vm322, %v2780, 0
    %2784 = vmatprep.subr.bf16.mxu0 0
    %2785 = vmatpush1.bf16.msra.mxu0 0
    %2786 = vmatprep.subr.bf16.mxu0 0
    %2787 = vmatpush1.bf16.msra.mxu0 0
    %2788 = vmatprep.subr.bf16.mxu0 0
    %2789 = vmatpush1.bf16.msra.mxu0 0
    %2790 = vmatprep.subr.bf16.mxu0 0
    %2791 = vmatpush1.bf16.msra.mxu0 0
    %2792 = vmatprep.subr.bf16.mxu0 0
    %2793 = vmatpush1.bf16.msra.mxu0 0
    %2794 = vmatprep.subr.bf16.mxu0 0
    %2795 = vmatpush1.bf16.msra.mxu0 0
    %2796 = vmatprep.subr.bf16.mxu0 0
    %2797 = vmatpush1.bf16.msra.mxu0 %v1806
    %2798 = vmatprep.subr.bf16.mxu0 0
    %2799 = vmatpush1.bf16.msra.mxu0 %v1805
    %2800 = vmatprep.subr.bf16.mxu0 0
    %2801 = vmatpush2.bf16.msra.mxu0 0
    %2802 = vmatprep.subr.bf16.mxu0 0
    %2803 = vmatpush2.bf16.msra.mxu0 0
    %2804 = vmatprep.subr.bf16.mxu0 0
    %2805 = vmatpush2.bf16.msra.mxu0 0
    %2806 = vmatprep.subr.bf16.mxu0 0
    %2807 = vmatpush2.bf16.msra.mxu0 0
    %2808 = vmatprep.subr.bf16.mxu0 0
    %2809 = vmatpush2.bf16.msra.mxu0 0
    %2810 = vmatprep.subr.bf16.mxu0 0
    %2811 = vmatpush2.bf16.msra.mxu0 0
    %2812 = vmatprep.subr.bf16.mxu0 0
    %2813 = vmatpush2.bf16.msra.mxu0 0
    %2814 = vmatprep.subr.bf16.mxu0 0
    %2815 = vmatpush2.bf16.msra.mxu0 0
    %2816 = vmatprep.mubr.bf16.mxu0 0
    %2817 = vmatmul.mubr.bf16.gmra.mxu0 %v2782
    %v2818 = vpop.f32.mrf.mxu0
    %v2819 = vadd.f32 0.0, %v2818
    %v2820 = vpop.f32.mrf.mxu0
    %v2821 = vpop.f32.mrf.mxu0
    %v2822 = vpop.f32.mrf.mxu0
    %2823 = vdwg.mxu0
    %v2824 = vpack.c.bf16 %v2774, %v2774
    %2826 = vrot.lane.b32.xlu0 %v2824, 64
    %v2827 = vpop.permute.xlu0 %2826
    %v2829 = vsel %vm322, %v2827, 0
    %2831 = vmatprep.subr.bf16.mxu0 0
    %2832 = vmatpush1.bf16.msra.mxu0 0
    %2833 = vmatprep.subr.bf16.mxu0 0
    %2834 = vmatpush1.bf16.msra.mxu0 0
    %2835 = vmatprep.subr.bf16.mxu0 0
    %2836 = vmatpush1.bf16.msra.mxu0 0
    %2837 = vmatprep.subr.bf16.mxu0 0
    %2838 = vmatpush1.bf16.msra.mxu0 0
    %2839 = vmatprep.subr.bf16.mxu0 0
    %2840 = vmatpush1.bf16.msra.mxu0 0
    %2841 = vmatprep.subr.bf16.mxu0 0
    %2842 = vmatpush1.bf16.msra.mxu0 0
    %2843 = vmatprep.subr.bf16.mxu0 0
    %2844 = vmatpush1.bf16.msra.mxu0 %v1858
    %2845 = vmatprep.subr.bf16.mxu0 0
    %2846 = vmatpush1.bf16.msra.mxu0 %v1857
    %2847 = vmatprep.subr.bf16.mxu0 0
    %2848 = vmatpush2.bf16.msra.mxu0 0
    %2849 = vmatprep.subr.bf16.mxu0 0
    %2850 = vmatpush2.bf16.msra.mxu0 0
    %2851 = vmatprep.subr.bf16.mxu0 0
    %2852 = vmatpush2.bf16.msra.mxu0 0
    %2853 = vmatprep.subr.bf16.mxu0 0
    %2854 = vmatpush2.bf16.msra.mxu0 0
    %2855 = vmatprep.subr.bf16.mxu0 0
    %2856 = vmatpush2.bf16.msra.mxu0 0
    %2857 = vmatprep.subr.bf16.mxu0 0
    %2858 = vmatpush2.bf16.msra.mxu0 0
    %2859 = vmatprep.subr.bf16.mxu0 0
    %2860 = vmatpush2.bf16.msra.mxu0 0
    %2861 = vmatprep.subr.bf16.mxu0 0
    %2862 = vmatpush2.bf16.msra.mxu0 0
    %2863 = vmatprep.mubr.bf16.mxu0 0
    %2864 = vmatmul.mubr.bf16.gmra.mxu0 %v2829
    %v2865 = vpop.f32.mrf.mxu0
    %v2866 = vadd.f32 0.0, %v2865
    %v2867 = vpop.f32.mrf.mxu0
    %v2868 = vpop.f32.mrf.mxu0
    %v2869 = vpop.f32.mrf.mxu0
    %2870 = vdwg.mxu0
    %v2871 = vld [vmem:[#allocation2 + $0x60] sm:$0xff]
    %v2872 = vadd.f32 %v2871, %v2819
    %v2873 = vld [vmem:[#allocation2 + $0x18] sm:$0xff]
    %v2874 = vadd.f32 %v2873, %v2866
    %v2875 = vxor.u32 %v2872, 2147483648
    %v2876 = vmul.f32 %v2875, 1.442695
    %v2877 = vpow.pop %v2876
    %v2878 = vadd.f32 %v2877, 1.0
    %v2879 = vrcp.pop %v2878
    %v2880 = vmul.f32 1.0, %v2879
    %v2881 = vtanh.pop %v2872
    %v2882 = vxor.u32 %v2874, 2147483648
    %v2883 = vmul.f32 %v2882, 1.442695
    %v2884 = vpow.pop %v2883
    %v2885 = vadd.f32 %v2884, 1.0
    %v2886 = vrcp.pop %v2885
    %v2887 = vmul.f32 1.0, %v2886
    %v2888 = vtanh.pop %v2874
    %v2889 = vmul.f32 %v2880, %v2775
    %2891 = vrot.lane.b32.xlu0 %v2881, 32
    %v2892 = vpop.permute.xlu0 %2891
    %v2894 = vmul.f32 %v2880, %v2892
    %2896 = vrot.lane.b32.xlu0 %v2894, 32
    %v2897 = vpop.permute.xlu0 %2896
    %v2899 = vadd.f32 %v2889, %v2897
    %v2900 = vmul.f32 %v2887, %v2776
    %2902 = vrot.lane.b32.xlu0 %v2888, 32
    %v2903 = vpop.permute.xlu0 %2902
    %v2905 = vmul.f32 %v2887, %v2903
    %2907 = vrot.lane.b32.xlu0 %v2905, 32
    %v2908 = vpop.permute.xlu0 %2907
    %v2910 = vadd.f32 %v2900, %v2908
    %v2911 = vtanh.pop %v2899
    %2913 = vrot.lane.b32.xlu0 %v2911, 32
    %v2914 = vpop.permute.xlu0 %2913
    %v2916 = vmul.f32 %v2880, %v2914
    %v2917 = vtanh.pop %v2910
    %2919 = vrot.lane.b32.xlu0 %v2917, 32
    %v2920 = vpop.permute.xlu0 %2919
    %v2922 = vmul.f32 %v2887, %v2920
    %v2923 = vsel %vm140, %v2916, 0.0
    %2925 = vrot.lane.b32.xlu0 %v2923, 64
    %v2926 = vpop.permute.xlu0 %2925
    %2928 = vst.msk [vmem:[#allocation4 + $0x30] sm:$0xff] %vm322, %v2926
    %v2929 = vsel %vm110, %v2922, 0.0
    %2931 = vrot.lane.b32.xlu0 %v2929, 96
    %v2932 = vpop.permute.xlu0 %2931
    %2934 = vst.msk [vmem:[#allocation4 + $0x8] sm:$0xff] %vm481, %v2932
    %v2935 = vsel %vm140, %v2916, %v2773
    %v2936 = vsel %vm110, %v2922, %v2774
    %v2937 = vsel %vm140, %v2899, %v2775
    %v2938 = vsel %vm110, %v2910, %v2776
    %v2939 = vpack.c.bf16 %v2935, %v2935
    %2941 = vrot.lane.b32.xlu0 %v2939, 64
    %v2942 = vpop.permute.xlu0 %2941
    %v2944 = vsel %vm322, %v2942, 0
    %2946 = vmatprep.subr.bf16.mxu0 0
    %2947 = vmatpush1.bf16.msra.mxu0 0
    %2948 = vmatprep.subr.bf16.mxu0 0
    %2949 = vmatpush1.bf16.msra.mxu0 0
    %2950 = vmatprep.subr.bf16.mxu0 0
    %2951 = vmatpush1.bf16.msra.mxu0 0
    %2952 = vmatprep.subr.bf16.mxu0 0
    %2953 = vmatpush1.bf16.msra.mxu0 0
    %2954 = vmatprep.subr.bf16.mxu0 0
    %2955 = vmatpush1.bf16.msra.mxu0 0
    %2956 = vmatprep.subr.bf16.mxu0 0
    %2957 = vmatpush1.bf16.msra.mxu0 0
    %2958 = vmatprep.subr.bf16.mxu0 0
    %2959 = vmatpush1.bf16.msra.mxu0 %v1806
    %2960 = vmatprep.subr.bf16.mxu0 0
    %2961 = vmatpush1.bf16.msra.mxu0 %v1805
    %2962 = vmatprep.subr.bf16.mxu0 0
    %2963 = vmatpush2.bf16.msra.mxu0 0
    %2964 = vmatprep.subr.bf16.mxu0 0
    %2965 = vmatpush2.bf16.msra.mxu0 0
    %2966 = vmatprep.subr.bf16.mxu0 0
    %2967 = vmatpush2.bf16.msra.mxu0 0
    %2968 = vmatprep.subr.bf16.mxu0 0
    %2969 = vmatpush2.bf16.msra.mxu0 0
    %2970 = vmatprep.subr.bf16.mxu0 0
    %2971 = vmatpush2.bf16.msra.mxu0 0
    %2972 = vmatprep.subr.bf16.mxu0 0
    %2973 = vmatpush2.bf16.msra.mxu0 0
    %2974 = vmatprep.subr.bf16.mxu0 0
    %2975 = vmatpush2.bf16.msra.mxu0 0
    %2976 = vmatprep.subr.bf16.mxu0 0
    %2977 = vmatpush2.bf16.msra.mxu0 0
    %2978 = vmatprep.mubr.bf16.mxu0 0
    %2979 = vmatmul.mubr.bf16.gmra.mxu0 %v2944
    %v2980 = vpop.f32.mrf.mxu0
    %v2981 = vadd.f32 0.0, %v2980
    %v2982 = vpop.f32.mrf.mxu0
    %v2983 = vpop.f32.mrf.mxu0
    %v2984 = vpop.f32.mrf.mxu0
    %2985 = vdwg.mxu0
    %v2986 = vpack.c.bf16 %v2936, %v2936
    %2988 = vrot.lane.b32.xlu0 %v2986, 64
    %v2989 = vpop.permute.xlu0 %2988
    %v2991 = vsel %vm322, %v2989, 0
    %2993 = vmatprep.subr.bf16.mxu0 0
    %2994 = vmatpush1.bf16.msra.mxu0 0
    %2995 = vmatprep.subr.bf16.mxu0 0
    %2996 = vmatpush1.bf16.msra.mxu0 0
    %2997 = vmatprep.subr.bf16.mxu0 0
    %2998 = vmatpush1.bf16.msra.mxu0 0
    %2999 = vmatprep.subr.bf16.mxu0 0
    %3000 = vmatpush1.bf16.msra.mxu0 0
    %3001 = vmatprep.subr.bf16.mxu0 0
    %3002 = vmatpush1.bf16.msra.mxu0 0
    %3003 = vmatprep.subr.bf16.mxu0 0
    %3004 = vmatpush1.bf16.msra.mxu0 0
    %3005 = vmatprep.subr.bf16.mxu0 0
    %3006 = vmatpush1.bf16.msra.mxu0 %v1858
    %3007 = vmatprep.subr.bf16.mxu0 0
    %3008 = vmatpush1.bf16.msra.mxu0 %v1857
    %3009 = vmatprep.subr.bf16.mxu0 0
    %3010 = vmatpush2.bf16.msra.mxu0 0
    %3011 = vmatprep.subr.bf16.mxu0 0
    %3012 = vmatpush2.bf16.msra.mxu0 0
    %3013 = vmatprep.subr.bf16.mxu0 0
    %3014 = vmatpush2.bf16.msra.mxu0 0
    %3015 = vmatprep.subr.bf16.mxu0 0
    %3016 = vmatpush2.bf16.msra.mxu0 0
    %3017 = vmatprep.subr.bf16.mxu0 0
    %3018 = vmatpush2.bf16.msra.mxu0 0
    %3019 = vmatprep.subr.bf16.mxu0 0
    %3020 = vmatpush2.bf16.msra.mxu0 0
    %3021 = vmatprep.subr.bf16.mxu0 0
    %3022 = vmatpush2.bf16.msra.mxu0 0
    %3023 = vmatprep.subr.bf16.mxu0 0
    %3024 = vmatpush2.bf16.msra.mxu0 0
    %3025 = vmatprep.mubr.bf16.mxu0 0
    %3026 = vmatmul.mubr.bf16.gmra.mxu0 %v2991
    %v3027 = vpop.f32.mrf.mxu0
    %v3028 = vadd.f32 0.0, %v3027
    %v3029 = vpop.f32.mrf.mxu0
    %v3030 = vpop.f32.mrf.mxu0
    %v3031 = vpop.f32.mrf.mxu0
    %3032 = vdwg.mxu0
    %v3033 = vld [vmem:[#allocation2 + $0x70] sm:$0xff]
    %v3034 = vadd.f32 %v3033, %v2981
    %v3035 = vld [vmem:[#allocation2 + $0x8] sm:$0xff]
    %v3036 = vadd.f32 %v3035, %v3028
    %v3037 = vxor.u32 %v3034, 2147483648
    %v3038 = vmul.f32 %v3037, 1.442695
    %v3039 = vpow.pop %v3038
    %v3040 = vadd.f32 %v3039, 1.0
    %v3041 = vrcp.pop %v3040
    %v3042 = vmul.f32 1.0, %v3041
    %v3043 = vtanh.pop %v3034
    %v3044 = vxor.u32 %v3036, 2147483648
    %v3045 = vmul.f32 %v3044, 1.442695
    %v3046 = vpow.pop %v3045
    %v3047 = vadd.f32 %v3046, 1.0
    %v3048 = vrcp.pop %v3047
    %v3049 = vmul.f32 1.0, %v3048
    %v3050 = vtanh.pop %v3036
    %v3051 = vmul.f32 %v3042, %v2937
    %3053 = vrot.lane.b32.xlu0 %v3043, 32
    %v3054 = vpop.permute.xlu0 %3053
    %v3056 = vmul.f32 %v3042, %v3054
    %3058 = vrot.lane.b32.xlu0 %v3056, 32
    %v3059 = vpop.permute.xlu0 %3058
    %v3061 = vadd.f32 %v3051, %v3059
    %v3062 = vmul.f32 %v3049, %v2938
    %3064 = vrot.lane.b32.xlu0 %v3050, 32
    %v3065 = vpop.permute.xlu0 %3064
    %v3067 = vmul.f32 %v3049, %v3065
    %3069 = vrot.lane.b32.xlu0 %v3067, 32
    %v3070 = vpop.permute.xlu0 %3069
    %v3072 = vadd.f32 %v3062, %v3070
    %v3073 = vtanh.pop %v3061
    %3075 = vrot.lane.b32.xlu0 %v3073, 32
    %v3076 = vpop.permute.xlu0 %3075
    %v3078 = vmul.f32 %v3042, %v3076
    %v3079 = vtanh.pop %v3072
    %3081 = vrot.lane.b32.xlu0 %v3079, 32
    %v3082 = vpop.permute.xlu0 %3081
    %v3084 = vmul.f32 %v3049, %v3082
    %v3085 = vsel %vm146, %v3078, 0.0
    %3087 = vrot.lane.b32.xlu0 %v3085, 64
    %v3088 = vpop.permute.xlu0 %3087
    %3090 = vst.msk [vmem:[#allocation4 + $0x38] sm:$0xff] %vm322, %v3088
    %v3091 = vsel %vm104, %v3084, 0.0
    %3093 = vrot.lane.b32.xlu0 %v3091, 96
    %v3094 = vpop.permute.xlu0 %3093
    %3096 = vst.msk [vmem:[#allocation4] sm:$0xff] %vm481, %v3094
    %v3097 = vld [vmem:[#allocation4] sm:$0xff]
    %v3098 = vld [vmem:[#allocation4 + $0x8] sm:$0xff]
    %v3099 = vld [vmem:[#allocation4 + $0x10] sm:$0xff]
    %v3100 = vld [vmem:[#allocation4 + $0x18] sm:$0xff]
    %v3101 = vld [vmem:[#allocation4 + $0x20] sm:$0xff]
    %v3102 = vld [vmem:[#allocation4 + $0x28] sm:$0xff]
    %v3103 = vld [vmem:[#allocation4 + $0x30] sm:$0xff]
    %v3104 = vld [vmem:[#allocation4 + $0x38] sm:$0xff]
    %v3105 = vpack.c.bf16 %v3098, %v3097
    %v3106 = vpack.c.bf16 %v3100, %v3099
    %v3107 = vpack.c.bf16 %v3102, %v3101
    %v3108 = vpack.c.bf16 %v3104, %v3103
    %v3109 = vld [vmem:[%s10] sm:$0xf]
    %v3110 = vld [vmem:[%s10 + $0x4] sm:$0xf]
    %v3111 = vld [vmem:[%s10 + $0x8] sm:$0xf]
    %v3112 = vld [vmem:[%s10 + $0xc] sm:$0xf]
    %v3113 = vld [vmem:[%s10 + $0x10] sm:$0xf]
    %v3114 = vld [vmem:[%s10 + $0x14] sm:$0xf]
    %v3115 = vld [vmem:[%s10 + $0x18] sm:$0xf]
    %v3116 = vld [vmem:[%s10 + $0x1c] sm:$0xf]
    %v3117 = vld [vmem:[%s11] sm:$0x1]
    %v3119 = vlaneseq
    %v3120 = vshrl.u32 %v3119, 7
    %v3121 = vsub.s32 0, %v3120
    %v3122 = vrot.slane %v3117, %v3121
    %v3132 = vunpack.c.l.b16 %v3109
    %v3133 = vunpack.c.l.b16 %v3110
    %v3134 = vunpack.c.l.b16 %v3111
    %v3135 = vunpack.c.l.b16 %v3112
    %v3136 = vunpack.c.l.b16 %v3113
    %v3137 = vunpack.c.l.b16 %v3114
    %v3138 = vunpack.c.l.b16 %v3115
    %v3139 = vunpack.c.l.b16 %v3116
    %v3140 = vpack.c.b16 %v3133, %v3132
    %v3141 = vpack.c.b16 %v3135, %v3134
    %v3142 = vpack.c.b16 %v3137, %v3136
    %v3143 = vpack.c.b16 %v3139, %v3138
    %v3149 = vsel %vm1687, %v3105, 0
    %v3152 = vsel %vm1687, %v3106, 0
    %v3155 = vsel %vm1687, %v3107, 0
    %v3158 = vsel %vm1687, %v3108, 0
    %3160 = vmatprep.subr.bf16.mxu0 0
    %3161 = vmatpush1.bf16.msra.mxu0 0
    %3162 = vmatprep.subr.bf16.mxu0 0
    %3163 = vmatpush1.bf16.msra.mxu0 0
    %3164 = vmatprep.subr.bf16.mxu0 0
    %3165 = vmatpush1.bf16.msra.mxu0 0
    %3166 = vmatprep.subr.bf16.mxu0 0
    %3167 = vmatpush1.bf16.msra.mxu0 0
    %3168 = vmatprep.subr.bf16.mxu0 0
    %3169 = vmatpush1.bf16.msra.mxu0 %v3143
    %3170 = vmatprep.subr.bf16.mxu0 0
    %3171 = vmatpush1.bf16.msra.mxu0 %v3142
    %3172 = vmatprep.subr.bf16.mxu0 0
    %3173 = vmatpush1.bf16.msra.mxu0 %v3141
    %3174 = vmatprep.subr.bf16.mxu0 0
    %3175 = vmatpush1.bf16.msra.mxu0 %v3140
    %3176 = vmatprep.subr.bf16.mxu0 0
    %3177 = vmatpush2.bf16.msra.mxu0 0
    %3178 = vmatprep.subr.bf16.mxu0 0
    %3179 = vmatpush2.bf16.msra.mxu0 0
    %3180 = vmatprep.subr.bf16.mxu0 0
    %3181 = vmatpush2.bf16.msra.mxu0 0
    %3182 = vmatprep.subr.bf16.mxu0 0
    %3183 = vmatpush2.bf16.msra.mxu0 0
    %3184 = vmatprep.subr.bf16.mxu0 0
    %3185 = vmatpush2.bf16.msra.mxu0 0
    %3186 = vmatprep.subr.bf16.mxu0 0
    %3187 = vmatpush2.bf16.msra.mxu0 0
    %3188 = vmatprep.subr.bf16.mxu0 0
    %3189 = vmatpush2.bf16.msra.mxu0 0
    %3190 = vmatprep.subr.bf16.mxu0 0
    %3191 = vmatpush2.bf16.msra.mxu0 0
    %3192 = vmatprep.mubr.bf16.mxu0 0
    %3193 = vmatmul.mubr.bf16.gmra.mxu0 %v3149
    %v3194 = vpop.f32.mrf.mxu0
    %v3195 = vadd.f32 %v3122, %v3194
    %v3196 = vpop.f32.mrf.mxu0
    %v3197 = vpop.f32.mrf.mxu0
    %v3198 = vadd.f32 %v3122, %v3197
    %v3199 = vpop.f32.mrf.mxu0
    %3200 = vmatprep.mubr.bf16.mxu0 0
    %3201 = vmatmul.mubr.bf16.gmra.mxu0 %v3152
    %v3202 = vpop.f32.mrf.mxu0
    %v3203 = vadd.f32 %v3122, %v3202
    %v3204 = vpop.f32.mrf.mxu0
    %v3205 = vpop.f32.mrf.mxu0
    %v3206 = vadd.f32 %v3122, %v3205
    %v3207 = vpop.f32.mrf.mxu0
    %3208 = vmatprep.mubr.bf16.mxu0 0
    %3209 = vmatmul.mubr.bf16.gmra.mxu0 %v3155
    %v3210 = vpop.f32.mrf.mxu0
    %v3211 = vadd.f32 %v3122, %v3210
    %v3212 = vpop.f32.mrf.mxu0
    %v3213 = vpop.f32.mrf.mxu0
    %v3214 = vadd.f32 %v3122, %v3213
    %v3215 = vpop.f32.mrf.mxu0
    %3216 = vmatprep.mubr.bf16.mxu0 0
    %3217 = vmatmul.mubr.bf16.gmra.mxu0 %v3158
    %v3218 = vpop.f32.mrf.mxu0
    %v3219 = vadd.f32 %v3122, %v3218
    %v3220 = vpop.f32.mrf.mxu0
    %v3221 = vpop.f32.mrf.mxu0
    %v3222 = vadd.f32 %v3122, %v3221
    %v3223 = vpop.f32.mrf.mxu0
    %3224 = vdwg.mxu0
    %3225 = vmax.xlane.f32.xlu0 %v3195
    %v3226 = vpop.xlane.xlu0 %3225
    %3227 = vmax.xlane.f32.xlu0 %v3198
    %v3228 = vpop.xlane.xlu0 %3227
    %3229 = vmax.xlane.f32.xlu0 %v3203
    %v3230 = vpop.xlane.xlu0 %3229
    %3231 = vmax.xlane.f32.xlu0 %v3206
    %v3232 = vpop.xlane.xlu0 %3231
    %3233 = vmax.xlane.f32.xlu0 %v3211
    %v3234 = vpop.xlane.xlu0 %3233
    %3235 = vmax.xlane.f32.xlu0 %v3214
    %v3236 = vpop.xlane.xlu0 %3235
    %3237 = vmax.xlane.f32.xlu0 %v3219
    %v3238 = vpop.xlane.xlu0 %3237
    %3239 = vmax.xlane.f32.xlu0 %v3222
    %v3240 = vpop.xlane.xlu0 %3239
    %v3241 = vsub.f32 %v3195, %v3226
    %v3242 = vsub.f32 %v3198, %v3228
    %v3243 = vsub.f32 %v3203, %v3230
    %v3244 = vsub.f32 %v3206, %v3232
    %v3245 = vsub.f32 %v3211, %v3234
    %v3246 = vsub.f32 %v3214, %v3236
    %v3247 = vsub.f32 %v3219, %v3238
    %v3248 = vsub.f32 %v3222, %v3240
    %v3249 = vmul.f32 %v3241, 1.442695
    %v3250 = vpow.pop %v3249
    %v3251 = vmul.f32 %v3242, 1.442695
    %v3252 = vpow.pop %v3251
    %v3253 = vmul.f32 %v3243, 1.442695
    %v3254 = vpow.pop %v3253
    %v3255 = vmul.f32 %v3244, 1.442695
    %v3256 = vpow.pop %v3255
    %v3257 = vmul.f32 %v3245, 1.442695
    %v3258 = vpow.pop %v3257
    %v3259 = vmul.f32 %v3246, 1.442695
    %v3260 = vpow.pop %v3259
    %v3261 = vmul.f32 %v3247, 1.442695
    %v3262 = vpow.pop %v3261
    %v3263 = vmul.f32 %v3248, 1.442695
    %v3264 = vpow.pop %v3263
    %3265 = vadd.xlane.f32.xlu0 %v3250
    %v3266 = vpop.xlane.xlu0 %3265
    %3267 = vadd.xlane.f32.xlu0 %v3252
    %v3268 = vpop.xlane.xlu0 %3267
    %3269 = vadd.xlane.f32.xlu0 %v3254
    %v3270 = vpop.xlane.xlu0 %3269
    %3271 = vadd.xlane.f32.xlu0 %v3256
    %v3272 = vpop.xlane.xlu0 %3271
    %3273 = vadd.xlane.f32.xlu0 %v3258
    %v3274 = vpop.xlane.xlu0 %3273
    %3275 = vadd.xlane.f32.xlu0 %v3260
    %v3276 = vpop.xlane.xlu0 %3275
    %3277 = vadd.xlane.f32.xlu0 %v3262
    %v3278 = vpop.xlane.xlu0 %3277
    %3279 = vadd.xlane.f32.xlu0 %v3264
    %v3280 = vpop.xlane.xlu0 %3279
    %v3281 = vlog2.pop %v3266
    %v3282 = vmul.f32 %v3281, 0.6931472
    %v3283 = vlog2.pop %v3268
    %v3284 = vmul.f32 %v3283, 0.6931472
    %v3285 = vlog2.pop %v3270
    %v3286 = vmul.f32 %v3285, 0.6931472
    %v3287 = vlog2.pop %v3272
    %v3288 = vmul.f32 %v3287, 0.6931472
    %v3289 = vlog2.pop %v3274
    %v3290 = vmul.f32 %v3289, 0.6931472
    %v3291 = vlog2.pop %v3276
    %v3292 = vmul.f32 %v3291, 0.6931472
    %v3293 = vlog2.pop %v3278
    %v3294 = vmul.f32 %v3293, 0.6931472
    %v3295 = vlog2.pop %v3280
    %v3296 = vmul.f32 %v3295, 0.6931472
    %v3297 = vsub.f32 %v3241, %v3282
    %v3298 = vsub.f32 %v3242, %v3284
    %v3299 = vsub.f32 %v3243, %v3286
    %v3300 = vsub.f32 %v3244, %v3288
    %v3301 = vsub.f32 %v3245, %v3290
    %v3302 = vsub.f32 %v3246, %v3292
    %v3303 = vsub.f32 %v3247, %v3294
    %v3304 = vsub.f32 %v3248, %v3296
    %3305 = vst [vmem:[#allocation13] sm:$0xff] %v3297
    %3306 = vst [vmem:[#allocation13 + $0x8] sm:$0xff] %v3298
    %3307 = vst [vmem:[#allocation13 + $0x10] sm:$0xff] %v3299
    %3308 = vst [vmem:[#allocation13 + $0x18] sm:$0xff] %v3300
    %3309 = vst [vmem:[#allocation13 + $0x20] sm:$0xff] %v3301
    %3310 = vst [vmem:[#allocation13 + $0x28] sm:$0xff] %v3302
    %3311 = vst [vmem:[#allocation13 + $0x30] sm:$0xff] %v3303
    %3312 = vst [vmem:[#allocation13 + $0x38] sm:$0xff] %v3304
    // Predicated region
    $region66: #{tpu_custom_call.1} parent=1 // pred_check
      _
    $region67: #{tpu_custom_call.1} parent=1 // pred_check_branch
      %3314 = sbr.rel (0) target = $region69
    $region68: #{tpu_custom_call.1} parent=1 // pred_region
      %s3316 = ssub.s32 1024, 1024
      %3317 = vsyncadd [#allocation7], %s3316
      %s3318 = sshll.u32 [#allocation13], 4
      %s3319 = int_to_ptr.vmem [resolvable:$true] %s3318
      %3324 = dma.vmem_to_hbm [thread:$0]  %s3319, 1024, %s12, [#allocation7], 128, 128, 8
    $region69: #{tpu_custom_call.1} parent=1 // pred_fallthru
      _
    // Predicated region
    $region70: #{tpu_custom_call.1} parent=1 // pred_check
      _
    $region71: #{tpu_custom_call.1} parent=1 // pred_check_branch
      %3326 = sbr.rel (0) target = $region73
    $region72: #{tpu_custom_call.1} parent=1 // pred_region
      %3327 = dma.done [#allocation7], 1024
    $region73: #{tpu_custom_call.1} parent=1 // pred_fallthru
      _
    %3328 = vsyncpa [#allocation6], 1
    %3329 = vsyncpa [#allocation9], 1
    %3330 = vsyncpa [#allocation12], 1
    %3331 = vsyncpa [#allocation7], 1

</llo_original>
